<compile_context>
chip_gen: v5e
topology: v5e:2x2
jax: 0.10.0
libtpu: 0.0.40
codegen_flags: <defaults>
</compile_context>

<pallas_src>
import math
from functools import partial

import jax
import jax.numpy as jnp
from jax import lax
from jax.experimental import pallas as pl
from jax.experimental.pallas import tpu as pltpu


# ----------------------------- shared math -----------------------------------

def _layernorm(x, g, b, eps=1e-5):
    # PyTorch nn.LayerNorm over last dim (biased variance, eps inside sqrt).
    mu = jnp.mean(x, axis=-1, keepdims=True)
    xc = x - mu
    var = jnp.mean(xc * xc, axis=-1, keepdims=True)
    return xc * lax.rsqrt(var + eps) * g + b


def _gelu_exact(x):
    # nn.GELU() default: exact erf formulation (kept for PyTorch parity).
    return 0.5 * x * (1.0 + lax.erf(x * (1.0 / math.sqrt(2.0))))


# ----------------------------- Pallas kernel ----------------------------------

def transformer_kernel(heads, dim_head,
                       x_ref,
                       ln1_g, ln1_b, wqkv, wo, bo,
                       ln2_g, ln2_b, w1, b1, w2, b2,
                       fin_g, fin_b,
                       out_ref, acc_ref):
    """Grid = (batch_blocks [parallel], depth [arbitrary]).

    acc_ref (VMEM scratch, persistent across grid steps) carries the f32
    residual stream for the current batch block across the depth axis.
    out_ref is written once, at the last depth step, already final-normed.
    """
    layer = pl.program_id(1)
    n_layers = pl.num_programs(1)
    bb, N, D = x_ref.shape
    inner = heads * dim_head
    bf16 = jnp.bfloat16
    T = bb * N

    # Initialize the residual carry from the input at the first layer.
    @pl.when(layer == 0)
    def _():
        acc_ref[...] = x_ref[...].reshape(T, D)

    x = acc_ref[...]                                   # (T, D) f32

    # ---------------- Attention (pre-norm) ----------------
    # 1/sqrt(dim_head) is pre-folded into wqkv's q-columns (wrapper side).
    xn = _layernorm(x, ln1_g[0], ln1_b[0])
    qkv = jnp.dot(xn.astype(bf16), wqkv[0],
                  preferred_element_type=jnp.float32)  # (T, 3*inner) f32
    # NOTE: if heads*dim_head is not a multiple of 128 these lane slices force
    # relayout copies; pad `inner` or split wqkv into wq/wk/wv for such configs.
    q = qkv[:, 0 * inner:1 * inner].astype(bf16)
    k = qkv[:, 1 * inner:2 * inner].astype(bf16)
    v = qkv[:, 2 * inner:3 * inner].astype(bf16)

    BH = bb * heads

    def to_heads(t):
        return (t.reshape(bb, N, heads, dim_head)
                 .transpose(0, 2, 1, 3)
                 .reshape(BH, N, dim_head))

    qh, kh, vh = to_heads(q), to_heads(k), to_heads(v)

    # Single (batch*heads)-batched QK^T + softmax + PV — no Python loop / concat.
    s = jnp.einsum('hqd,hkd->hqk', qh, kh,
                   preferred_element_type=jnp.float32)       # (BH, N, N)
    s = s - jnp.max(s, axis=-1, keepdims=True)
    e = jnp.exp(s)
    p = e * pl.reciprocal(jnp.sum(e, axis=-1, keepdims=True), approx=True)
    oh = jnp.einsum('hqk,hkd->hqd', p.astype(bf16), vh,
                    preferred_element_type=jnp.float32)      # (BH, N, dh)
    o = (oh.reshape(bb, heads, N, dim_head)
           .transpose(0, 2, 1, 3)
           .reshape(T, inner))

    o = jnp.dot(o.astype(bf16), wo[0],
                preferred_element_type=jnp.float32) + bo[0]
    x = x + o                                          # residual (f32)

    # ---------------- FeedForward (pre-norm) ----------------
    xn = _layernorm(x, ln2_g[0], ln2_b[0])
    h = jnp.dot(xn.astype(bf16), w1[0],
                preferred_element_type=jnp.float32) + b1[0]
    h = _gelu_exact(h)                                 # exact erf (PyTorch parity)
    h = jnp.dot(h.astype(bf16), w2[0],
                preferred_element_type=jnp.float32) + b2[0]
    x_out = x + h                                      # residual (f32)

    @pl.when(layer < n_layers - 1)
    def _():
        acc_ref[...] = x_out

    @pl.when(layer == n_layers - 1)
    def _():
        # Fused final LayerNorm of the Transformer, single HBM writeback.
        out_ref[...] = _layernorm(x_out, fin_g[...], fin_b[...]).reshape(bb, N, D)


# ----------------------------- wrapper ----------------------------------------

def _cores_per_chip():
    """Heuristic TensorCores-per-chip from the device kind (1 on v5e/v6e)."""
    try:
        kind = jax.devices()[0].device_kind.lower()
    except Exception:
        return 1
    if 'lite' in kind or 'v5e' in kind or 'v6e' in kind:
        return 1                      # v5e / v6e: single TensorCore per chip
    for tag in ('v7', '7x', 'v5p', 'v5', 'v4', 'v3', 'v2'):
        if tag in kind:
            return 2                  # megacore / dual-TensorCore chips
    return 1


def _vmem_capacity():
    try:
        return int(pltpu.get_tpu_info().vmem_capacity_bytes)
    except Exception:
        return 64 * 1024 * 1024       # conservative (v7x per-TC capacity)


def _pick_vmem_limit(cap):
    # Never request the full physical VMEM: leave headroom for Mosaic scratch.
    # 128 MiB (v5e/v6e) -> 96 MiB; 64 MiB (v7x) -> 48 MiB.
    return max(32 * 1024 * 1024, min(cap * 3 // 4, cap - 16 * 1024 * 1024))


def _estimate_vmem_bytes(block_b, N, D, inner, mlp_dim, heads, layer_param_bytes):
    """Rough per-block working-set estimate (f32 intermediates dominate)."""
    T = block_b * N
    buf = 4 * block_b * N * D * 4                 # double-buffered x-in + out blocks
    acc = T * D * 4                               # persistent residual scratch
    wts = 2 * layer_param_bytes                   # double-buffered per-layer params
    act = (T * 3 * inner + block_b * heads * N * N + T * mlp_dim
           + 2 * T * max(D, inner)) * 4           # dominant live f32 intermediates
    return buf + acc + wts + act


def _pick_block_b(B, cores):
    if B <= 1:
        return max(B, 1)
    if cores <= 1:
        return B                 # 1 TC: one batch block => each layer's weights DMA'd once
    if B % cores == 0:
        return B // cores        # one batch block per TensorCore
    for bb in range(B // 2, 0, -1):
        if B % bb == 0:
            return bb
    return 1


def transformer_forward(x, layers, final_g, final_b, heads, dim_head, block_b=None):
    B, N, D = x.shape
    depth = len(layers)
    inner = heads * dim_head
    mlp_dim = int(layers[0][7].shape[-1])

    cap = _vmem_capacity()
    vmem_limit = _pick_vmem_limit(cap)
    cores = _cores_per_chip()

    # Stack per-layer params along a leading depth axis so one pallas_call walks
    # every layer; BlockSpec pipelining prefetches layer l+1 weights during layer l.
    n_params = len(layers[0])
    stacked = [jnp.stack([lp[i] for lp in layers], axis=0) for i in range(n_params)]

    # Fold 1/sqrt(dim_head) into the q columns of wqkv (exact for power-of-two
    # scales): removes a per-layer (T, inner) f32 VPU multiply inside the kernel.
    scale = dim_head ** -0.5
    wqkv_f32 = stacked[2].astype(jnp.float32)
    wqkv_f32 = wqkv_f32.at[:, :, :inner].multiply(scale)
    stacked[2] = wqkv_f32.astype(stacked[2].dtype)

    layer_param_bytes = sum(int(a[0].size) * a.dtype.itemsize for a in stacked)

    if block_b is None:
        block_b = _pick_block_b(B, cores)
        # Shrink the batch block until the working set fits the VMEM budget
        # (matters on v7x's 64 MiB/TC for ViT-Base-class shapes).
        while block_b > 1 and _estimate_vmem_bytes(
                block_b, N, D, inner, mlp_dim, heads,
                layer_param_bytes) > int(vmem_limit * 0.85):
            nb = block_b - 1
            while nb > 1 and B % nb != 0:
                nb -= 1
            block_b = nb
    assert B % block_b == 0

    def stacked_spec(a):
        nd = a.ndim
        return pl.BlockSpec((1,) + tuple(a.shape[1:]),
                            lambda b, l, _nd=nd: (l,) + (0,) * (_nd - 1))

    def const_spec(a):
        nd = a.ndim
        return pl.BlockSpec(tuple(a.shape), lambda b, l, _nd=nd: (0,) * _nd)

    x_spec = pl.BlockSpec((block_b, N, D), lambda b, l: (b, 0, 0))

    # Advisory cost estimate for XLA's scheduler.
    flops = int(2 * B * depth * N * (3 * D * inner + 2 * heads * N * dim_head
                                     + inner * D + 2 * D * mlp_dim))
    transcendentals = int(B * depth * N * (heads * N + mlp_dim))
    bytes_accessed = int(2 * x.size * x.dtype.itemsize
                         + (B // block_b) * sum(int(a.size) * a.dtype.itemsize
                                                for a in stacked))

    kernel = partial(transformer_kernel, heads, dim_head)
    return pl.pallas_call(
        kernel,
        out_shape=jax.ShapeDtypeStruct((B, N, D), x.dtype),
        grid=(B // block_b, depth),
        in_specs=[x_spec] + [stacked_spec(a) for a in stacked]
                 + [const_spec(final_g), const_spec(final_b)],
        out_specs=x_spec,
        scratch_shapes=[pltpu.VMEM((block_b * N, D), jnp.float32)],
        compiler_params=pltpu.CompilerParams(
            dimension_semantics=("parallel", "arbitrary"),
            vmem_limit_bytes=vmem_limit),
        cost_estimate=pl.CostEstimate(flops=flops,
                                      transcendentals=transcendentals,
                                      bytes_accessed=bytes_accessed),
    )(x, *stacked, final_g, final_b)


# ----------------------------- params & reference -----------------------------

def init_params(key, dim, depth, heads, dim_head, mlp_dim):
    inner = heads * dim_head
    bf16 = jnp.bfloat16
    layers = []
    for _ in range(depth):
        key, k1, k2, k3, k4, k5, k6, k7 = jax.random.split(key, 8)
        ln1_g = jnp.ones((1, dim), jnp.float32)
        ln1_b = jnp.zeros((1, dim), jnp.float32)
        wqkv = (0.02 * jax.random.normal(k1, (dim, 3 * inner), jnp.float32)).astype(bf16)
        wo = (0.02 * jax.random.normal(k2, (inner, dim), jnp.float32)).astype(bf16)
        bo = 0.02 * jax.random.normal(k3, (1, dim), jnp.float32)
        ln2_g = jnp.ones((1, dim), jnp.float32)
        ln2_b = jnp.zeros((1, dim), jnp.float32)
        w1 = (0.02 * jax.random.normal(k4, (dim, mlp_dim), jnp.float32)).astype(bf16)
        b1 = 0.02 * jax.random.normal(k5, (1, mlp_dim), jnp.float32)
        w2 = (0.02 * jax.random.normal(k6, (mlp_dim, dim), jnp.float32)).astype(bf16)
        b2 = 0.02 * jax.random.normal(k7, (1, dim), jnp.float32)
        layers.append((ln1_g, ln1_b, wqkv, wo, bo, ln2_g, ln2_b, w1, b1, w2, b2))
    final_g = jnp.ones((1, dim), jnp.float32)
    final_b = jnp.zeros((1, dim), jnp.float32)
    return layers, final_g, final_b


def reference(x, layers, final_g, final_b, heads, dim_head):
    # Pure-JAX reference mirroring the kernel's bf16-operand / f32-accumulate math.
    B, N, D = x.shape
    inner = heads * dim_head
    scale = dim_head ** -0.5
    bf16 = jnp.bfloat16
    for (ln1_g, ln1_b, wqkv, wo, bo, ln2_g, ln2_b, w1, b1, w2, b2) in layers:
        xn = _layernorm(x, ln1_g, ln1_b)
        qkv = jnp.dot(xn.astype(bf16), wqkv, preferred_element_type=jnp.float32)
        q, k, v = jnp.split(qkv, 3, axis=-1)
        q = q * scale

        def to_heads(t):
            return t.reshape(B, N, heads, dim_head).transpose(0, 2, 1, 3).astype(bf16)

        qh, kh, vh = to_heads(q), to_heads(k), to_heads(v)
        dots = jnp.einsum('bhqd,bhkd->bhqk', qh, kh,
                          preferred_element_type=jnp.float32)
        attn = jax.nn.softmax(dots, axis=-1)
        o = jnp.einsum('bhqk,bhkd->bhqd', attn.astype(bf16), vh,
                       preferred_element_type=jnp.float32)
        o = o.transpose(0, 2, 1, 3).reshape(B, N, inner)
        o = jnp.dot(o.astype(bf16), wo, preferred_element_type=jnp.float32) + bo
        x = x + o
        xn = _layernorm(x, ln2_g, ln2_b)
        h = jnp.dot(xn.astype(bf16), w1, preferred_element_type=jnp.float32) + b1
        h = _gelu_exact(h)
        h = jnp.dot(h.astype(bf16), w2, preferred_element_type=jnp.float32) + b2
        x = x + h
    return _layernorm(x, final_g, final_b)


# ----------------------------- main --------------------------------------------

if __name__ == "__main__":
    # Small shapes consistent with Transformer(dim, depth, heads, dim_head, mlp_dim)
    B, N = 4, 16
    dim, depth, heads, dim_head, mlp_dim = 128, 2, 2, 64, 256

    key = jax.random.PRNGKey(0)
    kx, kp = jax.random.split(key)
    x = jax.random.normal(kx, (B, N, dim), jnp.float32)
    layers, fg, fb = init_params(kp, dim, depth, heads, dim_head, mlp_dim)

    out = transformer_forward(x, layers, fg, fb, heads, dim_head)
    out = jax.block_until_ready(out)

    ref = reference(x, layers, fg, fb, heads, dim_head)
    assert out.shape == (B, N, dim)
    # bf16 matmul operands + approx softmax reciprocal -> modest tolerance vs ref.
    err = float(jnp.max(jnp.abs(out - ref)))
    assert jnp.allclose(out, ref, atol=1e-2, rtol=1e-2), f"mismatch vs reference (max abs err {err})"
    print("KERNEL_OK")
</pallas_src>

<mosaic_0001>
module attributes {stable_mosaic.version = 11 : i64} {
  func.func @transformer_kernel(%arg0: i32, %arg1: i32, %arg2: memref<4x16x128xf32, #tpu.memory_space<vmem>>, %arg3: memref<1x1x128xf32, #tpu.memory_space<vmem>>, %arg4: memref<1x1x128xf32, #tpu.memory_space<vmem>>, %arg5: memref<1x128x384xbf16, #tpu.memory_space<vmem>>, %arg6: memref<1x128x128xbf16, #tpu.memory_space<vmem>>, %arg7: memref<1x1x128xf32, #tpu.memory_space<vmem>>, %arg8: memref<1x1x128xf32, #tpu.memory_space<vmem>>, %arg9: memref<1x1x128xf32, #tpu.memory_space<vmem>>, %arg10: memref<1x128x256xbf16, #tpu.memory_space<vmem>>, %arg11: memref<1x1x256xf32, #tpu.memory_space<vmem>>, %arg12: memref<1x256x128xbf16, #tpu.memory_space<vmem>>, %arg13: memref<1x1x128xf32, #tpu.memory_space<vmem>>, %arg14: memref<1x128xf32, #tpu.memory_space<vmem>>, %arg15: memref<1x128xf32, #tpu.memory_space<vmem>>, %arg16: memref<4x16x128xf32, #tpu.memory_space<vmem>>, %arg17: memref<64x128xf32, #tpu.memory_space<vmem>>) attributes {dimension_semantics = [#tpu.dimension_semantics<parallel>, #tpu.dimension_semantics<arbitrary>], iteration_bounds = array<i64: 1, 2>, scalar_prefetch = 0 : i64, scratch_operands = 1 : i64, tpu.core_type = #tpu.core_type<tc>, window_params = [{transform_indices = @transform_0, window_bounds = array<i64: 4, 16, 128>}, {transform_indices = @transform_1, window_bounds = array<i64: 1, 1, 128>}, {transform_indices = @transform_2, window_bounds = array<i64: 1, 1, 128>}, {transform_indices = @transform_3, window_bounds = array<i64: 1, 128, 384>}, {transform_indices = @transform_4, window_bounds = array<i64: 1, 128, 128>}, {transform_indices = @transform_5, window_bounds = array<i64: 1, 1, 128>}, {transform_indices = @transform_6, window_bounds = array<i64: 1, 1, 128>}, {transform_indices = @transform_7, window_bounds = array<i64: 1, 1, 128>}, {transform_indices = @transform_8, window_bounds = array<i64: 1, 128, 256>}, {transform_indices = @transform_9, window_bounds = array<i64: 1, 1, 256>}, {transform_indices = @transform_10, window_bounds = array<i64: 1, 256, 128>}, {transform_indices = @transform_11, window_bounds = array<i64: 1, 1, 128>}, {pipeline_mode = #tpu.pipeline_mode<synchronous>, transform_indices = @transform_12, window_bounds = array<i64: 1, 128>}, {pipeline_mode = #tpu.pipeline_mode<synchronous>, transform_indices = @transform_13, window_bounds = array<i64: 1, 128>}, {transform_indices = @transform_14, window_bounds = array<i64: 4, 16, 128>}]} {
    %c0_i32 = arith.constant 0 : i32
    %0 = arith.cmpi eq, %arg1, %c0_i32 : i32
    %1 = arith.extui %0 : i1 to i32
    %c0_i32_0 = arith.constant 0 : i32
    %2 = arith.cmpi ne, %1, %c0_i32_0 : i32
    scf.if %2 {
      %c0_58 = arith.constant 0 : index
      %c0_59 = arith.constant 0 : index
      %c0_60 = arith.constant 0 : index
      %127 = vector.load %arg2[%c0_58, %c0_59, %c0_60] : memref<4x16x128xf32, #tpu.memory_space<vmem>>, vector<4x16x128xf32>
      %128 = vector.shape_cast %127 : vector<4x16x128xf32> to vector<64x128xf32>
      %c0_61 = arith.constant 0 : index
      %c0_62 = arith.constant 0 : index
      %129 = vector.load %arg17[%c0_61, %c0_62] : memref<64x128xf32, #tpu.memory_space<vmem>>, vector<64x128xf32>
      tpu.vector_store %arg17[%c0_61, %c0_62], %128 {strides = array<i32>} : memref<64x128xf32, #tpu.memory_space<vmem>>, vector<64x128xf32>,
    } else {
    }
    %c0 = arith.constant 0 : index
    %c0_1 = arith.constant 0 : index
    %3 = vector.load %arg17[%c0, %c0_1] : memref<64x128xf32, #tpu.memory_space<vmem>>, vector<64x128xf32>
    %c0_2 = arith.constant 0 : index
    %c0_3 = arith.constant 0 : index
    %c0_4 = arith.constant 0 : index
    %4 = vector.load %arg3[%c0_2, %c0_3, %c0_4] : memref<1x1x128xf32, #tpu.memory_space<vmem>>, vector<1x1x128xf32>
    %5 = vector.shape_cast %4 : vector<1x1x128xf32> to vector<1x128xf32>
    %c0_5 = arith.constant 0 : index
    %c0_6 = arith.constant 0 : index
    %c0_7 = arith.constant 0 : index
    %6 = vector.load %arg4[%c0_5, %c0_6, %c0_7] : memref<1x1x128xf32, #tpu.memory_space<vmem>>, vector<1x1x128xf32>
    %7 = vector.shape_cast %6 : vector<1x1x128xf32> to vector<1x128xf32>
    %cst = arith.constant dense<0.000000e+00> : vector<64xf32>
    %8 = vector.multi_reduction <add>, %3, %cst [1] : vector<64x128xf32> to vector<64xf32>
    %9 = vector.shape_cast %8 : vector<64xf32> to vector<64x1xf32>
    %cst_8 = arith.constant 1.280000e+02 : f32
    %10 = vector.broadcast %cst_8 : f32 to vector<64x1xf32>
    %11 = arith.divf %9, %10 : vector<64x1xf32>
    %12 = vector.broadcast %11 : vector<64x1xf32> to vector<64x128xf32>
    %13 = arith.subf %3, %12 : vector<64x128xf32>
    %14 = arith.mulf %13, %13 : vector<64x128xf32>
    %cst_9 = arith.constant dense<0.000000e+00> : vector<64xf32>
    %15 = vector.multi_reduction <add>, %14, %cst_9 [1] : vector<64x128xf32> to vector<64xf32>
    %16 = vector.shape_cast %15 : vector<64xf32> to vector<64x1xf32>
    %cst_10 = arith.constant 1.280000e+02 : f32
    %17 = vector.broadcast %cst_10 : f32 to vector<64x1xf32>
    %18 = arith.divf %16, %17 : vector<64x1xf32>
    %cst_11 = arith.constant 9.99999974E-6 : f32
    %19 = vector.broadcast %cst_11 : f32 to vector<64x1xf32>
    %20 = arith.addf %18, %19 : vector<64x1xf32>
    %21 = math.rsqrt %20 : vector<64x1xf32>
    %22 = vector.broadcast %21 : vector<64x1xf32> to vector<64x128xf32>
    %23 = arith.mulf %13, %22 : vector<64x128xf32>
    %24 = vector.broadcast %5 : vector<1x128xf32> to vector<64x128xf32>
    %25 = arith.mulf %23, %24 : vector<64x128xf32>
    %26 = vector.broadcast %7 : vector<1x128xf32> to vector<64x128xf32>
    %27 = arith.addf %25, %26 : vector<64x128xf32>
    %28 = arith.truncf %27 : vector<64x128xf32> to vector<64x128xbf16>
    %c0_12 = arith.constant 0 : index
    %c0_13 = arith.constant 0 : index
    %c0_14 = arith.constant 0 : index
    %29 = vector.load %arg5[%c0_12, %c0_13, %c0_14] : memref<1x128x384xbf16, #tpu.memory_space<vmem>>, vector<1x128x384xbf16>
    %30 = vector.shape_cast %29 : vector<1x128x384xbf16> to vector<128x384xbf16>
    %cst_15 = arith.constant dense<0.000000e+00> : vector<64x384xf32>
    %31 = tpu.matmul %28, %30, %cst_15 {dimension_numbers = #tpu.dot_dimension_numbers<[1], [0], [0], [1], [0, 0, 1, 1], [], []>} : vector<64x128xbf16>, vector<128x384xbf16>, vector<64x384xf32> -> vector<64x384xf32>
    %32 = vector.extract_strided_slice %31 {offsets = [0, 0], sizes = [64, 128], strides = [1, 1]} : vector<64x384xf32> to vector<64x128xf32>
    %33 = arith.truncf %32 : vector<64x128xf32> to vector<64x128xbf16>
    %34 = vector.extract_strided_slice %31 {offsets = [0, 128], sizes = [64, 128], strides = [1, 1]} : vector<64x384xf32> to vector<64x128xf32>
    %35 = arith.truncf %34 : vector<64x128xf32> to vector<64x128xbf16>
    %36 = vector.extract_strided_slice %31 {offsets = [0, 256], sizes = [64, 128], strides = [1, 1]} : vector<64x384xf32> to vector<64x128xf32>
    %37 = arith.truncf %36 : vector<64x128xf32> to vector<64x128xbf16>
    %38 = vector.shape_cast %33 : vector<64x128xbf16> to vector<4x16x2x64xbf16>
    %39 = tpu.transpose %38, [0, 2, 1, 3] : vector<4x16x2x64xbf16> -> vector<4x2x16x64xbf16>
    %40 = vector.shape_cast %39 : vector<4x2x16x64xbf16> to vector<8x16x64xbf16>
    %41 = vector.shape_cast %35 : vector<64x128xbf16> to vector<4x16x2x64xbf16>
    %42 = tpu.transpose %41, [0, 2, 1, 3] : vector<4x16x2x64xbf16> -> vector<4x2x16x64xbf16>
    %43 = vector.shape_cast %42 : vector<4x2x16x64xbf16> to vector<8x16x64xbf16>
    %44 = vector.shape_cast %37 : vector<64x128xbf16> to vector<4x16x2x64xbf16>
    %45 = tpu.transpose %44, [0, 2, 1, 3] : vector<4x16x2x64xbf16> -> vector<4x2x16x64xbf16>
    %46 = vector.shape_cast %45 : vector<4x2x16x64xbf16> to vector<8x16x64xbf16>
    "tpu.trace_start"() <{level = 10 : i32, message = "hqd,hkd->hqk"}> : () -> ()
    %cst_16 = arith.constant dense<0.000000e+00> : vector<8x16x16xf32>
    %47 = tpu.matmul %40, %43, %cst_16 {dimension_numbers = #tpu.dot_dimension_numbers<[2], [2], [1], [1], [0, 0, 0, 1, 1, 1], [0], [0]>} : vector<8x16x64xbf16>, vector<8x16x64xbf16>, vector<8x16x16xf32> -> vector<8x16x16xf32>
    "tpu.trace_stop"() : () -> ()
    %cst_17 = arith.constant dense<0xFF800000> : vector<8x16xf32>
    %48 = vector.multi_reduction <maximumf>, %47, %cst_17 [2] : vector<8x16x16xf32> to vector<8x16xf32>
    %49 = vector.shape_cast %48 : vector<8x16xf32> to vector<8x16x1xf32>
    %50 = vector.broadcast %49 : vector<8x16x1xf32> to vector<8x16x16xf32>
    %51 = arith.subf %47, %50 : vector<8x16x16xf32>
    %52 = math.exp %51 : vector<8x16x16xf32>
    %cst_18 = arith.constant dense<0.000000e+00> : vector<8x16xf32>
    %53 = vector.multi_reduction <add>, %52, %cst_18 [2] : vector<8x16x16xf32> to vector<8x16xf32>
    %54 = vector.shape_cast %53 : vector<8x16xf32> to vector<8x16x1xf32>
    %55 = tpu.reciprocal %54 {approx = true} : vector<8x16x1xf32> -> vector<8x16x1xf32>
    %56 = vector.broadcast %55 : vector<8x16x1xf32> to vector<8x16x16xf32>
    %57 = arith.mulf %52, %56 : vector<8x16x16xf32>
    %58 = arith.truncf %57 : vector<8x16x16xf32> to vector<8x16x16xbf16>
    "tpu.trace_start"() <{level = 10 : i32, message = "hqk,hkd->hqd"}> : () -> ()
    %cst_19 = arith.constant dense<0.000000e+00> : vector<8x16x64xf32>
    %59 = tpu.matmul %58, %46, %cst_19 {dimension_numbers = #tpu.dot_dimension_numbers<[2], [1], [1], [2], [0, 0, 0, 1, 1, 2], [0], [0]>} : vector<8x16x16xbf16>, vector<8x16x64xbf16>, vector<8x16x64xf32> -> vector<8x16x64xf32>
    "tpu.trace_stop"() : () -> ()
    %60 = vector.shape_cast %59 : vector<8x16x64xf32> to vector<4x2x16x64xf32>
    %61 = tpu.transpose %60, [0, 2, 1, 3] : vector<4x2x16x64xf32> -> vector<4x16x2x64xf32>
    %62 = vector.shape_cast %61 : vector<4x16x2x64xf32> to vector<64x128xf32>
    %63 = arith.truncf %62 : vector<64x128xf32> to vector<64x128xbf16>
    %c0_20 = arith.constant 0 : index
    %c0_21 = arith.constant 0 : index
    %c0_22 = arith.constant 0 : index
    %64 = vector.load %arg6[%c0_20, %c0_21, %c0_22] : memref<1x128x128xbf16, #tpu.memory_space<vmem>>, vector<1x128x128xbf16>
    %65 = vector.shape_cast %64 : vector<1x128x128xbf16> to vector<128x128xbf16>
    %cst_23 = arith.constant dense<0.000000e+00> : vector<64x128xf32>
    %66 = tpu.matmul %63, %65, %cst_23 {dimension_numbers = #tpu.dot_dimension_numbers<[1], [0], [0], [1], [0, 0, 1, 1], [], []>} : vector<64x128xbf16>, vector<128x128xbf16>, vector<64x128xf32> -> vector<64x128xf32>
    %c0_24 = arith.constant 0 : index
    %c0_25 = arith.constant 0 : index
    %c0_26 = arith.constant 0 : index
    %67 = vector.load %arg7[%c0_24, %c0_25, %c0_26] : memref<1x1x128xf32, #tpu.memory_space<vmem>>, vector<1x1x128xf32>
    %68 = vector.shape_cast %67 : vector<1x1x128xf32> to vector<1x128xf32>
    %69 = vector.broadcast %68 : vector<1x128xf32> to vector<64x128xf32>
    %70 = arith.addf %66, %69 : vector<64x128xf32>
    %71 = arith.addf %3, %70 : vector<64x128xf32>
    %c0_27 = arith.constant 0 : index
    %c0_28 = arith.constant 0 : index
    %c0_29 = arith.constant 0 : index
    %72 = vector.load %arg8[%c0_27, %c0_28, %c0_29] : memref<1x1x128xf32, #tpu.memory_space<vmem>>, vector<1x1x128xf32>
    %73 = vector.shape_cast %72 : vector<1x1x128xf32> to vector<1x128xf32>
    %c0_30 = arith.constant 0 : index
    %c0_31 = arith.constant 0 : index
    %c0_32 = arith.constant 0 : index
    %74 = vector.load %arg9[%c0_30, %c0_31, %c0_32] : memref<1x1x128xf32, #tpu.memory_space<vmem>>, vector<1x1x128xf32>
    %75 = vector.shape_cast %74 : vector<1x1x128xf32> to vector<1x128xf32>
    %cst_33 = arith.constant dense<0.000000e+00> : vector<64xf32>
    %76 = vector.multi_reduction <add>, %71, %cst_33 [1] : vector<64x128xf32> to vector<64xf32>
    %77 = vector.shape_cast %76 : vector<64xf32> to vector<64x1xf32>
    %cst_34 = arith.constant 1.280000e+02 : f32
    %78 = vector.broadcast %cst_34 : f32 to vector<64x1xf32>
    %79 = arith.divf %77, %78 : vector<64x1xf32>
    %80 = vector.broadcast %79 : vector<64x1xf32> to vector<64x128xf32>
    %81 = arith.subf %71, %80 : vector<64x128xf32>
    %82 = arith.mulf %81, %81 : vector<64x128xf32>
    %cst_35 = arith.constant dense<0.000000e+00> : vector<64xf32>
    %83 = vector.multi_reduction <add>, %82, %cst_35 [1] : vector<64x128xf32> to vector<64xf32>
    %84 = vector.shape_cast %83 : vector<64xf32> to vector<64x1xf32>
    %cst_36 = arith.constant 1.280000e+02 : f32
    %85 = vector.broadcast %cst_36 : f32 to vector<64x1xf32>
    %86 = arith.divf %84, %85 : vector<64x1xf32>
    %cst_37 = arith.constant 9.99999974E-6 : f32
    %87 = vector.broadcast %cst_37 : f32 to vector<64x1xf32>
    %88 = arith.addf %86, %87 : vector<64x1xf32>
    %89 = math.rsqrt %88 : vector<64x1xf32>
    %90 = vector.broadcast %89 : vector<64x1xf32> to vector<64x128xf32>
    %91 = arith.mulf %81, %90 : vector<64x128xf32>
    %92 = vector.broadcast %73 : vector<1x128xf32> to vector<64x128xf32>
    %93 = arith.mulf %91, %92 : vector<64x128xf32>
    %94 = vector.broadcast %75 : vector<1x128xf32> to vector<64x128xf32>
    %95 = arith.addf %93, %94 : vector<64x128xf32>
    %96 = arith.truncf %95 : vector<64x128xf32> to vector<64x128xbf16>
    %c0_38 = arith.constant 0 : index
    %c0_39 = arith.constant 0 : index
    %c0_40 = arith.constant 0 : index
    %97 = vector.load %arg10[%c0_38, %c0_39, %c0_40] : memref<1x128x256xbf16, #tpu.memory_space<vmem>>, vector<1x128x256xbf16>
    %98 = vector.shape_cast %97 : vector<1x128x256xbf16> to vector<128x256xbf16>
    %cst_41 = arith.constant dense<0.000000e+00> : vector<64x256xf32>
    %99 = tpu.matmul %96, %98, %cst_41 {dimension_numbers = #tpu.dot_dimension_numbers<[1], [0], [0], [1], [0, 0, 1, 1], [], []>} : vector<64x128xbf16>, vector<128x256xbf16>, vector<64x256xf32> -> vector<64x256xf32>
    %c0_42 = arith.constant 0 : index
    %c0_43 = arith.constant 0 : index
    %c0_44 = arith.constant 0 : index
    %100 = vector.load %arg11[%c0_42, %c0_43, %c0_44] : memref<1x1x256xf32, #tpu.memory_space<vmem>>, vector<1x1x256xf32>
    %101 = vector.shape_cast %100 : vector<1x1x256xf32> to vector<1x256xf32>
    %102 = vector.broadcast %101 : vector<1x256xf32> to vector<64x256xf32>
    %103 = arith.addf %99, %102 : vector<64x256xf32>
    %cst_45 = arith.constant 5.000000e-01 : f32
    %104 = vector.broadcast %cst_45 : f32 to vector<64x256xf32>
    %105 = arith.mulf %104, %103 : vector<64x256xf32>
    %cst_46 = arith.constant 0.707106769 : f32
    %106 = vector.broadcast %cst_46 : f32 to vector<64x256xf32>
    %107 = arith.mulf %103, %106 : vector<64x256xf32>
    %108 = math.erf %107 : vector<64x256xf32>
    %cst_47 = arith.constant 1.000000e+00 : f32
    %109 = vector.broadcast %cst_47 : f32 to vector<64x256xf32>
    %110 = arith.addf %109, %108 : vector<64x256xf32>
    %111 = arith.mulf %105, %110 : vector<64x256xf32>
    %112 = arith.truncf %111 : vector<64x256xf32> to vector<64x256xbf16>
    %c0_48 = arith.constant 0 : index
    %c0_49 = arith.constant 0 : index
    %c0_50 = arith.constant 0 : index
    %113 = vector.load %arg12[%c0_48, %c0_49, %c0_50] : memref<1x256x128xbf16, #tpu.memory_space<vmem>>, vector<1x256x128xbf16>
    %114 = vector.shape_cast %113 : vector<1x256x128xbf16> to vector<256x128xbf16>
    %cst_51 = arith.constant dense<0.000000e+00> : vector<64x128xf32>
    %115 = tpu.matmul %112, %114, %cst_51 {dimension_numbers = #tpu.dot_dimension_numbers<[1], [0], [0], [1], [0, 0, 1, 1], [], []>} : vector<64x256xbf16>, vector<256x128xbf16>, vector<64x128xf32> -> vector<64x128xf32>
    %c0_52 = arith.constant 0 : index
    %c0_53 = arith.constant 0 : index
    %c0_54 = arith.constant 0 : index
    %116 = vector.load %arg13[%c0_52, %c0_53, %c0_54] : memref<1x1x128xf32, #tpu.memory_space<vmem>>, vector<1x1x128xf32>
    %117 = vector.shape_cast %116 : vector<1x1x128xf32> to vector<1x128xf32>
    %118 = vector.broadcast %117 : vector<1x128xf32> to vector<64x128xf32>
    %119 = arith.addf %115, %118 : vector<64x128xf32>
    %120 = arith.addf %71, %119 : vector<64x128xf32>
    %c1_i32 = arith.constant 1 : i32
    %121 = arith.cmpi slt, %arg1, %c1_i32 : i32
    %122 = arith.extui %121 : i1 to i32
    %c0_i32_55 = arith.constant 0 : i32
    %123 = arith.cmpi ne, %122, %c0_i32_55 : i32
    scf.if %123 {
      %c0_58 = arith.constant 0 : index
      %c0_59 = arith.constant 0 : index
      %127 = vector.load %arg17[%c0_58, %c0_59] : memref<64x128xf32, #tpu.memory_space<vmem>>, vector<64x128xf32>
      tpu.vector_store %arg17[%c0_58, %c0_59], %120 {strides = array<i32>} : memref<64x128xf32, #tpu.memory_space<vmem>>, vector<64x128xf32>,
    } else {
    }
    %c1_i32_56 = arith.constant 1 : i32
    %124 = arith.cmpi eq, %arg1, %c1_i32_56 : i32
    %125 = arith.extui %124 : i1 to i32
    %c0_i32_57 = arith.constant 0 : i32
    %126 = arith.cmpi ne, %125, %c0_i32_57 : i32
    scf.if %126 {
      %c0_58 = arith.constant 0 : index
      %c0_59 = arith.constant 0 : index
      %127 = vector.load %arg14[%c0_58, %c0_59] : memref<1x128xf32, #tpu.memory_space<vmem>>, vector<1x128xf32>
      %c0_60 = arith.constant 0 : index
      %c0_61 = arith.constant 0 : index
      %128 = vector.load %arg15[%c0_60, %c0_61] : memref<1x128xf32, #tpu.memory_space<vmem>>, vector<1x128xf32>
      %cst_62 = arith.constant dense<0.000000e+00> : vector<64xf32>
      %129 = vector.multi_reduction <add>, %120, %cst_62 [1] : vector<64x128xf32> to vector<64xf32>
      %130 = vector.shape_cast %129 : vector<64xf32> to vector<64x1xf32>
      %cst_63 = arith.constant 1.280000e+02 : f32
      %131 = vector.broadcast %cst_63 : f32 to vector<64x1xf32>
      %132 = arith.divf %130, %131 : vector<64x1xf32>
      %133 = vector.broadcast %132 : vector<64x1xf32> to vector<64x128xf32>
      %134 = arith.subf %120, %133 : vector<64x128xf32>
      %135 = arith.mulf %134, %134 : vector<64x128xf32>
      %cst_64 = arith.constant dense<0.000000e+00> : vector<64xf32>
      %136 = vector.multi_reduction <add>, %135, %cst_64 [1] : vector<64x128xf32> to vector<64xf32>
      %137 = vector.shape_cast %136 : vector<64xf32> to vector<64x1xf32>
      %cst_65 = arith.constant 1.280000e+02 : f32
      %138 = vector.broadcast %cst_65 : f32 to vector<64x1xf32>
      %139 = arith.divf %137, %138 : vector<64x1xf32>
      %cst_66 = arith.constant 9.99999974E-6 : f32
      %140 = vector.broadcast %cst_66 : f32 to vector<64x1xf32>
      %141 = arith.addf %139, %140 : vector<64x1xf32>
      %142 = math.rsqrt %141 : vector<64x1xf32>
      %143 = vector.broadcast %142 : vector<64x1xf32> to vector<64x128xf32>
      %144 = arith.mulf %134, %143 : vector<64x128xf32>
      %145 = vector.broadcast %127 : vector<1x128xf32> to vector<64x128xf32>
      %146 = arith.mulf %144, %145 : vector<64x128xf32>
      %147 = vector.broadcast %128 : vector<1x128xf32> to vector<64x128xf32>
      %148 = arith.addf %146, %147 : vector<64x128xf32>
      %149 = vector.shape_cast %148 : vector<64x128xf32> to vector<4x16x128xf32>
      %c0_67 = arith.constant 0 : index
      %c0_68 = arith.constant 0 : index
      %c0_69 = arith.constant 0 : index
      %150 = vector.load %arg16[%c0_67, %c0_68, %c0_69] : memref<4x16x128xf32, #tpu.memory_space<vmem>>, vector<4x16x128xf32>
      tpu.vector_store %arg16[%c0_67, %c0_68, %c0_69], %149 {strides = array<i32>} : memref<4x16x128xf32, #tpu.memory_space<vmem>>, vector<4x16x128xf32>,
    } else {
    }
    return
  }
  func.func @transform_0(%arg0: i32, %arg1: i32) -> (i32, i32, i32) {
    %c0_i32 = arith.constant 0 : i32
    %c0_i32_0 = arith.constant 0 : i32
    %c0_i32_1 = arith.constant 0 : i32
    return %arg0, %c0_i32, %c0_i32_0 : i32, i32, i32
  }
  func.func @transform_1(%arg0: i32, %arg1: i32) -> (i32, i32, i32) {
    %c0_i32 = arith.constant 0 : i32
    %c0_i32_0 = arith.constant 0 : i32
    %c0_i32_1 = arith.constant 0 : i32
    return %arg1, %c0_i32, %c0_i32_0 : i32, i32, i32
  }
  func.func @transform_2(%arg0: i32, %arg1: i32) -> (i32, i32, i32) {
    %c0_i32 = arith.constant 0 : i32
    %c0_i32_0 = arith.constant 0 : i32
    %c0_i32_1 = arith.constant 0 : i32
    return %arg1, %c0_i32, %c0_i32_0 : i32, i32, i32
  }
  func.func @transform_3(%arg0: i32, %arg1: i32) -> (i32, i32, i32) {
    %c0_i32 = arith.constant 0 : i32
    %c0_i32_0 = arith.constant 0 : i32
    %c0_i32_1 = arith.constant 0 : i32
    return %arg1, %c0_i32, %c0_i32_0 : i32, i32, i32
  }
  func.func @transform_4(%arg0: i32, %arg1: i32) -> (i32, i32, i32) {
    %c0_i32 = arith.constant 0 : i32
    %c0_i32_0 = arith.constant 0 : i32
    %c0_i32_1 = arith.constant 0 : i32
    return %arg1, %c0_i32, %c0_i32_0 : i32, i32, i32
  }
  func.func @transform_5(%arg0: i32, %arg1: i32) -> (i32, i32, i32) {
    %c0_i32 = arith.constant 0 : i32
    %c0_i32_0 = arith.constant 0 : i32
    %c0_i32_1 = arith.constant 0 : i32
    return %arg1, %c0_i32, %c0_i32_0 : i32, i32, i32
  }
  func.func @transform_6(%arg0: i32, %arg1: i32) -> (i32, i32, i32) {
    %c0_i32 = arith.constant 0 : i32
    %c0_i32_0 = arith.constant 0 : i32
    %c0_i32_1 = arith.constant 0 : i32
    return %arg1, %c0_i32, %c0_i32_0 : i32, i32, i32
  }
  func.func @transform_7(%arg0: i32, %arg1: i32) -> (i32, i32, i32) {
    %c0_i32 = arith.constant 0 : i32
    %c0_i32_0 = arith.constant 0 : i32
    %c0_i32_1 = arith.constant 0 : i32
    return %arg1, %c0_i32, %c0_i32_0 : i32, i32, i32
  }
  func.func @transform_8(%arg0: i32, %arg1: i32) -> (i32, i32, i32) {
    %c0_i32 = arith.constant 0 : i32
    %c0_i32_0 = arith.constant 0 : i32
    %c0_i32_1 = arith.constant 0 : i32
    return %arg1, %c0_i32, %c0_i32_0 : i32, i32, i32
  }
  func.func @transform_9(%arg0: i32, %arg1: i32) -> (i32, i32, i32) {
    %c0_i32 = arith.constant 0 : i32
    %c0_i32_0 = arith.constant 0 : i32
    %c0_i32_1 = arith.constant 0 : i32
    return %arg1, %c0_i32, %c0_i32_0 : i32, i32, i32
  }
  func.func @transform_10(%arg0: i32, %arg1: i32) -> (i32, i32, i32) {
    %c0_i32 = arith.constant 0 : i32
    %c0_i32_0 = arith.constant 0 : i32
    %c0_i32_1 = arith.constant 0 : i32
    return %arg1, %c0_i32, %c0_i32_0 : i32, i32, i32
  }
  func.func @transform_11(%arg0: i32, %arg1: i32) -> (i32, i32, i32) {
    %c0_i32 = arith.constant 0 : i32
    %c0_i32_0 = arith.constant 0 : i32
    %c0_i32_1 = arith.constant 0 : i32
    return %arg1, %c0_i32, %c0_i32_0 : i32, i32, i32
  }
  func.func @transform_12(%arg0: i32, %arg1: i32) -> (i32, i32) {
    %c0_i32 = arith.constant 0 : i32
    %c0_i32_0 = arith.constant 0 : i32
    %c0_i32_1 = arith.constant 0 : i32
    return %c0_i32, %c0_i32_0 : i32, i32
  }
  func.func @transform_13(%arg0: i32, %arg1: i32) -> (i32, i32) {
    %c0_i32 = arith.constant 0 : i32
    %c0_i32_0 = arith.constant 0 : i32
    %c0_i32_1 = arith.constant 0 : i32
    return %c0_i32, %c0_i32_0 : i32, i32
  }
  func.func @transform_14(%arg0: i32, %arg1: i32) -> (i32, i32, i32) {
    %c0_i32 = arith.constant 0 : i32
    %c0_i32_0 = arith.constant 0 : i32
    %c0_i32_1 = arith.constant 0 : i32
    return %arg0, %c0_i32, %c0_i32_0 : i32, i32, i32
  }
}

</mosaic_0001>

<llo_original>
// kernel: tpu_custom_call.1
$region0: #{tpu_custom_call.1}
  #allocation0 [shape = 'u32[]', space=smem, size = 0x4, offset = 0x4, fixed_abs, tag = 'smem constant byte address 0x4 - core index']
  #allocation1 [shape = 'u32[72,128]{1,0:T(1,128)}', space=vmem, size = 0x9000, scoped, tag = 'internal scratch']
  #allocation2 [shape = 'f32[64,128]{1,0:T(8,128)}', space=vmem, size = 0x8000, scoped, tag = 'scratch operand']
  %s0 = inlined_call_operand.hbm [shape: f32[4,16,128], index: 0, kind: input, shape index: {}]
  %s1 = inlined_call_operand.hbm [shape: f32[2,1,128], index: 1, kind: input, shape index: {}]
  %s2 = inlined_call_operand.hbm [shape: f32[2,1,128], index: 2, kind: input, shape index: {}]
  %s3 = inlined_call_operand.hbm [shape: bf16[2,128,384], index: 3, kind: input, shape index: {}]
  %s4 = inlined_call_operand.hbm [shape: bf16[2,128,128], index: 4, kind: input, shape index: {}]
  %s5 = inlined_call_operand.vmem [shape: f32[2,1,128], index: 5, kind: input, shape index: {}]
  %s6 = inlined_call_operand.hbm [shape: f32[2,1,128], index: 6, kind: input, shape index: {}]
  %s7 = inlined_call_operand.hbm [shape: f32[2,1,128], index: 7, kind: input, shape index: {}]
  %s8 = inlined_call_operand.hbm [shape: bf16[2,128,256], index: 8, kind: input, shape index: {}]
  %s9 = inlined_call_operand.vmem [shape: f32[2,1,256], index: 9, kind: input, shape index: {}]
  %s10 = inlined_call_operand.hbm [shape: bf16[2,256,128], index: 10, kind: input, shape index: {}]
  %s11 = inlined_call_operand.vmem [shape: f32[2,1,128], index: 11, kind: input, shape index: {}]
  %s12 = inlined_call_operand.vmem [shape: f32[1,128], index: 12, kind: input, shape index: {}]
  %s13 = inlined_call_operand.vmem [shape: f32[1,128], index: 13, kind: input, shape index: {}]
  %s14 = inlined_call_operand.hbm [shape: f32[4,16,128], index: 14, kind: output, shape index: {}]
  %s15 = sld [smem:[#allocation0]]
  $region137: #{tpu_custom_call.1} parent=0
    _
  %s17 = ssub.s32 1, %s15
  %s18 = scalar_select 0, %s17, %s15
  $region1: #{tpu_custom_call.1} parent=0
    #allocation3 [shape = 'u8[32768]{0}', space=vmem, size = 0x8000, scoped, tag = 'input window, operand 0, single buffered']
    #allocation4 [shape = 's32[2]{0}', space=sflag, size = 0x8, scoped, tag = 'scoped memory for tpu_custom_call.1']
    #allocation5 [shape = 's32[2]{0}', space=sflag, size = 0x8, scoped, tag = 'scoped memory for tpu_custom_call.1']
    #allocation6 [shape = 'u8[1024]{0}', space=vmem, size = 0x400, scoped, tag = 'input window, operand 1']
    #allocation7 [shape = 's32[2]{0}', space=sflag, size = 0x8, scoped, tag = 'scoped memory for tpu_custom_call.1']
    #allocation8 [shape = 'u8[1024]{0}', space=vmem, size = 0x400, scoped, tag = 'input window, operand 2']
    #allocation9 [shape = 'u8[196608]{0}', space=vmem, size = 0x30000, scoped, tag = 'input window, operand 3']
    #allocation10 [shape = 's32[2]{0}', space=sflag, size = 0x8, scoped, tag = 'scoped memory for tpu_custom_call.1']
    #allocation11 [shape = 'u8[65536]{0}', space=vmem, size = 0x10000, scoped, tag = 'input window, operand 4']
    #allocation12 [shape = 'u8[1024]{0}', space=vmem, size = 0x400, scoped, tag = 'input window, operand 6']
    #allocation13 [shape = 's32[2]{0}', space=sflag, size = 0x8, scoped, tag = 'scoped memory for tpu_custom_call.1']
    #allocation14 [shape = 'u8[1024]{0}', space=vmem, size = 0x400, scoped, tag = 'input window, operand 7']
    #allocation15 [shape = 'u8[131072]{0}', space=vmem, size = 0x20000, scoped, tag = 'input window, operand 8']
    #allocation16 [shape = 's32[2]{0}', space=sflag, size = 0x8, scoped, tag = 'scoped memory for tpu_custom_call.1']
    #allocation17 [shape = 'u8[131072]{0}', space=vmem, size = 0x20000, scoped, tag = 'input window, operand 10']
    #allocation18 [shape = 'u8[32768]{0}', space=vmem, size = 0x8000, scoped, tag = 'output window, operand 0, single buffered']
    %19 = vsyncpa [#allocation4], 0
    %20 = vsyncpa [#allocation7], 0
    %s21 = scalar_lea.sflag [#allocation7], 1
    %22 = vsyncpa %s21, 0
    %23 = vsyncpa [#allocation10], 0
    %s24 = scalar_lea.sflag [#allocation10], 1
    %25 = vsyncpa %s24, 0
    %26 = vsyncpa [#allocation13], 0
    %s27 = scalar_lea.sflag [#allocation13], 1
    %28 = vsyncpa %s27, 0
    %29 = vsyncpa [#allocation16], 0
    %s30 = scalar_lea.sflag [#allocation16], 1
    %31 = vsyncpa %s30, 0
    %32 = vsyncpa [#allocation5], 0
    loop: start=0, step=1, limit=4
    $region2: #{tpu_custom_call.1} parent=1 // loop_pre_header
      _
    $region3: #{tpu_custom_call.1} parent=1 // loop_header
      %s34 = sphi 0, %s38
      %p35 = scmp.ge.s32.totalorder %s34, 4
      %s41 = sphi 0, %s53
      %s42 = sphi 0, %s49
      %s43 = sphi 0, %s41
      %s44 = sphi 0, %s42
      %s45 = sphi 0, %s43
      %s46 = sphi 0, %s44
      %s56 = sphi 0, %s58
      %s59 = sphi 0, %s56
      %s60 = sphi 0, %s59
      %s76 = sphi 0, %s60
      %s82 = sphi 0, %s84
      %s85 = sphi 0, %s82
      %s86 = sphi 0, %s85
      %s102 = sphi 0, %s86
      %s108 = sphi 0, %s110
      %s111 = sphi 0, %s108
      %s112 = sphi 0, %s111
      %s128 = sphi 0, %s112
      %s134 = sphi 0, %s136
      %s137 = sphi 0, %s134
      %s138 = sphi 0, %s137
      %s154 = sphi 0, %s138
      %s160 = sphi 0, %s162
      %s163 = sphi 0, %s160
      %s164 = sphi 0, %s163
      %s180 = sphi 0, %s164
      %s186 = sphi 0, %s188
      %s189 = sphi 0, %s186
      %s190 = sphi 0, %s189
      %s206 = sphi 0, %s190
      %s212 = sphi 0, %s214
      %s215 = sphi 0, %s212
      %s216 = sphi 0, %s215
      %s232 = sphi 0, %s216
      %s238 = sphi 0, %s240
      %s241 = sphi 0, %s238
      %s242 = sphi 0, %s241
      %s258 = sphi 0, %s242
      %s264 = sphi 0, %s266
      %s267 = sphi 0, %s264
      %s268 = sphi 0, %s267
      %s284 = sphi 0, %s268
      %s290 = sphi 0, %s292
      %s293 = sphi 0, %s290
      %s294 = sphi 0, %s293
      %s310 = sphi 0, %s294
      %s316 = sphi 0, %s318
      %s319 = sphi 0, %s316
      %s320 = sphi 0, %s319
      %s336 = sphi 0, %s320
      %s342 = sphi 0, %s344
      %s345 = sphi 0, %s342
      %s346 = sphi 0, %s345
      %s362 = sphi 0, %s346
      %s366 = sphi 0, %s366
      %s368 = sphi 0, %s366
      %s369 = sphi 0, %s368
      %s383 = sphi 0, %s369
      %s387 = sphi 0, %s387
      %s389 = sphi 0, %s387
      %s390 = sphi 0, %s389
      %s404 = sphi 0, %s390
      %s410 = sphi 0, %s412
      %s413 = sphi 0, %s410
      %s414 = sphi 0, %s413
      %s430 = sphi 0, %s414
    $region4: #{tpu_custom_call.1} parent=1 // loop_header_branch
      %37 = sbr.rel (%p35) target = $region8
    $region5: #{tpu_custom_call.1} parent=1 // loop_body
      %s39 = ssub.s32 %s34, 1
      %s40 = ssub.s32 %s34, 2
      %s47 = sadd.s32 1, %s42
      %p48 = scmp.ge.s32.totalorder %s47, 2
      %s49 = scalar_select %p48, 0, %s47
      %s50 = sadd.s32 1, %s41
      %s51 = scalar_select %p48, %s50, %s41
      %p52 = scmp.ge.s32.totalorder %s51, 1
      %s53 = scalar_select %p52, 0, %s51
      %s54 = ssub.s32 %s41, %s53
      %p55 = scmp.eq.s32.totalorder %s54, 0
      %s57 = sadd.s32 %s56, 1
      %s58 = scalar_select %p55, %s56, %s57
      %p61 = pneg %p55
      %p62 = scmp.eq.s32.totalorder %s34, 1
      %p63 = por %p61, %p62
      %p64 = scmp.ne.s32.totalorder %s56, %s59
      %p65 = scmp.eq.s32.totalorder %s34, 0
      %p66 = por %p64, %p65
      %p67 = scmp.ne.s32.totalorder %s56, %s59
      %p68 = scmp.eq.s32.totalorder %s39, 1
      %p69 = por %p67, %p68
      %p70 = scmp.ne.s32.totalorder %s59, %s60
      %p71 = scmp.eq.s32.totalorder %s39, 0
      %p72 = por %p70, %p71
      %p73 = scmp.ne.s32.totalorder %s59, %s60
      %p74 = scmp.eq.s32.totalorder %s40, 1
      %p75 = por %p73, %p74
      %p77 = scmp.ne.s32.totalorder %s60, %s76
      %p78 = scmp.eq.s32.totalorder %s40, 0
      %p79 = por %p77, %p78
      %s80 = ssub.s32 %s42, %s49
      %p81 = scmp.eq.s32.totalorder %s80, 0
      %s83 = sadd.s32 %s82, 1
      %s84 = scalar_select %p81, %s82, %s83
      %p87 = pneg %p81
      %p88 = scmp.eq.s32.totalorder %s34, 1
      %p89 = por %p87, %p88
      %p90 = scmp.ne.s32.totalorder %s82, %s85
      %p91 = scmp.eq.s32.totalorder %s34, 0
      %p92 = por %p90, %p91
      %p93 = scmp.ne.s32.totalorder %s82, %s85
      %p94 = scmp.eq.s32.totalorder %s39, 1
      %p95 = por %p93, %p94
      %p96 = scmp.ne.s32.totalorder %s85, %s86
      %p97 = scmp.eq.s32.totalorder %s39, 0
      %p98 = por %p96, %p97
      %p99 = scmp.ne.s32.totalorder %s85, %s86
      %p100 = scmp.eq.s32.totalorder %s40, 1
      %p101 = por %p99, %p100
      %p103 = scmp.ne.s32.totalorder %s86, %s102
      %p104 = scmp.eq.s32.totalorder %s40, 0
      %p105 = por %p103, %p104
      %s106 = ssub.s32 %s42, %s49
      %p107 = scmp.eq.s32.totalorder %s106, 0
      %s109 = sadd.s32 %s108, 1
      %s110 = scalar_select %p107, %s108, %s109
      %p113 = pneg %p107
      %p114 = scmp.eq.s32.totalorder %s34, 1
      %p115 = por %p113, %p114
      %p116 = scmp.ne.s32.totalorder %s108, %s111
      %p117 = scmp.eq.s32.totalorder %s34, 0
      %p118 = por %p116, %p117
      %p119 = scmp.ne.s32.totalorder %s108, %s111
      %p120 = scmp.eq.s32.totalorder %s39, 1
      %p121 = por %p119, %p120
      %p122 = scmp.ne.s32.totalorder %s111, %s112
      %p123 = scmp.eq.s32.totalorder %s39, 0
      %p124 = por %p122, %p123
      %p125 = scmp.ne.s32.totalorder %s111, %s112
      %p126 = scmp.eq.s32.totalorder %s40, 1
      %p127 = por %p125, %p126
      %p129 = scmp.ne.s32.totalorder %s112, %s128
      %p130 = scmp.eq.s32.totalorder %s40, 0
      %p131 = por %p129, %p130
      %s132 = ssub.s32 %s42, %s49
      %p133 = scmp.eq.s32.totalorder %s132, 0
      %s135 = sadd.s32 %s134, 1
      %s136 = scalar_select %p133, %s134, %s135
      %p139 = pneg %p133
      %p140 = scmp.eq.s32.totalorder %s34, 1
      %p141 = por %p139, %p140
      %p142 = scmp.ne.s32.totalorder %s134, %s137
      %p143 = scmp.eq.s32.totalorder %s34, 0
      %p144 = por %p142, %p143
      %p145 = scmp.ne.s32.totalorder %s134, %s137
      %p146 = scmp.eq.s32.totalorder %s39, 1
      %p147 = por %p145, %p146
      %p148 = scmp.ne.s32.totalorder %s137, %s138
      %p149 = scmp.eq.s32.totalorder %s39, 0
      %p150 = por %p148, %p149
      %p151 = scmp.ne.s32.totalorder %s137, %s138
      %p152 = scmp.eq.s32.totalorder %s40, 1
      %p153 = por %p151, %p152
      %p155 = scmp.ne.s32.totalorder %s138, %s154
      %p156 = scmp.eq.s32.totalorder %s40, 0
      %p157 = por %p155, %p156
      %s158 = ssub.s32 %s42, %s49
      %p159 = scmp.eq.s32.totalorder %s158, 0
      %s161 = sadd.s32 %s160, 1
      %s162 = scalar_select %p159, %s160, %s161
      %p165 = pneg %p159
      %p166 = scmp.eq.s32.totalorder %s34, 1
      %p167 = por %p165, %p166
      %p168 = scmp.ne.s32.totalorder %s160, %s163
      %p169 = scmp.eq.s32.totalorder %s34, 0
      %p170 = por %p168, %p169
      %p171 = scmp.ne.s32.totalorder %s160, %s163
      %p172 = scmp.eq.s32.totalorder %s39, 1
      %p173 = por %p171, %p172
      %p174 = scmp.ne.s32.totalorder %s163, %s164
      %p175 = scmp.eq.s32.totalorder %s39, 0
      %p176 = por %p174, %p175
      %p177 = scmp.ne.s32.totalorder %s163, %s164
      %p178 = scmp.eq.s32.totalorder %s40, 1
      %p179 = por %p177, %p178
      %p181 = scmp.ne.s32.totalorder %s164, %s180
      %p182 = scmp.eq.s32.totalorder %s40, 0
      %p183 = por %p181, %p182
      %s184 = ssub.s32 %s42, %s49
      %p185 = scmp.eq.s32.totalorder %s184, 0
      %s187 = sadd.s32 %s186, 1
      %s188 = scalar_select %p185, %s186, %s187
      %p191 = pneg %p185
      %p192 = scmp.eq.s32.totalorder %s34, 1
      %p193 = por %p191, %p192
      %p194 = scmp.ne.s32.totalorder %s186, %s189
      %p195 = scmp.eq.s32.totalorder %s34, 0
      %p196 = por %p194, %p195
      %p197 = scmp.ne.s32.totalorder %s186, %s189
      %p198 = scmp.eq.s32.totalorder %s39, 1
      %p199 = por %p197, %p198
      %p200 = scmp.ne.s32.totalorder %s189, %s190
      %p201 = scmp.eq.s32.totalorder %s39, 0
      %p202 = por %p200, %p201
      %p203 = scmp.ne.s32.totalorder %s189, %s190
      %p204 = scmp.eq.s32.totalorder %s40, 1
      %p205 = por %p203, %p204
      %p207 = scmp.ne.s32.totalorder %s190, %s206
      %p208 = scmp.eq.s32.totalorder %s40, 0
      %p209 = por %p207, %p208
      %s210 = ssub.s32 %s42, %s49
      %p211 = scmp.eq.s32.totalorder %s210, 0
      %s213 = sadd.s32 %s212, 1
      %s214 = scalar_select %p211, %s212, %s213
      %p217 = pneg %p211
      %p218 = scmp.eq.s32.totalorder %s34, 1
      %p219 = por %p217, %p218
      %p220 = scmp.ne.s32.totalorder %s212, %s215
      %p221 = scmp.eq.s32.totalorder %s34, 0
      %p222 = por %p220, %p221
      %p223 = scmp.ne.s32.totalorder %s212, %s215
      %p224 = scmp.eq.s32.totalorder %s39, 1
      %p225 = por %p223, %p224
      %p226 = scmp.ne.s32.totalorder %s215, %s216
      %p227 = scmp.eq.s32.totalorder %s39, 0
      %p228 = por %p226, %p227
      %p229 = scmp.ne.s32.totalorder %s215, %s216
      %p230 = scmp.eq.s32.totalorder %s40, 1
      %p231 = por %p229, %p230
      %p233 = scmp.ne.s32.totalorder %s216, %s232
      %p234 = scmp.eq.s32.totalorder %s40, 0
      %p235 = por %p233, %p234
      %s236 = ssub.s32 %s42, %s49
      %p237 = scmp.eq.s32.totalorder %s236, 0
      %s239 = sadd.s32 %s238, 1
      %s240 = scalar_select %p237, %s238, %s239
      %p243 = pneg %p237
      %p244 = scmp.eq.s32.totalorder %s34, 1
      %p245 = por %p243, %p244
      %p246 = scmp.ne.s32.totalorder %s238, %s241
      %p247 = scmp.eq.s32.totalorder %s34, 0
      %p248 = por %p246, %p247
      %p249 = scmp.ne.s32.totalorder %s238, %s241
      %p250 = scmp.eq.s32.totalorder %s39, 1
      %p251 = por %p249, %p250
      %p252 = scmp.ne.s32.totalorder %s241, %s242
      %p253 = scmp.eq.s32.totalorder %s39, 0
      %p254 = por %p252, %p253
      %p255 = scmp.ne.s32.totalorder %s241, %s242
      %p256 = scmp.eq.s32.totalorder %s40, 1
      %p257 = por %p255, %p256
      %p259 = scmp.ne.s32.totalorder %s242, %s258
      %p260 = scmp.eq.s32.totalorder %s40, 0
      %p261 = por %p259, %p260
      %s262 = ssub.s32 %s42, %s49
      %p263 = scmp.eq.s32.totalorder %s262, 0
      %s265 = sadd.s32 %s264, 1
      %s266 = scalar_select %p263, %s264, %s265
      %p269 = pneg %p263
      %p270 = scmp.eq.s32.totalorder %s34, 1
      %p271 = por %p269, %p270
      %p272 = scmp.ne.s32.totalorder %s264, %s267
      %p273 = scmp.eq.s32.totalorder %s34, 0
      %p274 = por %p272, %p273
      %p275 = scmp.ne.s32.totalorder %s264, %s267
      %p276 = scmp.eq.s32.totalorder %s39, 1
      %p277 = por %p275, %p276
      %p278 = scmp.ne.s32.totalorder %s267, %s268
      %p279 = scmp.eq.s32.totalorder %s39, 0
      %p280 = por %p278, %p279
      %p281 = scmp.ne.s32.totalorder %s267, %s268
      %p282 = scmp.eq.s32.totalorder %s40, 1
      %p283 = por %p281, %p282
      %p285 = scmp.ne.s32.totalorder %s268, %s284
      %p286 = scmp.eq.s32.totalorder %s40, 0
      %p287 = por %p285, %p286
      %s288 = ssub.s32 %s42, %s49
      %p289 = scmp.eq.s32.totalorder %s288, 0
      %s291 = sadd.s32 %s290, 1
      %s292 = scalar_select %p289, %s290, %s291
      %p295 = pneg %p289
      %p296 = scmp.eq.s32.totalorder %s34, 1
      %p297 = por %p295, %p296
      %p298 = scmp.ne.s32.totalorder %s290, %s293
      %p299 = scmp.eq.s32.totalorder %s34, 0
      %p300 = por %p298, %p299
      %p301 = scmp.ne.s32.totalorder %s290, %s293
      %p302 = scmp.eq.s32.totalorder %s39, 1
      %p303 = por %p301, %p302
      %p304 = scmp.ne.s32.totalorder %s293, %s294
      %p305 = scmp.eq.s32.totalorder %s39, 0
      %p306 = por %p304, %p305
      %p307 = scmp.ne.s32.totalorder %s293, %s294
      %p308 = scmp.eq.s32.totalorder %s40, 1
      %p309 = por %p307, %p308
      %p311 = scmp.ne.s32.totalorder %s294, %s310
      %p312 = scmp.eq.s32.totalorder %s40, 0
      %p313 = por %p311, %p312
      %s314 = ssub.s32 %s42, %s49
      %p315 = scmp.eq.s32.totalorder %s314, 0
      %s317 = sadd.s32 %s316, 1
      %s318 = scalar_select %p315, %s316, %s317
      %p321 = pneg %p315
      %p322 = scmp.eq.s32.totalorder %s34, 1
      %p323 = por %p321, %p322
      %p324 = scmp.ne.s32.totalorder %s316, %s319
      %p325 = scmp.eq.s32.totalorder %s34, 0
      %p326 = por %p324, %p325
      %p327 = scmp.ne.s32.totalorder %s316, %s319
      %p328 = scmp.eq.s32.totalorder %s39, 1
      %p329 = por %p327, %p328
      %p330 = scmp.ne.s32.totalorder %s319, %s320
      %p331 = scmp.eq.s32.totalorder %s39, 0
      %p332 = por %p330, %p331
      %p333 = scmp.ne.s32.totalorder %s319, %s320
      %p334 = scmp.eq.s32.totalorder %s40, 1
      %p335 = por %p333, %p334
      %p337 = scmp.ne.s32.totalorder %s320, %s336
      %p338 = scmp.eq.s32.totalorder %s40, 0
      %p339 = por %p337, %p338
      %s340 = ssub.s32 %s42, %s49
      %p341 = scmp.eq.s32.totalorder %s340, 0
      %s343 = sadd.s32 %s342, 1
      %s344 = scalar_select %p341, %s342, %s343
      %p347 = pneg %p341
      %p348 = scmp.eq.s32.totalorder %s34, 1
      %p349 = por %p347, %p348
      %p350 = scmp.ne.s32.totalorder %s342, %s345
      %p351 = scmp.eq.s32.totalorder %s34, 0
      %p352 = por %p350, %p351
      %p353 = scmp.ne.s32.totalorder %s342, %s345
      %p354 = scmp.eq.s32.totalorder %s39, 1
      %p355 = por %p353, %p354
      %p356 = scmp.ne.s32.totalorder %s345, %s346
      %p357 = scmp.eq.s32.totalorder %s39, 0
      %p358 = por %p356, %p357
      %p359 = scmp.ne.s32.totalorder %s345, %s346
      %p360 = scmp.eq.s32.totalorder %s40, 1
      %p361 = por %p359, %p360
      %p363 = scmp.ne.s32.totalorder %s346, %s362
      %p364 = scmp.eq.s32.totalorder %s40, 0
      %p365 = por %p363, %p364
      %s367 = sadd.s32 %s366, 1
      %p370 = scmp.eq.s32.totalorder %s34, 1
      %p371 = scmp.ne.s32.totalorder %s366, %s368
      %p372 = scmp.eq.s32.totalorder %s34, 0
      %p373 = por %p371, %p372
      %p374 = scmp.ne.s32.totalorder %s366, %s368
      %p375 = scmp.eq.s32.totalorder %s39, 1
      %p376 = por %p374, %p375
      %p377 = scmp.ne.s32.totalorder %s368, %s369
      %p378 = scmp.eq.s32.totalorder %s39, 0
      %p379 = por %p377, %p378
      %p380 = scmp.ne.s32.totalorder %s368, %s369
      %p381 = scmp.eq.s32.totalorder %s40, 1
      %p382 = por %p380, %p381
      %p384 = scmp.ne.s32.totalorder %s369, %s383
      %p385 = scmp.eq.s32.totalorder %s40, 0
      %p386 = por %p384, %p385
      %s388 = sadd.s32 %s387, 1
      %p391 = scmp.eq.s32.totalorder %s34, 1
      %p392 = scmp.ne.s32.totalorder %s387, %s389
      %p393 = scmp.eq.s32.totalorder %s34, 0
      %p394 = por %p392, %p393
      %p395 = scmp.ne.s32.totalorder %s387, %s389
      %p396 = scmp.eq.s32.totalorder %s39, 1
      %p397 = por %p395, %p396
      %p398 = scmp.ne.s32.totalorder %s389, %s390
      %p399 = scmp.eq.s32.totalorder %s39, 0
      %p400 = por %p398, %p399
      %p401 = scmp.ne.s32.totalorder %s389, %s390
      %p402 = scmp.eq.s32.totalorder %s40, 1
      %p403 = por %p401, %p402
      %p405 = scmp.ne.s32.totalorder %s390, %s404
      %p406 = scmp.eq.s32.totalorder %s40, 0
      %p407 = por %p405, %p406
      %s408 = ssub.s32 %s41, %s53
      %p409 = scmp.eq.s32.totalorder %s408, 0
      %s411 = sadd.s32 %s410, 1
      %s412 = scalar_select %p409, %s410, %s411
      %p415 = pneg %p409
      %p416 = scmp.eq.s32.totalorder %s34, 1
      %p417 = por %p415, %p416
      %p418 = scmp.ne.s32.totalorder %s410, %s413
      %p419 = scmp.eq.s32.totalorder %s34, 0
      %p420 = por %p418, %p419
      %p421 = scmp.ne.s32.totalorder %s410, %s413
      %p422 = scmp.eq.s32.totalorder %s39, 1
      %p423 = por %p421, %p422
      %p424 = scmp.ne.s32.totalorder %s413, %s414
      %p425 = scmp.eq.s32.totalorder %s39, 0
      %p426 = por %p424, %p425
      %p427 = scmp.ne.s32.totalorder %s413, %s414
      %p428 = scmp.eq.s32.totalorder %s40, 1
      %p429 = por %p427, %p428
      %p431 = scmp.ne.s32.totalorder %s414, %s430
      %p432 = scmp.eq.s32.totalorder %s40, 0
      %p433 = por %p431, %p432
      %p434 = scmp.le.s32.totalorder 1, %s34
      %p435 = scmp.lt.s32.totalorder %s34, 3
      %p436 = pnand %p434, %p435
      %p437 = pneg %p436
      // Predicated region
      $region9: #{tpu_custom_call.1} parent=5 // pred_check
        _
      $region10: #{tpu_custom_call.1} parent=5 // pred_check_branch
        %439 = sbr.rel (%p436) target = $region12
      $region11: #{tpu_custom_call.1} parent=5 // pred_region
        %s440 = ssub.s32 %s34, 1
        // Predicated region
        $region13: #{tpu_custom_call.1} parent=11 // pred_check
          %p441 = pneg %p72
        $region14: #{tpu_custom_call.1} parent=11 // pred_check_branch
          %443 = sbr.rel (%p441) target = $region16
        $region15: #{tpu_custom_call.1} parent=11 // pred_region
          %s444 = smul.u32 4, %s43
          %446 = vsyncadd [#allocation4], 0
          %s447 = smul.addr %s444, 2
          %s448 = smul.addr %s447, 8
          %s449 = scalar_lea.hbm %s0, %s448
          %s450 = sshll.u32 %s449, 4
          %s451 = int_to_ptr.hbm [resolvable:$true] %s450
          %s452 = sshll.u32 [#allocation3], 4
          %s453 = int_to_ptr.vmem [resolvable:$true] %s452
          %458 = dma.hbm_to_vmem [thread:$0]  %s451, 1024, %s453, [#allocation4], 128, 128, 8
        $region16: #{tpu_custom_call.1} parent=11 // pred_fallthru
          _
        // Predicated region
        $region17: #{tpu_custom_call.1} parent=11 // pred_check
          %p459 = pneg %p379
        $region18: #{tpu_custom_call.1} parent=11 // pred_check_branch
          %461 = sbr.rel (%p459) target = $region20
        $region19: #{tpu_custom_call.1} parent=11 // pred_region
          _
        $region20: #{tpu_custom_call.1} parent=11 // pred_fallthru
          _
        // Predicated region
        $region21: #{tpu_custom_call.1} parent=11 // pred_check
          %p462 = pneg %p400
        $region22: #{tpu_custom_call.1} parent=11 // pred_check_branch
          %464 = sbr.rel (%p462) target = $region24
        $region23: #{tpu_custom_call.1} parent=11 // pred_region
          _
        $region24: #{tpu_custom_call.1} parent=11 // pred_fallthru
          _
      $region12: #{tpu_custom_call.1} parent=5 // pred_fallthru
        _
      %p465 = scmp.lt.s32.totalorder %s34, 2
      // Predicated region
      $region25: #{tpu_custom_call.1} parent=5 // pred_check
        %p466 = pneg %p465
      $region26: #{tpu_custom_call.1} parent=5 // pred_check_branch
        %468 = sbr.rel (%p466) target = $region28
      $region27: #{tpu_custom_call.1} parent=5 // pred_region
        // Predicated region
        $region29: #{tpu_custom_call.1} parent=27 // pred_check
          %p469 = pneg %p92
        $region30: #{tpu_custom_call.1} parent=27 // pred_check_branch
          %471 = sbr.rel (%p469) target = $region32
        $region31: #{tpu_custom_call.1} parent=27 // pred_region
          %s472 = sand.u32 %s34, 1
          %s473 = scalar_lea.sflag [#allocation7], %s472
          %s474 = sand.u32 %s82, 1
          %s475 = scalar_lea.vmem [#allocation6], %s474
          %477 = vsyncadd %s473, 0
          %s478 = scalar_lea.hbm %s1, %s42
          %s480 = sshll.u32 %s478, 4
          %s481 = int_to_ptr.hbm [resolvable:$true] %s480
          %s482 = sshll.u32 %s475, 4
          %s483 = int_to_ptr.vmem [resolvable:$true] %s482
          %485 = dma.hbm_to_vmem [thread:$0]  %s481, 16, %s483, %s473
        $region32: #{tpu_custom_call.1} parent=27 // pred_fallthru
          _
        // Predicated region
        $region33: #{tpu_custom_call.1} parent=27 // pred_check
          %p486 = pneg %p118
        $region34: #{tpu_custom_call.1} parent=27 // pred_check_branch
          %488 = sbr.rel (%p486) target = $region36
        $region35: #{tpu_custom_call.1} parent=27 // pred_region
          %s489 = sand.u32 %s34, 1
          %s490 = scalar_lea.sflag [#allocation7], %s489
          %s491 = sand.u32 %s108, 1
          %s492 = scalar_lea.vmem [#allocation8], %s491
          %494 = vsyncadd %s490, 0
          %s495 = scalar_lea.hbm %s2, %s42
          %s497 = sshll.u32 %s495, 4
          %s498 = int_to_ptr.hbm [resolvable:$true] %s497
          %s499 = sshll.u32 %s492, 4
          %s500 = int_to_ptr.vmem [resolvable:$true] %s499
          %502 = dma.hbm_to_vmem [thread:$0]  %s498, 16, %s500, %s490
        $region36: #{tpu_custom_call.1} parent=27 // pred_fallthru
          _
        // Predicated region
        $region37: #{tpu_custom_call.1} parent=27 // pred_check
          %p503 = pneg %p144
        $region38: #{tpu_custom_call.1} parent=27 // pred_check_branch
          %505 = sbr.rel (%p503) target = $region40
        $region39: #{tpu_custom_call.1} parent=27 // pred_region
          %s506 = sand.u32 %s34, 1
          %s507 = scalar_lea.sflag [#allocation10], %s506
          %s508 = sand.u32 %s134, 1
          %s509 = smul.addr %s508, 192
          %s510 = scalar_lea.vmem [#allocation9], %s509
          %512 = vsyncadd %s507, 0
          %s513 = smul.addr %s42, 48
          %s514 = smul.addr %s513, 4
          %s515 = scalar_lea.hbm %s3, %s514
          %s516 = sshll.u32 %s515, 4
          %s517 = int_to_ptr.hbm [resolvable:$true] %s516
          %s518 = sshll.u32 %s510, 4
          %s519 = int_to_ptr.vmem [resolvable:$true] %s518
          %524 = dma.hbm_to_vmem [thread:$0]  %s517, 3072, %s519, %s507, 192, 192, 12
        $region40: #{tpu_custom_call.1} parent=27 // pred_fallthru
          _
        // Predicated region
        $region41: #{tpu_custom_call.1} parent=27 // pred_check
          %p525 = pneg %p170
        $region42: #{tpu_custom_call.1} parent=27 // pred_check_branch
          %527 = sbr.rel (%p525) target = $region44
        $region43: #{tpu_custom_call.1} parent=27 // pred_region
          %s528 = sand.u32 %s34, 1
          %s529 = scalar_lea.sflag [#allocation10], %s528
          %s530 = sand.u32 %s160, 1
          %s531 = smul.addr %s530, 64
          %s532 = scalar_lea.vmem [#allocation11], %s531
          %534 = vsyncadd %s529, 0
          %s535 = smul.addr %s42, 16
          %s536 = smul.addr %s535, 4
          %s537 = scalar_lea.hbm %s4, %s536
          %s538 = sshll.u32 %s537, 4
          %s539 = int_to_ptr.hbm [resolvable:$true] %s538
          %s540 = sshll.u32 %s532, 4
          %s541 = int_to_ptr.vmem [resolvable:$true] %s540
          %546 = dma.hbm_to_vmem [thread:$0]  %s539, 1024, %s541, %s529, 64, 64, 4
        $region44: #{tpu_custom_call.1} parent=27 // pred_fallthru
          _
        // Predicated region
        $region45: #{tpu_custom_call.1} parent=27 // pred_check
          %p547 = pneg %p196
        $region46: #{tpu_custom_call.1} parent=27 // pred_check_branch
          %549 = sbr.rel (%p547) target = $region48
        $region47: #{tpu_custom_call.1} parent=27 // pred_region
          %p550 = scmp.lt.s32.totalorder %s42, 1
          %s551 = scalar_select %p550, %s42, 1
          %s552 = scalar_lea.vmem %s5, %s551
        $region48: #{tpu_custom_call.1} parent=27 // pred_fallthru
          _
        // Predicated region
        $region49: #{tpu_custom_call.1} parent=27 // pred_check
          %p553 = pneg %p222
        $region50: #{tpu_custom_call.1} parent=27 // pred_check_branch
          %555 = sbr.rel (%p553) target = $region52
        $region51: #{tpu_custom_call.1} parent=27 // pred_region
          %s556 = sand.u32 %s34, 1
          %s557 = scalar_lea.sflag [#allocation13], %s556
          %s558 = sand.u32 %s212, 1
          %s559 = scalar_lea.vmem [#allocation12], %s558
          %561 = vsyncadd %s557, 0
          %s562 = scalar_lea.hbm %s6, %s42
          %s564 = sshll.u32 %s562, 4
          %s565 = int_to_ptr.hbm [resolvable:$true] %s564
          %s566 = sshll.u32 %s559, 4
          %s567 = int_to_ptr.vmem [resolvable:$true] %s566
          %569 = dma.hbm_to_vmem [thread:$0]  %s565, 16, %s567, %s557
        $region52: #{tpu_custom_call.1} parent=27 // pred_fallthru
          _
        // Predicated region
        $region53: #{tpu_custom_call.1} parent=27 // pred_check
          %p570 = pneg %p248
        $region54: #{tpu_custom_call.1} parent=27 // pred_check_branch
          %572 = sbr.rel (%p570) target = $region56
        $region55: #{tpu_custom_call.1} parent=27 // pred_region
          %s573 = sand.u32 %s34, 1
          %s574 = scalar_lea.sflag [#allocation13], %s573
          %s575 = sand.u32 %s238, 1
          %s576 = scalar_lea.vmem [#allocation14], %s575
          %578 = vsyncadd %s574, 0
          %s579 = scalar_lea.hbm %s7, %s42
          %s581 = sshll.u32 %s579, 4
          %s582 = int_to_ptr.hbm [resolvable:$true] %s581
          %s583 = sshll.u32 %s576, 4
          %s584 = int_to_ptr.vmem [resolvable:$true] %s583
          %586 = dma.hbm_to_vmem [thread:$0]  %s582, 16, %s584, %s574
        $region56: #{tpu_custom_call.1} parent=27 // pred_fallthru
          _
        // Predicated region
        $region57: #{tpu_custom_call.1} parent=27 // pred_check
          %p587 = pneg %p274
        $region58: #{tpu_custom_call.1} parent=27 // pred_check_branch
          %589 = sbr.rel (%p587) target = $region60
        $region59: #{tpu_custom_call.1} parent=27 // pred_region
          %s590 = sand.u32 %s34, 1
          %s591 = scalar_lea.sflag [#allocation16], %s590
          %s592 = sand.u32 %s264, 1
          %s593 = smul.addr %s592, 128
          %s594 = scalar_lea.vmem [#allocation15], %s593
          %596 = vsyncadd %s591, 0
          %s597 = smul.addr %s42, 32
          %s598 = smul.addr %s597, 4
          %s599 = scalar_lea.hbm %s8, %s598
          %s600 = sshll.u32 %s599, 4
          %s601 = int_to_ptr.hbm [resolvable:$true] %s600
          %s602 = sshll.u32 %s594, 4
          %s603 = int_to_ptr.vmem [resolvable:$true] %s602
          %608 = dma.hbm_to_vmem [thread:$0]  %s601, 2048, %s603, %s591, 128, 128, 8
        $region60: #{tpu_custom_call.1} parent=27 // pred_fallthru
          _
        // Predicated region
        $region61: #{tpu_custom_call.1} parent=27 // pred_check
          %p609 = pneg %p300
        $region62: #{tpu_custom_call.1} parent=27 // pred_check_branch
          %611 = sbr.rel (%p609) target = $region64
        $region63: #{tpu_custom_call.1} parent=27 // pred_region
          %p612 = scmp.lt.s32.totalorder %s42, 1
          %s613 = scalar_select %p612, %s42, 1
          %s614 = smul.addr %s613, 2
          %s615 = scalar_lea.vmem %s9, %s614
        $region64: #{tpu_custom_call.1} parent=27 // pred_fallthru
          _
        // Predicated region
        $region65: #{tpu_custom_call.1} parent=27 // pred_check
          %p616 = pneg %p326
        $region66: #{tpu_custom_call.1} parent=27 // pred_check_branch
          %618 = sbr.rel (%p616) target = $region68
        $region67: #{tpu_custom_call.1} parent=27 // pred_region
          %s619 = sand.u32 %s34, 1
          %s620 = scalar_lea.sflag [#allocation16], %s619
          %s621 = sand.u32 %s316, 1
          %s622 = smul.addr %s621, 128
          %s623 = scalar_lea.vmem [#allocation17], %s622
          %625 = vsyncadd %s620, 0
          %s626 = smul.addr %s42, 32
          %s627 = smul.addr %s626, 4
          %s628 = scalar_lea.hbm %s10, %s627
          %s629 = sshll.u32 %s628, 4
          %s630 = int_to_ptr.hbm [resolvable:$true] %s629
          %s631 = sshll.u32 %s623, 4
          %s632 = int_to_ptr.vmem [resolvable:$true] %s631
          %637 = dma.hbm_to_vmem [thread:$0]  %s630, 2048, %s632, %s620, 64, 64, 4
        $region68: #{tpu_custom_call.1} parent=27 // pred_fallthru
          _
        // Predicated region
        $region69: #{tpu_custom_call.1} parent=27 // pred_check
          %p638 = pneg %p352
        $region70: #{tpu_custom_call.1} parent=27 // pred_check_branch
          %640 = sbr.rel (%p638) target = $region72
        $region71: #{tpu_custom_call.1} parent=27 // pred_region
          %p641 = scmp.lt.s32.totalorder %s42, 1
          %s642 = scalar_select %p641, %s42, 1
          %s643 = scalar_lea.vmem %s11, %s642
        $region72: #{tpu_custom_call.1} parent=27 // pred_fallthru
          _
      $region28: #{tpu_custom_call.1} parent=5 // pred_fallthru
        _
      %p644 = scmp.le.s32.totalorder 1, %s34
      %p645 = scmp.lt.s32.totalorder %s34, 3
      %p646 = pnand %p644, %p645
      %p647 = pneg %p646
      // Predicated region
      $region73: #{tpu_custom_call.1} parent=5 // pred_check
        _
      $region74: #{tpu_custom_call.1} parent=5 // pred_check_branch
        %649 = sbr.rel (%p646) target = $region76
      $region75: #{tpu_custom_call.1} parent=5 // pred_region
        %s650 = ssub.s32 %s34, 1
        // Predicated region
        $region77: #{tpu_custom_call.1} parent=75 // pred_check
          %p651 = pneg %p72
        $region78: #{tpu_custom_call.1} parent=75 // pred_check_branch
          %653 = sbr.rel (%p651) target = $region80
        $region79: #{tpu_custom_call.1} parent=75 // pred_region
          %655 = dma.done [#allocation4], 1024
        $region80: #{tpu_custom_call.1} parent=75 // pred_fallthru
          _
        %s656 = sand.u32 %s39, 1
        %s657 = scalar_lea.sflag [#allocation7], %s656
        %s658 = sand.u32 %s85, 1
        %s659 = scalar_lea.vmem [#allocation6], %s658
        // Predicated region
        $region81: #{tpu_custom_call.1} parent=75 // pred_check
          %p660 = pneg %p98
        $region82: #{tpu_custom_call.1} parent=75 // pred_check_branch
          %662 = sbr.rel (%p660) target = $region84
        $region83: #{tpu_custom_call.1} parent=75 // pred_region
          %664 = dma.done %s657, 16
        $region84: #{tpu_custom_call.1} parent=75 // pred_fallthru
          _
        %s665 = sand.u32 %s39, 1
        %s666 = scalar_lea.sflag [#allocation7], %s665
        %s667 = sand.u32 %s111, 1
        %s668 = scalar_lea.vmem [#allocation8], %s667
        // Predicated region
        $region85: #{tpu_custom_call.1} parent=75 // pred_check
          %p669 = pneg %p124
        $region86: #{tpu_custom_call.1} parent=75 // pred_check_branch
          %671 = sbr.rel (%p669) target = $region88
        $region87: #{tpu_custom_call.1} parent=75 // pred_region
          %673 = dma.done %s666, 16
        $region88: #{tpu_custom_call.1} parent=75 // pred_fallthru
          _
        %s674 = sand.u32 %s39, 1
        %s675 = scalar_lea.sflag [#allocation10], %s674
        %s676 = sand.u32 %s137, 1
        %s677 = smul.addr %s676, 192
        %s678 = scalar_lea.vmem [#allocation9], %s677
        // Predicated region
        $region89: #{tpu_custom_call.1} parent=75 // pred_check
          %p679 = pneg %p150
        $region90: #{tpu_custom_call.1} parent=75 // pred_check_branch
          %681 = sbr.rel (%p679) target = $region92
        $region91: #{tpu_custom_call.1} parent=75 // pred_region
          %683 = dma.done %s675, 3072
        $region92: #{tpu_custom_call.1} parent=75 // pred_fallthru
          _
        %s684 = sand.u32 %s39, 1
        %s685 = scalar_lea.sflag [#allocation10], %s684
        %s686 = sand.u32 %s163, 1
        %s687 = smul.addr %s686, 64
        %s688 = scalar_lea.vmem [#allocation11], %s687
        // Predicated region
        $region93: #{tpu_custom_call.1} parent=75 // pred_check
          %p689 = pneg %p176
        $region94: #{tpu_custom_call.1} parent=75 // pred_check_branch
          %691 = sbr.rel (%p689) target = $region96
        $region95: #{tpu_custom_call.1} parent=75 // pred_region
          %693 = dma.done %s685, 1024
        $region96: #{tpu_custom_call.1} parent=75 // pred_fallthru
          _
        %s694 = sand.u32 %s39, 1
        %s695 = scalar_lea.sflag [#allocation13], %s694
        %s696 = sand.u32 %s215, 1
        %s697 = scalar_lea.vmem [#allocation12], %s696
        // Predicated region
        $region97: #{tpu_custom_call.1} parent=75 // pred_check
          %p698 = pneg %p228
        $region98: #{tpu_custom_call.1} parent=75 // pred_check_branch
          %700 = sbr.rel (%p698) target = $region100
        $region99: #{tpu_custom_call.1} parent=75 // pred_region
          %702 = dma.done %s695, 16
        $region100: #{tpu_custom_call.1} parent=75 // pred_fallthru
          _
        %s703 = sand.u32 %s39, 1
        %s704 = scalar_lea.sflag [#allocation13], %s703
        %s705 = sand.u32 %s241, 1
        %s706 = scalar_lea.vmem [#allocation14], %s705
        // Predicated region
        $region101: #{tpu_custom_call.1} parent=75 // pred_check
          %p707 = pneg %p254
        $region102: #{tpu_custom_call.1} parent=75 // pred_check_branch
          %709 = sbr.rel (%p707) target = $region104
        $region103: #{tpu_custom_call.1} parent=75 // pred_region
          %711 = dma.done %s704, 16
        $region104: #{tpu_custom_call.1} parent=75 // pred_fallthru
          _
        %s712 = sand.u32 %s39, 1
        %s713 = scalar_lea.sflag [#allocation16], %s712
        %s714 = sand.u32 %s267, 1
        %s715 = smul.addr %s714, 128
        %s716 = scalar_lea.vmem [#allocation15], %s715
        // Predicated region
        $region105: #{tpu_custom_call.1} parent=75 // pred_check
          %p717 = pneg %p280
        $region106: #{tpu_custom_call.1} parent=75 // pred_check_branch
          %719 = sbr.rel (%p717) target = $region108
        $region107: #{tpu_custom_call.1} parent=75 // pred_region
          %721 = dma.done %s713, 2048
        $region108: #{tpu_custom_call.1} parent=75 // pred_fallthru
          _
        %s722 = sand.u32 %s39, 1
        %s723 = scalar_lea.sflag [#allocation16], %s722
        %s724 = sand.u32 %s319, 1
        %s725 = smul.addr %s724, 128
        %s726 = scalar_lea.vmem [#allocation17], %s725
        // Predicated region
        $region109: #{tpu_custom_call.1} parent=75 // pred_check
          %p727 = pneg %p332
        $region110: #{tpu_custom_call.1} parent=75 // pred_check_branch
          %729 = sbr.rel (%p727) target = $region112
        $region111: #{tpu_custom_call.1} parent=75 // pred_region
          %731 = dma.done %s723, 2048
        $region112: #{tpu_custom_call.1} parent=75 // pred_fallthru
          _
        %p732 = pneg %p72
        %p733 = pneg %p69
        %s734 = sand.u32 %s39, 1
        %s735 = scalar_lea.sflag [#allocation7], %s734
        %s736 = sand.u32 %s85, 1
        %s737 = scalar_lea.vmem [#allocation6], %s736
        %p738 = pneg %p98
        %p739 = pneg %p95
        %s740 = sand.u32 %s39, 1
        %s741 = scalar_lea.sflag [#allocation7], %s740
        %s742 = sand.u32 %s111, 1
        %s743 = scalar_lea.vmem [#allocation8], %s742
        %p744 = pneg %p124
        %p745 = pneg %p121
        %s746 = sand.u32 %s39, 1
        %s747 = scalar_lea.sflag [#allocation10], %s746
        %s748 = sand.u32 %s137, 1
        %s749 = smul.addr %s748, 192
        %s750 = scalar_lea.vmem [#allocation9], %s749
        %p751 = pneg %p150
        %p752 = pneg %p147
        %s753 = sand.u32 %s39, 1
        %s754 = scalar_lea.sflag [#allocation10], %s753
        %s755 = sand.u32 %s163, 1
        %s756 = smul.addr %s755, 64
        %s757 = scalar_lea.vmem [#allocation11], %s756
        %p758 = pneg %p176
        %p759 = pneg %p173
        %p760 = scmp.lt.s32.totalorder %s44, 1
        %s761 = scalar_select %p760, %s44, 1
        %s762 = scalar_lea.vmem %s5, %s761
        %p763 = pneg %p202
        %p764 = pneg %p199
        %s765 = sand.u32 %s39, 1
        %s766 = scalar_lea.sflag [#allocation13], %s765
        %s767 = sand.u32 %s215, 1
        %s768 = scalar_lea.vmem [#allocation12], %s767
        %p769 = pneg %p228
        %p770 = pneg %p225
        %s771 = sand.u32 %s39, 1
        %s772 = scalar_lea.sflag [#allocation13], %s771
        %s773 = sand.u32 %s241, 1
        %s774 = scalar_lea.vmem [#allocation14], %s773
        %p775 = pneg %p254
        %p776 = pneg %p251
        %s777 = sand.u32 %s39, 1
        %s778 = scalar_lea.sflag [#allocation16], %s777
        %s779 = sand.u32 %s267, 1
        %s780 = smul.addr %s779, 128
        %s781 = scalar_lea.vmem [#allocation15], %s780
        %p782 = pneg %p280
        %p783 = pneg %p277
        %p784 = scmp.lt.s32.totalorder %s44, 1
        %s785 = scalar_select %p784, %s44, 1
        %s786 = smul.addr %s785, 2
        %s787 = scalar_lea.vmem %s9, %s786
        %p788 = pneg %p306
        %p789 = pneg %p303
        %s790 = sand.u32 %s39, 1
        %s791 = scalar_lea.sflag [#allocation16], %s790
        %s792 = sand.u32 %s319, 1
        %s793 = smul.addr %s792, 128
        %s794 = scalar_lea.vmem [#allocation17], %s793
        %p795 = pneg %p332
        %p796 = pneg %p329
        %p797 = scmp.lt.s32.totalorder %s44, 1
        %s798 = scalar_select %p797, %s44, 1
        %s799 = scalar_lea.vmem %s11, %s798
        %p800 = pneg %p358
        %p801 = pneg %p355
        %p802 = pneg %p379
        %p803 = pneg %p376
        %p804 = pneg %p400
        %p805 = pneg %p397
        %p806 = pneg %p426
        %p807 = pneg %p423
        %s808 = smul.u32 4, %s43
        %p809 = scmp.lt.s32.totalorder %s44, 1
        %s810 = scalar_select %p809, %s44, 1
        %s811 = scalar_lea.vmem %s5, %s810
        %p812 = scmp.lt.s32.totalorder %s44, 1
        %s813 = scalar_select %p812, %s44, 1
        %s814 = smul.addr %s813, 2
        %s815 = scalar_lea.vmem %s9, %s814
        %p816 = scmp.lt.s32.totalorder %s44, 1
        %s817 = scalar_select %p816, %s44, 1
        %s818 = scalar_lea.vmem %s11, %s817
        %s819 = smul.u32 4, %s43
        %p821 = scmp.eq.s32.totalorder %s44, 0
        // Predicated region
        $region113: #{tpu_custom_call.1} parent=75 // pred_check
          %p822 = pneg %p821
        $region114: #{tpu_custom_call.1} parent=75 // pred_check_branch
          %824 = sbr.rel (%p822) target = $region116
        $region115: #{tpu_custom_call.1} parent=75 // pred_region
          %v825 = vld [vmem:[#allocation3] sm:$0xff]
          %v826 = vld [vmem:[#allocation3 + $0x8] sm:$0xff]
          %v827 = vld [vmem:[#allocation3 + $0x10] sm:$0xff]
          %v828 = vld [vmem:[#allocation3 + $0x18] sm:$0xff]
          %v829 = vld [vmem:[#allocation3 + $0x20] sm:$0xff]
          %v830 = vld [vmem:[#allocation3 + $0x28] sm:$0xff]
          %v831 = vld [vmem:[#allocation3 + $0x30] sm:$0xff]
          %v832 = vld [vmem:[#allocation3 + $0x38] sm:$0xff]
          %833 = vst [vmem:[#allocation2] sm:$0xff] %v825
          %834 = vst [vmem:[#allocation2 + $0x8] sm:$0xff] %v826
          %835 = vst [vmem:[#allocation2 + $0x10] sm:$0xff] %v827
          %836 = vst [vmem:[#allocation2 + $0x18] sm:$0xff] %v828
          %837 = vst [vmem:[#allocation2 + $0x20] sm:$0xff] %v829
          %838 = vst [vmem:[#allocation2 + $0x28] sm:$0xff] %v830
          %839 = vst [vmem:[#allocation2 + $0x30] sm:$0xff] %v831
          %840 = vst [vmem:[#allocation2 + $0x38] sm:$0xff] %v832
        $region116: #{tpu_custom_call.1} parent=75 // pred_fallthru
          _
        %v841 = vld [vmem:[#allocation2] sm:$0xff]
        %v842 = vld [vmem:[#allocation2 + $0x8] sm:$0xff]
        %v843 = vld [vmem:[#allocation2 + $0x10] sm:$0xff]
        %v844 = vld [vmem:[#allocation2 + $0x18] sm:$0xff]
        %v845 = vld [vmem:[#allocation2 + $0x20] sm:$0xff]
        %v846 = vld [vmem:[#allocation2 + $0x28] sm:$0xff]
        %v847 = vld [vmem:[#allocation2 + $0x30] sm:$0xff]
        %v848 = vld [vmem:[#allocation2 + $0x38] sm:$0xff]
        %v849 = vld [vmem:[%s659] sm:$0x1]
        %v850 = vld [vmem:[%s668] sm:$0x1]
        %851 = vadd.xlane.f32.xlu0 %v841
        %v852 = vpop.xlane.xlu0 %851
        %853 = vadd.xlane.f32.xlu0 %v842
        %v854 = vpop.xlane.xlu0 %853
        %855 = vadd.xlane.f32.xlu0 %v843
        %v856 = vpop.xlane.xlu0 %855
        %857 = vadd.xlane.f32.xlu0 %v844
        %v858 = vpop.xlane.xlu0 %857
        %859 = vadd.xlane.f32.xlu0 %v845
        %v860 = vpop.xlane.xlu0 %859
        %861 = vadd.xlane.f32.xlu0 %v846
        %v862 = vpop.xlane.xlu0 %861
        %863 = vadd.xlane.f32.xlu0 %v847
        %v864 = vpop.xlane.xlu0 %863
        %865 = vadd.xlane.f32.xlu0 %v848
        %v866 = vpop.xlane.xlu0 %865
        %v867 = vrcp.pop 128.0
        %v868 = vmul.f32 128.0, %v867
        %v869 = vsub.f32 1.0, %v868
        %v870 = vmul.f32 %v867, %v869
        %v871 = vadd.f32 %v867, %v870
        %vm872 = vweird.f32 %v867
        %v873 = vsel %vm872, %v867, %v871
        %v874 = vmul.f32 %v852, %v873
        %v875 = vmul.f32 %v854, %v873
        %v876 = vmul.f32 %v856, %v873
        %v877 = vmul.f32 %v858, %v873
        %v878 = vmul.f32 %v860, %v873
        %v879 = vmul.f32 %v862, %v873
        %v880 = vmul.f32 %v864, %v873
        %v881 = vmul.f32 %v866, %v873
        %v882 = vsub.f32 %v841, %v874
        %v883 = vsub.f32 %v842, %v875
        %v884 = vsub.f32 %v843, %v876
        %v885 = vsub.f32 %v844, %v877
        %v886 = vsub.f32 %v845, %v878
        %v887 = vsub.f32 %v846, %v879
        %v888 = vsub.f32 %v847, %v880
        %v889 = vsub.f32 %v848, %v881
        %v890 = vmul.f32 %v882, %v882
        %v891 = vmul.f32 %v883, %v883
        %v892 = vmul.f32 %v884, %v884
        %v893 = vmul.f32 %v885, %v885
        %v894 = vmul.f32 %v886, %v886
        %v895 = vmul.f32 %v887, %v887
        %v896 = vmul.f32 %v888, %v888
        %v897 = vmul.f32 %v889, %v889
        %898 = vadd.xlane.f32.xlu0 %v890
        %v899 = vpop.xlane.xlu0 %898
        %900 = vadd.xlane.f32.xlu0 %v891
        %v901 = vpop.xlane.xlu0 %900
        %902 = vadd.xlane.f32.xlu0 %v892
        %v903 = vpop.xlane.xlu0 %902
        %904 = vadd.xlane.f32.xlu0 %v893
        %v905 = vpop.xlane.xlu0 %904
        %906 = vadd.xlane.f32.xlu0 %v894
        %v907 = vpop.xlane.xlu0 %906
        %908 = vadd.xlane.f32.xlu0 %v895
        %v909 = vpop.xlane.xlu0 %908
        %910 = vadd.xlane.f32.xlu0 %v896
        %v911 = vpop.xlane.xlu0 %910
        %912 = vadd.xlane.f32.xlu0 %v897
        %v913 = vpop.xlane.xlu0 %912
        %v914 = vmul.f32 %v899, %v873
        %v915 = vmul.f32 %v901, %v873
        %v916 = vmul.f32 %v903, %v873
        %v917 = vmul.f32 %v905, %v873
        %v918 = vmul.f32 %v907, %v873
        %v919 = vmul.f32 %v909, %v873
        %v920 = vmul.f32 %v911, %v873
        %v921 = vmul.f32 %v913, %v873
        %v922 = vadd.f32 %v914, 1e-05
        %v923 = vadd.f32 %v915, 1e-05
        %v924 = vadd.f32 %v916, 1e-05
        %v925 = vadd.f32 %v917, 1e-05
        %v926 = vadd.f32 %v918, 1e-05
        %v927 = vadd.f32 %v919, 1e-05
        %v928 = vadd.f32 %v920, 1e-05
        %v929 = vadd.f32 %v921, 1e-05
        %v930 = vrsqrt.pop %v922
        %v931 = vmul.f32 %v930, %v922
        %v932 = vmul.f32 %v931, %v930
        %v933 = vmul.f32 0.5, %v932
        %v934 = vsub.f32 1.5, %v933
        %v935 = vmul.f32 %v930, %v934
        %vm936 = vweird.f32 %v922
        %vm937 = vweird.f32 %v930
        %vm938 = vmor %vm936, %vm937
        %v939 = vsel %vm938, %v930, %v935
        %v940 = vrsqrt.pop %v923
        %v941 = vmul.f32 %v940, %v923
        %v942 = vmul.f32 %v941, %v940
        %v943 = vmul.f32 0.5, %v942
        %v944 = vsub.f32 1.5, %v943
        %v945 = vmul.f32 %v940, %v944
        %vm946 = vweird.f32 %v923
        %vm947 = vweird.f32 %v940
        %vm948 = vmor %vm946, %vm947
        %v949 = vsel %vm948, %v940, %v945
        %v950 = vrsqrt.pop %v924
        %v951 = vmul.f32 %v950, %v924
        %v952 = vmul.f32 %v951, %v950
        %v953 = vmul.f32 0.5, %v952
        %v954 = vsub.f32 1.5, %v953
        %v955 = vmul.f32 %v950, %v954
        %vm956 = vweird.f32 %v924
        %vm957 = vweird.f32 %v950
        %vm958 = vmor %vm956, %vm957
        %v959 = vsel %vm958, %v950, %v955
        %v960 = vrsqrt.pop %v925
        %v961 = vmul.f32 %v960, %v925
        %v962 = vmul.f32 %v961, %v960
        %v963 = vmul.f32 0.5, %v962
        %v964 = vsub.f32 1.5, %v963
        %v965 = vmul.f32 %v960, %v964
        %vm966 = vweird.f32 %v925
        %vm967 = vweird.f32 %v960
        %vm968 = vmor %vm966, %vm967
        %v969 = vsel %vm968, %v960, %v965
        %v970 = vrsqrt.pop %v926
        %v971 = vmul.f32 %v970, %v926
        %v972 = vmul.f32 %v971, %v970
        %v973 = vmul.f32 0.5, %v972
        %v974 = vsub.f32 1.5, %v973
        %v975 = vmul.f32 %v970, %v974
        %vm976 = vweird.f32 %v926
        %vm977 = vweird.f32 %v970
        %vm978 = vmor %vm976, %vm977
        %v979 = vsel %vm978, %v970, %v975
        %v980 = vrsqrt.pop %v927
        %v981 = vmul.f32 %v980, %v927
        %v982 = vmul.f32 %v981, %v980
        %v983 = vmul.f32 0.5, %v982
        %v984 = vsub.f32 1.5, %v983
        %v985 = vmul.f32 %v980, %v984
        %vm986 = vweird.f32 %v927
        %vm987 = vweird.f32 %v980
        %vm988 = vmor %vm986, %vm987
        %v989 = vsel %vm988, %v980, %v985
        %v990 = vrsqrt.pop %v928
        %v991 = vmul.f32 %v990, %v928
        %v992 = vmul.f32 %v991, %v990
        %v993 = vmul.f32 0.5, %v992
        %v994 = vsub.f32 1.5, %v993
        %v995 = vmul.f32 %v990, %v994
        %vm996 = vweird.f32 %v928
        %vm997 = vweird.f32 %v990
        %vm998 = vmor %vm996, %vm997
        %v999 = vsel %vm998, %v990, %v995
        %v1000 = vrsqrt.pop %v929
        %v1001 = vmul.f32 %v1000, %v929
        %v1002 = vmul.f32 %v1001, %v1000
        %v1003 = vmul.f32 0.5, %v1002
        %v1004 = vsub.f32 1.5, %v1003
        %v1005 = vmul.f32 %v1000, %v1004
        %vm1006 = vweird.f32 %v929
        %vm1007 = vweird.f32 %v1000
        %vm1008 = vmor %vm1006, %vm1007
        %v1009 = vsel %vm1008, %v1000, %v1005
        %v1010 = vmul.f32 %v882, %v939
        %v1011 = vmul.f32 %v883, %v949
        %v1012 = vmul.f32 %v884, %v959
        %v1013 = vmul.f32 %v885, %v969
        %v1014 = vmul.f32 %v886, %v979
        %v1015 = vmul.f32 %v887, %v989
        %v1016 = vmul.f32 %v888, %v999
        %v1017 = vmul.f32 %v889, %v1009
        %v1019 = vperm.slane %v849, 0
        %v1021 = vmul.f32 %v1010, %v1019
        %v1022 = vmul.f32 %v1011, %v1019
        %v1023 = vmul.f32 %v1012, %v1019
        %v1024 = vmul.f32 %v1013, %v1019
        %v1025 = vmul.f32 %v1014, %v1019
        %v1026 = vmul.f32 %v1015, %v1019
        %v1027 = vmul.f32 %v1016, %v1019
        %v1028 = vmul.f32 %v1017, %v1019
        %v1030 = vperm.slane %v850, 0
        %v1032 = vadd.f32 %v1021, %v1030
        %v1033 = vadd.f32 %v1022, %v1030
        %v1034 = vadd.f32 %v1023, %v1030
        %v1035 = vadd.f32 %v1024, %v1030
        %v1036 = vadd.f32 %v1025, %v1030
        %v1037 = vadd.f32 %v1026, %v1030
        %v1038 = vadd.f32 %v1027, %v1030
        %v1039 = vadd.f32 %v1028, %v1030
        %v1040 = vpack.c.bf16 %v1033, %v1032
        %v1041 = vpack.c.bf16 %v1035, %v1034
        %v1042 = vpack.c.bf16 %v1037, %v1036
        %v1043 = vpack.c.bf16 %v1039, %v1038
        %v1044 = vld [vmem:[%s678] sm:$0xff]
        %v1045 = vld [vmem:[%s678 + $0x8] sm:$0xf]
        %v1046 = vld [vmem:[%s678 + $0xc] sm:$0xff]
        %v1047 = vld [vmem:[%s678 + $0x14] sm:$0xf]
        %v1048 = vld [vmem:[%s678 + $0x18] sm:$0xff]
        %v1049 = vld [vmem:[%s678 + $0x20] sm:$0xf]
        %v1050 = vld [vmem:[%s678 + $0x24] sm:$0xff]
        %v1051 = vld [vmem:[%s678 + $0x2c] sm:$0xf]
        %v1052 = vld [vmem:[%s678 + $0x30] sm:$0xff]
        %v1053 = vld [vmem:[%s678 + $0x38] sm:$0xf]
        %v1054 = vld [vmem:[%s678 + $0x3c] sm:$0xff]
        %v1055 = vld [vmem:[%s678 + $0x44] sm:$0xf]
        %v1056 = vld [vmem:[%s678 + $0x48] sm:$0xff]
        %v1057 = vld [vmem:[%s678 + $0x50] sm:$0xf]
        %v1058 = vld [vmem:[%s678 + $0x54] sm:$0xff]
        %v1059 = vld [vmem:[%s678 + $0x5c] sm:$0xf]
        %v1060 = vld [vmem:[%s678 + $0x60] sm:$0xff]
        %v1061 = vld [vmem:[%s678 + $0x68] sm:$0xf]
        %v1062 = vld [vmem:[%s678 + $0x6c] sm:$0xff]
        %v1063 = vld [vmem:[%s678 + $0x74] sm:$0xf]
        %v1064 = vld [vmem:[%s678 + $0x78] sm:$0xff]
        %v1065 = vld [vmem:[%s678 + $0x80] sm:$0xf]
        %v1066 = vld [vmem:[%s678 + $0x84] sm:$0xff]
        %v1067 = vld [vmem:[%s678 + $0x8c] sm:$0xf]
        %v1068 = vld [vmem:[%s678 + $0x90] sm:$0xff]
        %v1069 = vld [vmem:[%s678 + $0x98] sm:$0xf]
        %v1070 = vld [vmem:[%s678 + $0x9c] sm:$0xff]
        %v1071 = vld [vmem:[%s678 + $0xa4] sm:$0xf]
        %v1072 = vld [vmem:[%s678 + $0xa8] sm:$0xff]
        %v1073 = vld [vmem:[%s678 + $0xb0] sm:$0xf]
        %v1074 = vld [vmem:[%s678 + $0xb4] sm:$0xff]
        %v1075 = vld [vmem:[%s678 + $0xbc] sm:$0xf]
        %v1108 = vunpack.c.l.b16 %v1044
        %v1109 = vunpack.c.h.b16 %v1044
        %v1110 = vunpack.c.l.b16 %v1045
        %v1111 = vunpack.c.l.b16 %v1046
        %v1112 = vunpack.c.h.b16 %v1046
        %v1113 = vunpack.c.l.b16 %v1047
        %v1114 = vunpack.c.l.b16 %v1048
        %v1115 = vunpack.c.h.b16 %v1048
        %v1116 = vunpack.c.l.b16 %v1049
        %v1117 = vunpack.c.l.b16 %v1050
        %v1118 = vunpack.c.h.b16 %v1050
        %v1119 = vunpack.c.l.b16 %v1051
        %v1120 = vunpack.c.l.b16 %v1052
        %v1121 = vunpack.c.h.b16 %v1052
        %v1122 = vunpack.c.l.b16 %v1053
        %v1123 = vunpack.c.l.b16 %v1054
        %v1124 = vunpack.c.h.b16 %v1054
        %v1125 = vunpack.c.l.b16 %v1055
        %v1126 = vunpack.c.l.b16 %v1056
        %v1127 = vunpack.c.h.b16 %v1056
        %v1128 = vunpack.c.l.b16 %v1057
        %v1129 = vunpack.c.l.b16 %v1058
        %v1130 = vunpack.c.h.b16 %v1058
        %v1131 = vunpack.c.l.b16 %v1059
        %v1132 = vunpack.c.l.b16 %v1060
        %v1133 = vunpack.c.h.b16 %v1060
        %v1134 = vunpack.c.l.b16 %v1061
        %v1135 = vunpack.c.l.b16 %v1062
        %v1136 = vunpack.c.h.b16 %v1062
        %v1137 = vunpack.c.l.b16 %v1063
        %v1138 = vunpack.c.l.b16 %v1064
        %v1139 = vunpack.c.h.b16 %v1064
        %v1140 = vunpack.c.l.b16 %v1065
        %v1141 = vunpack.c.l.b16 %v1066
        %v1142 = vunpack.c.h.b16 %v1066
        %v1143 = vunpack.c.l.b16 %v1067
        %v1144 = vunpack.c.l.b16 %v1068
        %v1145 = vunpack.c.h.b16 %v1068
        %v1146 = vunpack.c.l.b16 %v1069
        %v1147 = vunpack.c.l.b16 %v1070
        %v1148 = vunpack.c.h.b16 %v1070
        %v1149 = vunpack.c.l.b16 %v1071
        %v1150 = vunpack.c.l.b16 %v1072
        %v1151 = vunpack.c.h.b16 %v1072
        %v1152 = vunpack.c.l.b16 %v1073
        %v1153 = vunpack.c.l.b16 %v1074
        %v1154 = vunpack.c.h.b16 %v1074
        %v1155 = vunpack.c.l.b16 %v1075
        %v1156 = vpack.c.b16 %v1111, %v1108
        %v1157 = vpack.c.b16 %v1112, %v1109
        %v1158 = vpack.c.b16 %v1113, %v1110
        %v1159 = vpack.c.b16 %v1117, %v1114
        %v1160 = vpack.c.b16 %v1118, %v1115
        %v1161 = vpack.c.b16 %v1119, %v1116
        %v1162 = vpack.c.b16 %v1123, %v1120
        %v1163 = vpack.c.b16 %v1124, %v1121
        %v1164 = vpack.c.b16 %v1125, %v1122
        %v1165 = vpack.c.b16 %v1129, %v1126
        %v1166 = vpack.c.b16 %v1130, %v1127
        %v1167 = vpack.c.b16 %v1131, %v1128
        %v1168 = vpack.c.b16 %v1135, %v1132
        %v1169 = vpack.c.b16 %v1136, %v1133
        %v1170 = vpack.c.b16 %v1137, %v1134
        %v1171 = vpack.c.b16 %v1141, %v1138
        %v1172 = vpack.c.b16 %v1142, %v1139
        %v1173 = vpack.c.b16 %v1143, %v1140
        %v1174 = vpack.c.b16 %v1147, %v1144
        %v1175 = vpack.c.b16 %v1148, %v1145
        %v1176 = vpack.c.b16 %v1149, %v1146
        %v1177 = vpack.c.b16 %v1153, %v1150
        %v1178 = vpack.c.b16 %v1154, %v1151
        %v1179 = vpack.c.b16 %v1155, %v1152
        %1204 = vmatpush.bf16.msra.mxu0 %v1177
        %1205 = vmatpush.bf16.msra.mxu0 %v1174
        %1206 = vmatpush.bf16.msra.mxu0 %v1171
        %1207 = vmatpush.bf16.msra.mxu0 %v1168
        %1208 = vmatpush.bf16.msra.mxu0 %v1165
        %1209 = vmatpush.bf16.msra.mxu0 %v1162
        %1210 = vmatpush.bf16.msra.mxu0 %v1159
        %1211 = vmatpush.bf16.msra.mxu0 %v1156
        %1212 = vmatmul.bf16.gmra.mxu0 %v1040
        %v1213 = vpop.f32.mrf.mxu0
        %v1214 = vadd.f32 0.0, %v1213
        %v1215 = vpop.f32.mrf.mxu0
        %v1216 = vadd.f32 0.0, %v1215
        %1217 = vmatmul.bf16.gmra.mxu0 %v1041
        %v1218 = vpop.f32.mrf.mxu0
        %v1219 = vadd.f32 0.0, %v1218
        %v1220 = vpop.f32.mrf.mxu0
        %v1221 = vadd.f32 0.0, %v1220
        %1222 = vmatmul.bf16.gmra.mxu0 %v1042
        %v1223 = vpop.f32.mrf.mxu0
        %v1224 = vadd.f32 0.0, %v1223
        %v1225 = vpop.f32.mrf.mxu0
        %v1226 = vadd.f32 0.0, %v1225
        %1227 = vmatmul.bf16.gmra.mxu0 %v1043
        %v1228 = vpop.f32.mrf.mxu0
        %v1229 = vadd.f32 0.0, %v1228
        %v1230 = vpop.f32.mrf.mxu0
        %v1231 = vadd.f32 0.0, %v1230
        %1232 = vdwg.mxu0
        %1233 = vmatpush.bf16.msra.mxu0 %v1178
        %1234 = vmatpush.bf16.msra.mxu0 %v1175
        %1235 = vmatpush.bf16.msra.mxu0 %v1172
        %1236 = vmatpush.bf16.msra.mxu0 %v1169
        %1237 = vmatpush.bf16.msra.mxu0 %v1166
        %1238 = vmatpush.bf16.msra.mxu0 %v1163
        %1239 = vmatpush.bf16.msra.mxu0 %v1160
        %1240 = vmatpush.bf16.msra.mxu0 %v1157
        %1241 = vmatmul.bf16.gmra.mxu0 %v1040
        %v1242 = vpop.f32.mrf.mxu0
        %v1243 = vadd.f32 0.0, %v1242
        %v1244 = vpop.f32.mrf.mxu0
        %v1245 = vadd.f32 0.0, %v1244
        %1246 = vmatmul.bf16.gmra.mxu0 %v1041
        %v1247 = vpop.f32.mrf.mxu0
        %v1248 = vadd.f32 0.0, %v1247
        %v1249 = vpop.f32.mrf.mxu0
        %v1250 = vadd.f32 0.0, %v1249
        %1251 = vmatmul.bf16.gmra.mxu0 %v1042
        %v1252 = vpop.f32.mrf.mxu0
        %v1253 = vadd.f32 0.0, %v1252
        %v1254 = vpop.f32.mrf.mxu0
        %v1255 = vadd.f32 0.0, %v1254
        %1256 = vmatmul.bf16.gmra.mxu0 %v1043
        %v1257 = vpop.f32.mrf.mxu0
        %v1258 = vadd.f32 0.0, %v1257
        %v1259 = vpop.f32.mrf.mxu0
        %v1260 = vadd.f32 0.0, %v1259
        %1261 = vdwg.mxu0
        %1262 = vmatpush.bf16.msra.mxu0 %v1179
        %1263 = vmatpush.bf16.msra.mxu0 %v1176
        %1264 = vmatpush.bf16.msra.mxu0 %v1173
        %1265 = vmatpush.bf16.msra.mxu0 %v1170
        %1266 = vmatpush.bf16.msra.mxu0 %v1167
        %1267 = vmatpush.bf16.msra.mxu0 %v1164
        %1268 = vmatpush.bf16.msra.mxu0 %v1161
        %1269 = vmatpush.bf16.msra.mxu0 %v1158
        %1270 = vmatmul.bf16.gmra.mxu0 %v1040
        %v1271 = vpop.f32.mrf.mxu0
        %v1272 = vadd.f32 0.0, %v1271
        %v1273 = vpop.f32.mrf.mxu0
        %v1274 = vadd.f32 0.0, %v1273
        %1275 = vmatmul.bf16.gmra.mxu0 %v1041
        %v1276 = vpop.f32.mrf.mxu0
        %v1277 = vadd.f32 0.0, %v1276
        %v1278 = vpop.f32.mrf.mxu0
        %v1279 = vadd.f32 0.0, %v1278
        %1280 = vmatmul.bf16.gmra.mxu0 %v1042
        %v1281 = vpop.f32.mrf.mxu0
        %v1282 = vadd.f32 0.0, %v1281
        %v1283 = vpop.f32.mrf.mxu0
        %v1284 = vadd.f32 0.0, %v1283
        %1285 = vmatmul.bf16.gmra.mxu0 %v1043
        %v1286 = vpop.f32.mrf.mxu0
        %v1287 = vadd.f32 0.0, %v1286
        %v1288 = vpop.f32.mrf.mxu0
        %v1289 = vadd.f32 0.0, %v1288
        %1290 = vdwg.mxu0
        %v1291 = vpack.c.bf16 %v1214, %v1214
        %v1292 = vpack.c.bf16 %v1216, %v1216
        %v1293 = vpack.c.bf16 %v1219, %v1219
        %v1294 = vpack.c.bf16 %v1221, %v1221
        %v1295 = vpack.c.bf16 %v1224, %v1224
        %v1296 = vpack.c.bf16 %v1226, %v1226
        %v1297 = vpack.c.bf16 %v1229, %v1229
        %v1298 = vpack.c.bf16 %v1231, %v1231
        %v1299 = vpack.c.bf16 %v1243, %v1243
        %v1300 = vpack.c.bf16 %v1245, %v1245
        %v1301 = vpack.c.bf16 %v1248, %v1248
        %v1302 = vpack.c.bf16 %v1250, %v1250
        %v1303 = vpack.c.bf16 %v1253, %v1253
        %v1304 = vpack.c.bf16 %v1255, %v1255
        %v1305 = vpack.c.bf16 %v1258, %v1258
        %v1306 = vpack.c.bf16 %v1260, %v1260
        %v1307 = vpack.c.bf16 %v1272, %v1272
        %v1308 = vpack.c.bf16 %v1274, %v1274
        %v1309 = vpack.c.bf16 %v1277, %v1277
        %v1310 = vpack.c.bf16 %v1279, %v1279
        %v1311 = vpack.c.bf16 %v1282, %v1282
        %v1312 = vpack.c.bf16 %v1284, %v1284
        %v1313 = vpack.c.bf16 %v1287, %v1287
        %v1314 = vpack.c.bf16 %v1289, %v1289
        %1323 = vrot.lane.b32.xlu0 %v1291, 64
        %v1324 = vpop.permute.xlu0 %1323
        %1325 = vrot.lane.b32.xlu0 %v1292, 64
        %v1326 = vpop.permute.xlu0 %1325
        %1327 = vrot.lane.b32.xlu0 %v1293, 64
        %v1328 = vpop.permute.xlu0 %1327
        %1329 = vrot.lane.b32.xlu0 %v1294, 64
        %v1330 = vpop.permute.xlu0 %1329
        %1331 = vrot.lane.b32.xlu0 %v1295, 64
        %v1332 = vpop.permute.xlu0 %1331
        %1333 = vrot.lane.b32.xlu0 %v1296, 64
        %v1334 = vpop.permute.xlu0 %1333
        %1335 = vrot.lane.b32.xlu0 %v1297, 64
        %v1336 = vpop.permute.xlu0 %1335
        %1337 = vrot.lane.b32.xlu0 %v1298, 64
        %v1338 = vpop.permute.xlu0 %1337
        %v1341 = vpack.i.b16 %v1324, %v1291
        %v1342 = vshrl.u32 %v1291, 16
        %v1343 = vshrl.u32 %v1324, 16
        %v1344 = vpack.i.b16 %v1343, %v1342
        %v1347 = vpack.i.b16 %v1326, %v1292
        %v1348 = vshrl.u32 %v1292, 16
        %v1349 = vshrl.u32 %v1326, 16
        %v1350 = vpack.i.b16 %v1349, %v1348
        %v1353 = vpack.i.b16 %v1328, %v1293
        %v1354 = vshrl.u32 %v1293, 16
        %v1355 = vshrl.u32 %v1328, 16
        %v1356 = vpack.i.b16 %v1355, %v1354
        %v1359 = vpack.i.b16 %v1330, %v1294
        %v1360 = vshrl.u32 %v1294, 16
        %v1361 = vshrl.u32 %v1330, 16
        %v1362 = vpack.i.b16 %v1361, %v1360
        %v1365 = vpack.i.b16 %v1332, %v1295
        %v1366 = vshrl.u32 %v1295, 16
        %v1367 = vshrl.u32 %v1332, 16
        %v1368 = vpack.i.b16 %v1367, %v1366
        %v1371 = vpack.i.b16 %v1334, %v1296
        %v1372 = vshrl.u32 %v1296, 16
        %v1373 = vshrl.u32 %v1334, 16
        %v1374 = vpack.i.b16 %v1373, %v1372
        %v1377 = vpack.i.b16 %v1336, %v1297
        %v1378 = vshrl.u32 %v1297, 16
        %v1379 = vshrl.u32 %v1336, 16
        %v1380 = vpack.i.b16 %v1379, %v1378
        %v1383 = vpack.i.b16 %v1338, %v1298
        %v1384 = vshrl.u32 %v1298, 16
        %v1385 = vshrl.u32 %v1338, 16
        %v1386 = vpack.i.b16 %v1385, %v1384
        %v1389 = vunpack.c.l.s4 1983009808
        %v1390 = vunpack.c.0.s8 %v1389
        %v1391 = vperm.slane %v1341, %v1390
        %v1392 = vrot.slane %v1391, 4
        %vm1393 = vcmask 1047556
        %v1394 = vsel %vm1393, 0, %v1392
        %v1396 = vunpack.c.l.s4 1934713408
        %v1397 = vunpack.c.0.s8 %v1396
        %v1398 = vperm.slane %v1391, %v1397
        %v1400 = vunpack.c.l.s4 1934713408
        %v1401 = vunpack.c.0.s8 %v1400
        %v1402 = vperm.slane %v1394, %v1401
        %v1403 = vrot.slane %v1398, 4
        %v1404 = vsel %vm1393, 0, %v1403
        %v1405 = vrot.slane %v1402, 4
        %v1406 = vsel %vm1393, 0, %v1405
        %v1409 = vunpack.c.l.s4 1983009808
        %v1410 = vunpack.c.0.s8 %v1409
        %v1411 = vperm.slane %v1344, %v1410
        %v1412 = vrot.slane %v1411, 4
        %v1413 = vsel %vm1393, 0, %v1412
        %v1415 = vunpack.c.l.s4 1934713408
        %v1416 = vunpack.c.0.s8 %v1415
        %v1417 = vperm.slane %v1411, %v1416
        %v1419 = vunpack.c.l.s4 1934713408
        %v1420 = vunpack.c.0.s8 %v1419
        %v1421 = vperm.slane %v1413, %v1420
        %v1422 = vrot.slane %v1417, 4
        %v1423 = vsel %vm1393, 0, %v1422
        %v1424 = vrot.slane %v1421, 4
        %v1425 = vsel %vm1393, 0, %v1424
        %v1428 = vunpack.c.l.s4 1983009808
        %v1429 = vunpack.c.0.s8 %v1428
        %v1430 = vperm.slane %v1347, %v1429
        %v1431 = vrot.slane %v1430, 4
        %v1432 = vsel %vm1393, 0, %v1431
        %v1434 = vunpack.c.l.s4 1934713408
        %v1435 = vunpack.c.0.s8 %v1434
        %v1436 = vperm.slane %v1430, %v1435
        %v1438 = vunpack.c.l.s4 1934713408
        %v1439 = vunpack.c.0.s8 %v1438
        %v1440 = vperm.slane %v1432, %v1439
        %v1441 = vrot.slane %v1436, 4
        %v1442 = vsel %vm1393, 0, %v1441
        %v1443 = vrot.slane %v1440, 4
        %v1444 = vsel %vm1393, 0, %v1443
        %v1447 = vunpack.c.l.s4 1983009808
        %v1448 = vunpack.c.0.s8 %v1447
        %v1449 = vperm.slane %v1350, %v1448
        %v1450 = vrot.slane %v1449, 4
        %v1451 = vsel %vm1393, 0, %v1450
        %v1453 = vunpack.c.l.s4 1934713408
        %v1454 = vunpack.c.0.s8 %v1453
        %v1455 = vperm.slane %v1449, %v1454
        %v1457 = vunpack.c.l.s4 1934713408
        %v1458 = vunpack.c.0.s8 %v1457
        %v1459 = vperm.slane %v1451, %v1458
        %v1460 = vrot.slane %v1455, 4
        %v1461 = vsel %vm1393, 0, %v1460
        %v1462 = vrot.slane %v1459, 4
        %v1463 = vsel %vm1393, 0, %v1462
        %v1466 = vunpack.c.l.s4 1983009808
        %v1467 = vunpack.c.0.s8 %v1466
        %v1468 = vperm.slane %v1353, %v1467
        %v1469 = vrot.slane %v1468, 4
        %v1470 = vsel %vm1393, 0, %v1469
        %v1472 = vunpack.c.l.s4 1934713408
        %v1473 = vunpack.c.0.s8 %v1472
        %v1474 = vperm.slane %v1468, %v1473
        %v1476 = vunpack.c.l.s4 1934713408
        %v1477 = vunpack.c.0.s8 %v1476
        %v1478 = vperm.slane %v1470, %v1477
        %v1479 = vrot.slane %v1474, 4
        %v1480 = vsel %vm1393, 0, %v1479
        %v1481 = vrot.slane %v1478, 4
        %v1482 = vsel %vm1393, 0, %v1481
        %v1485 = vunpack.c.l.s4 1983009808
        %v1486 = vunpack.c.0.s8 %v1485
        %v1487 = vperm.slane %v1356, %v1486
        %v1488 = vrot.slane %v1487, 4
        %v1489 = vsel %vm1393, 0, %v1488
        %v1491 = vunpack.c.l.s4 1934713408
        %v1492 = vunpack.c.0.s8 %v1491
        %v1493 = vperm.slane %v1487, %v1492
        %v1495 = vunpack.c.l.s4 1934713408
        %v1496 = vunpack.c.0.s8 %v1495
        %v1497 = vperm.slane %v1489, %v1496
        %v1498 = vrot.slane %v1493, 4
        %v1499 = vsel %vm1393, 0, %v1498
        %v1500 = vrot.slane %v1497, 4
        %v1501 = vsel %vm1393, 0, %v1500
        %v1504 = vunpack.c.l.s4 1983009808
        %v1505 = vunpack.c.0.s8 %v1504
        %v1506 = vperm.slane %v1359, %v1505
        %v1507 = vrot.slane %v1506, 4
        %v1508 = vsel %vm1393, 0, %v1507
        %v1510 = vunpack.c.l.s4 1934713408
        %v1511 = vunpack.c.0.s8 %v1510
        %v1512 = vperm.slane %v1506, %v1511
        %v1514 = vunpack.c.l.s4 1934713408
        %v1515 = vunpack.c.0.s8 %v1514
        %v1516 = vperm.slane %v1508, %v1515
        %v1517 = vrot.slane %v1512, 4
        %v1518 = vsel %vm1393, 0, %v1517
        %v1519 = vrot.slane %v1516, 4
        %v1520 = vsel %vm1393, 0, %v1519
        %v1523 = vunpack.c.l.s4 1983009808
        %v1524 = vunpack.c.0.s8 %v1523
        %v1525 = vperm.slane %v1362, %v1524
        %v1526 = vrot.slane %v1525, 4
        %v1527 = vsel %vm1393, 0, %v1526
        %v1529 = vunpack.c.l.s4 1934713408
        %v1530 = vunpack.c.0.s8 %v1529
        %v1531 = vperm.slane %v1525, %v1530
        %v1533 = vunpack.c.l.s4 1934713408
        %v1534 = vunpack.c.0.s8 %v1533
        %v1535 = vperm.slane %v1527, %v1534
        %v1536 = vrot.slane %v1531, 4
        %v1537 = vsel %vm1393, 0, %v1536
        %v1538 = vrot.slane %v1535, 4
        %v1539 = vsel %vm1393, 0, %v1538
        %v1542 = vunpack.c.l.s4 1983009808
        %v1543 = vunpack.c.0.s8 %v1542
        %v1544 = vperm.slane %v1365, %v1543
        %v1545 = vrot.slane %v1544, 4
        %v1546 = vsel %vm1393, 0, %v1545
        %v1548 = vunpack.c.l.s4 1934713408
        %v1549 = vunpack.c.0.s8 %v1548
        %v1550 = vperm.slane %v1544, %v1549
        %v1552 = vunpack.c.l.s4 1934713408
        %v1553 = vunpack.c.0.s8 %v1552
        %v1554 = vperm.slane %v1546, %v1553
        %v1555 = vrot.slane %v1550, 4
        %v1556 = vsel %vm1393, 0, %v1555
        %v1557 = vrot.slane %v1554, 4
        %v1558 = vsel %vm1393, 0, %v1557
        %v1561 = vunpack.c.l.s4 1983009808
        %v1562 = vunpack.c.0.s8 %v1561
        %v1563 = vperm.slane %v1368, %v1562
        %v1564 = vrot.slane %v1563, 4
        %v1565 = vsel %vm1393, 0, %v1564
        %v1567 = vunpack.c.l.s4 1934713408
        %v1568 = vunpack.c.0.s8 %v1567
        %v1569 = vperm.slane %v1563, %v1568
        %v1571 = vunpack.c.l.s4 1934713408
        %v1572 = vunpack.c.0.s8 %v1571
        %v1573 = vperm.slane %v1565, %v1572
        %v1574 = vrot.slane %v1569, 4
        %v1575 = vsel %vm1393, 0, %v1574
        %v1576 = vrot.slane %v1573, 4
        %v1577 = vsel %vm1393, 0, %v1576
        %v1580 = vunpack.c.l.s4 1983009808
        %v1581 = vunpack.c.0.s8 %v1580
        %v1582 = vperm.slane %v1371, %v1581
        %v1583 = vrot.slane %v1582, 4
        %v1584 = vsel %vm1393, 0, %v1583
        %v1586 = vunpack.c.l.s4 1934713408
        %v1587 = vunpack.c.0.s8 %v1586
        %v1588 = vperm.slane %v1582, %v1587
        %v1590 = vunpack.c.l.s4 1934713408
        %v1591 = vunpack.c.0.s8 %v1590
        %v1592 = vperm.slane %v1584, %v1591
        %v1593 = vrot.slane %v1588, 4
        %v1594 = vsel %vm1393, 0, %v1593
        %v1595 = vrot.slane %v1592, 4
        %v1596 = vsel %vm1393, 0, %v1595
        %v1599 = vunpack.c.l.s4 1983009808
        %v1600 = vunpack.c.0.s8 %v1599
        %v1601 = vperm.slane %v1374, %v1600
        %v1602 = vrot.slane %v1601, 4
        %v1603 = vsel %vm1393, 0, %v1602
        %v1605 = vunpack.c.l.s4 1934713408
        %v1606 = vunpack.c.0.s8 %v1605
        %v1607 = vperm.slane %v1601, %v1606
        %v1609 = vunpack.c.l.s4 1934713408
        %v1610 = vunpack.c.0.s8 %v1609
        %v1611 = vperm.slane %v1603, %v1610
        %v1612 = vrot.slane %v1607, 4
        %v1613 = vsel %vm1393, 0, %v1612
        %v1614 = vrot.slane %v1611, 4
        %v1615 = vsel %vm1393, 0, %v1614
        %v1618 = vunpack.c.l.s4 1983009808
        %v1619 = vunpack.c.0.s8 %v1618
        %v1620 = vperm.slane %v1377, %v1619
        %v1621 = vrot.slane %v1620, 4
        %v1622 = vsel %vm1393, 0, %v1621
        %v1624 = vunpack.c.l.s4 1934713408
        %v1625 = vunpack.c.0.s8 %v1624
        %v1626 = vperm.slane %v1620, %v1625
        %v1628 = vunpack.c.l.s4 1934713408
        %v1629 = vunpack.c.0.s8 %v1628
        %v1630 = vperm.slane %v1622, %v1629
        %v1631 = vrot.slane %v1626, 4
        %v1632 = vsel %vm1393, 0, %v1631
        %v1633 = vrot.slane %v1630, 4
        %v1634 = vsel %vm1393, 0, %v1633
        %v1637 = vunpack.c.l.s4 1983009808
        %v1638 = vunpack.c.0.s8 %v1637
        %v1639 = vperm.slane %v1380, %v1638
        %v1640 = vrot.slane %v1639, 4
        %v1641 = vsel %vm1393, 0, %v1640
        %v1643 = vunpack.c.l.s4 1934713408
        %v1644 = vunpack.c.0.s8 %v1643
        %v1645 = vperm.slane %v1639, %v1644
        %v1647 = vunpack.c.l.s4 1934713408
        %v1648 = vunpack.c.0.s8 %v1647
        %v1649 = vperm.slane %v1641, %v1648
        %v1650 = vrot.slane %v1645, 4
        %v1651 = vsel %vm1393, 0, %v1650
        %v1652 = vrot.slane %v1649, 4
        %v1653 = vsel %vm1393, 0, %v1652
        %v1656 = vunpack.c.l.s4 1983009808
        %v1657 = vunpack.c.0.s8 %v1656
        %v1658 = vperm.slane %v1383, %v1657
        %v1659 = vrot.slane %v1658, 4
        %v1660 = vsel %vm1393, 0, %v1659
        %v1662 = vunpack.c.l.s4 1934713408
        %v1663 = vunpack.c.0.s8 %v1662
        %v1664 = vperm.slane %v1658, %v1663
        %v1666 = vunpack.c.l.s4 1934713408
        %v1667 = vunpack.c.0.s8 %v1666
        %v1668 = vperm.slane %v1660, %v1667
        %v1669 = vrot.slane %v1664, 4
        %v1670 = vsel %vm1393, 0, %v1669
        %v1671 = vrot.slane %v1668, 4
        %v1672 = vsel %vm1393, 0, %v1671
        %v1675 = vunpack.c.l.s4 1983009808
        %v1676 = vunpack.c.0.s8 %v1675
        %v1677 = vperm.slane %v1386, %v1676
        %v1678 = vrot.slane %v1677, 4
        %v1679 = vsel %vm1393, 0, %v1678
        %v1681 = vunpack.c.l.s4 1934713408
        %v1682 = vunpack.c.0.s8 %v1681
        %v1683 = vperm.slane %v1677, %v1682
        %v1685 = vunpack.c.l.s4 1934713408
        %v1686 = vunpack.c.0.s8 %v1685
        %v1687 = vperm.slane %v1679, %v1686
        %v1688 = vrot.slane %v1683, 4
        %v1689 = vsel %vm1393, 0, %v1688
        %v1690 = vrot.slane %v1687, 4
        %v1691 = vsel %vm1393, 0, %v1690
        %v1692 = vsel %vm1393, %v1405, %v1398
        %v1694 = vunpack.c.l.s4 1983009808
        %v1695 = vunpack.c.0.s8 %v1694
        %v1696 = vperm.slane %v1692, %v1695
        %v1697 = vrot.slane %v1406, 4
        %v1698 = vsel %vm1393, %v1697, %v1404
        %v1700 = vunpack.c.l.s4 1983009808
        %v1701 = vunpack.c.0.s8 %v1700
        %v1702 = vperm.slane %v1698, %v1701
        %v1703 = vrot.slane %v1702, 4
        %v1704 = vsel %vm1393, %v1703, %v1696
        %v1706 = vunpack.c.l.s4 1934713408
        %v1707 = vunpack.c.0.s8 %v1706
        %v1708 = vperm.slane %v1704, %v1707
        %v1709 = vsel %vm1393, %v1424, %v1417
        %v1711 = vunpack.c.l.s4 1983009808
        %v1712 = vunpack.c.0.s8 %v1711
        %v1713 = vperm.slane %v1709, %v1712
        %v1714 = vrot.slane %v1425, 4
        %v1715 = vsel %vm1393, %v1714, %v1423
        %v1717 = vunpack.c.l.s4 1983009808
        %v1718 = vunpack.c.0.s8 %v1717
        %v1719 = vperm.slane %v1715, %v1718
        %v1720 = vrot.slane %v1719, 4
        %v1721 = vsel %vm1393, %v1720, %v1713
        %v1723 = vunpack.c.l.s4 1934713408
        %v1724 = vunpack.c.0.s8 %v1723
        %v1725 = vperm.slane %v1721, %v1724
        %v1726 = vsel %vm1393, %v1443, %v1436
        %v1728 = vunpack.c.l.s4 1983009808
        %v1729 = vunpack.c.0.s8 %v1728
        %v1730 = vperm.slane %v1726, %v1729
        %v1731 = vrot.slane %v1444, 4
        %v1732 = vsel %vm1393, %v1731, %v1442
        %v1734 = vunpack.c.l.s4 1983009808
        %v1735 = vunpack.c.0.s8 %v1734
        %v1736 = vperm.slane %v1732, %v1735
        %v1737 = vrot.slane %v1736, 4
        %v1738 = vsel %vm1393, %v1737, %v1730
        %v1740 = vunpack.c.l.s4 1934713408
        %v1741 = vunpack.c.0.s8 %v1740
        %v1742 = vperm.slane %v1738, %v1741
        %v1743 = vsel %vm1393, %v1462, %v1455
        %v1745 = vunpack.c.l.s4 1983009808
        %v1746 = vunpack.c.0.s8 %v1745
        %v1747 = vperm.slane %v1743, %v1746
        %v1748 = vrot.slane %v1463, 4
        %v1749 = vsel %vm1393, %v1748, %v1461
        %v1751 = vunpack.c.l.s4 1983009808
        %v1752 = vunpack.c.0.s8 %v1751
        %v1753 = vperm.slane %v1749, %v1752
        %v1754 = vrot.slane %v1753, 4
        %v1755 = vsel %vm1393, %v1754, %v1747
        %v1757 = vunpack.c.l.s4 1934713408
        %v1758 = vunpack.c.0.s8 %v1757
        %v1759 = vperm.slane %v1755, %v1758
        %v1760 = vsel %vm1393, %v1481, %v1474
        %v1762 = vunpack.c.l.s4 1983009808
        %v1763 = vunpack.c.0.s8 %v1762
        %v1764 = vperm.slane %v1760, %v1763
        %v1765 = vrot.slane %v1482, 4
        %v1766 = vsel %vm1393, %v1765, %v1480
        %v1768 = vunpack.c.l.s4 1983009808
        %v1769 = vunpack.c.0.s8 %v1768
        %v1770 = vperm.slane %v1766, %v1769
        %v1771 = vrot.slane %v1770, 4
        %v1772 = vsel %vm1393, %v1771, %v1764
        %v1774 = vunpack.c.l.s4 1934713408
        %v1775 = vunpack.c.0.s8 %v1774
        %v1776 = vperm.slane %v1772, %v1775
        %v1777 = vsel %vm1393, %v1500, %v1493
        %v1779 = vunpack.c.l.s4 1983009808
        %v1780 = vunpack.c.0.s8 %v1779
        %v1781 = vperm.slane %v1777, %v1780
        %v1782 = vrot.slane %v1501, 4
        %v1783 = vsel %vm1393, %v1782, %v1499
        %v1785 = vunpack.c.l.s4 1983009808
        %v1786 = vunpack.c.0.s8 %v1785
        %v1787 = vperm.slane %v1783, %v1786
        %v1788 = vrot.slane %v1787, 4
        %v1789 = vsel %vm1393, %v1788, %v1781
        %v1791 = vunpack.c.l.s4 1934713408
        %v1792 = vunpack.c.0.s8 %v1791
        %v1793 = vperm.slane %v1789, %v1792
        %v1794 = vsel %vm1393, %v1519, %v1512
        %v1796 = vunpack.c.l.s4 1983009808
        %v1797 = vunpack.c.0.s8 %v1796
        %v1798 = vperm.slane %v1794, %v1797
        %v1799 = vrot.slane %v1520, 4
        %v1800 = vsel %vm1393, %v1799, %v1518
        %v1802 = vunpack.c.l.s4 1983009808
        %v1803 = vunpack.c.0.s8 %v1802
        %v1804 = vperm.slane %v1800, %v1803
        %v1805 = vrot.slane %v1804, 4
        %v1806 = vsel %vm1393, %v1805, %v1798
        %v1808 = vunpack.c.l.s4 1934713408
        %v1809 = vunpack.c.0.s8 %v1808
        %v1810 = vperm.slane %v1806, %v1809
        %v1811 = vsel %vm1393, %v1538, %v1531
        %v1813 = vunpack.c.l.s4 1983009808
        %v1814 = vunpack.c.0.s8 %v1813
        %v1815 = vperm.slane %v1811, %v1814
        %v1816 = vrot.slane %v1539, 4
        %v1817 = vsel %vm1393, %v1816, %v1537
        %v1819 = vunpack.c.l.s4 1983009808
        %v1820 = vunpack.c.0.s8 %v1819
        %v1821 = vperm.slane %v1817, %v1820
        %v1822 = vrot.slane %v1821, 4
        %v1823 = vsel %vm1393, %v1822, %v1815
        %v1825 = vunpack.c.l.s4 1934713408
        %v1826 = vunpack.c.0.s8 %v1825
        %v1827 = vperm.slane %v1823, %v1826
        %v1828 = vsel %vm1393, %v1557, %v1550
        %v1830 = vunpack.c.l.s4 1983009808
        %v1831 = vunpack.c.0.s8 %v1830
        %v1832 = vperm.slane %v1828, %v1831
        %v1833 = vrot.slane %v1558, 4
        %v1834 = vsel %vm1393, %v1833, %v1556
        %v1836 = vunpack.c.l.s4 1983009808
        %v1837 = vunpack.c.0.s8 %v1836
        %v1838 = vperm.slane %v1834, %v1837
        %v1839 = vrot.slane %v1838, 4
        %v1840 = vsel %vm1393, %v1839, %v1832
        %v1842 = vunpack.c.l.s4 1934713408
        %v1843 = vunpack.c.0.s8 %v1842
        %v1844 = vperm.slane %v1840, %v1843
        %v1845 = vsel %vm1393, %v1576, %v1569
        %v1847 = vunpack.c.l.s4 1983009808
        %v1848 = vunpack.c.0.s8 %v1847
        %v1849 = vperm.slane %v1845, %v1848
        %v1850 = vrot.slane %v1577, 4
        %v1851 = vsel %vm1393, %v1850, %v1575
        %v1853 = vunpack.c.l.s4 1983009808
        %v1854 = vunpack.c.0.s8 %v1853
        %v1855 = vperm.slane %v1851, %v1854
        %v1856 = vrot.slane %v1855, 4
        %v1857 = vsel %vm1393, %v1856, %v1849
        %v1859 = vunpack.c.l.s4 1934713408
        %v1860 = vunpack.c.0.s8 %v1859
        %v1861 = vperm.slane %v1857, %v1860
        %v1862 = vsel %vm1393, %v1595, %v1588
        %v1864 = vunpack.c.l.s4 1983009808
        %v1865 = vunpack.c.0.s8 %v1864
        %v1866 = vperm.slane %v1862, %v1865
        %v1867 = vrot.slane %v1596, 4
        %v1868 = vsel %vm1393, %v1867, %v1594
        %v1870 = vunpack.c.l.s4 1983009808
        %v1871 = vunpack.c.0.s8 %v1870
        %v1872 = vperm.slane %v1868, %v1871
        %v1873 = vrot.slane %v1872, 4
        %v1874 = vsel %vm1393, %v1873, %v1866
        %v1876 = vunpack.c.l.s4 1934713408
        %v1877 = vunpack.c.0.s8 %v1876
        %v1878 = vperm.slane %v1874, %v1877
        %v1879 = vsel %vm1393, %v1614, %v1607
        %v1881 = vunpack.c.l.s4 1983009808
        %v1882 = vunpack.c.0.s8 %v1881
        %v1883 = vperm.slane %v1879, %v1882
        %v1884 = vrot.slane %v1615, 4
        %v1885 = vsel %vm1393, %v1884, %v1613
        %v1887 = vunpack.c.l.s4 1983009808
        %v1888 = vunpack.c.0.s8 %v1887
        %v1889 = vperm.slane %v1885, %v1888
        %v1890 = vrot.slane %v1889, 4
        %v1891 = vsel %vm1393, %v1890, %v1883
        %v1893 = vunpack.c.l.s4 1934713408
        %v1894 = vunpack.c.0.s8 %v1893
        %v1895 = vperm.slane %v1891, %v1894
        %v1896 = vsel %vm1393, %v1633, %v1626
        %v1898 = vunpack.c.l.s4 1983009808
        %v1899 = vunpack.c.0.s8 %v1898
        %v1900 = vperm.slane %v1896, %v1899
        %v1901 = vrot.slane %v1634, 4
        %v1902 = vsel %vm1393, %v1901, %v1632
        %v1904 = vunpack.c.l.s4 1983009808
        %v1905 = vunpack.c.0.s8 %v1904
        %v1906 = vperm.slane %v1902, %v1905
        %v1907 = vrot.slane %v1906, 4
        %v1908 = vsel %vm1393, %v1907, %v1900
        %v1910 = vunpack.c.l.s4 1934713408
        %v1911 = vunpack.c.0.s8 %v1910
        %v1912 = vperm.slane %v1908, %v1911
        %v1913 = vsel %vm1393, %v1652, %v1645
        %v1915 = vunpack.c.l.s4 1983009808
        %v1916 = vunpack.c.0.s8 %v1915
        %v1917 = vperm.slane %v1913, %v1916
        %v1918 = vrot.slane %v1653, 4
        %v1919 = vsel %vm1393, %v1918, %v1651
        %v1921 = vunpack.c.l.s4 1983009808
        %v1922 = vunpack.c.0.s8 %v1921
        %v1923 = vperm.slane %v1919, %v1922
        %v1924 = vrot.slane %v1923, 4
        %v1925 = vsel %vm1393, %v1924, %v1917
        %v1927 = vunpack.c.l.s4 1934713408
        %v1928 = vunpack.c.0.s8 %v1927
        %v1929 = vperm.slane %v1925, %v1928
        %v1930 = vsel %vm1393, %v1671, %v1664
        %v1932 = vunpack.c.l.s4 1983009808
        %v1933 = vunpack.c.0.s8 %v1932
        %v1934 = vperm.slane %v1930, %v1933
        %v1935 = vrot.slane %v1672, 4
        %v1936 = vsel %vm1393, %v1935, %v1670
        %v1938 = vunpack.c.l.s4 1983009808
        %v1939 = vunpack.c.0.s8 %v1938
        %v1940 = vperm.slane %v1936, %v1939
        %v1941 = vrot.slane %v1940, 4
        %v1942 = vsel %vm1393, %v1941, %v1934
        %v1944 = vunpack.c.l.s4 1934713408
        %v1945 = vunpack.c.0.s8 %v1944
        %v1946 = vperm.slane %v1942, %v1945
        %v1947 = vsel %vm1393, %v1690, %v1683
        %v1949 = vunpack.c.l.s4 1983009808
        %v1950 = vunpack.c.0.s8 %v1949
        %v1951 = vperm.slane %v1947, %v1950
        %v1952 = vrot.slane %v1691, 4
        %v1953 = vsel %vm1393, %v1952, %v1689
        %v1955 = vunpack.c.l.s4 1983009808
        %v1956 = vunpack.c.0.s8 %v1955
        %v1957 = vperm.slane %v1953, %v1956
        %v1958 = vrot.slane %v1957, 4
        %v1959 = vsel %vm1393, %v1958, %v1951
        %v1961 = vunpack.c.l.s4 1934713408
        %v1962 = vunpack.c.0.s8 %v1961
        %v1963 = vperm.slane %v1959, %v1962
        %v1966 = vpack.i.b16 %v1725, %v1708
        %v1967 = vshrl.u32 %v1708, 16
        %v1968 = vshrl.u32 %v1725, 16
        %v1969 = vpack.i.b16 %v1968, %v1967
        %v1972 = vpack.i.b16 %v1759, %v1742
        %v1973 = vshrl.u32 %v1742, 16
        %v1974 = vshrl.u32 %v1759, 16
        %v1975 = vpack.i.b16 %v1974, %v1973
        %v1978 = vpack.i.b16 %v1793, %v1776
        %v1979 = vshrl.u32 %v1776, 16
        %v1980 = vshrl.u32 %v1793, 16
        %v1981 = vpack.i.b16 %v1980, %v1979
        %v1984 = vpack.i.b16 %v1827, %v1810
        %v1985 = vshrl.u32 %v1810, 16
        %v1986 = vshrl.u32 %v1827, 16
        %v1987 = vpack.i.b16 %v1986, %v1985
        %v1990 = vpack.i.b16 %v1861, %v1844
        %v1991 = vshrl.u32 %v1844, 16
        %v1992 = vshrl.u32 %v1861, 16
        %v1993 = vpack.i.b16 %v1992, %v1991
        %v1996 = vpack.i.b16 %v1895, %v1878
        %v1997 = vshrl.u32 %v1878, 16
        %v1998 = vshrl.u32 %v1895, 16
        %v1999 = vpack.i.b16 %v1998, %v1997
        %v2002 = vpack.i.b16 %v1929, %v1912
        %v2003 = vshrl.u32 %v1912, 16
        %v2004 = vshrl.u32 %v1929, 16
        %v2005 = vpack.i.b16 %v2004, %v2003
        %v2008 = vpack.i.b16 %v1963, %v1946
        %v2009 = vshrl.u32 %v1946, 16
        %v2010 = vshrl.u32 %v1963, 16
        %v2011 = vpack.i.b16 %v2010, %v2009
        %2020 = vrot.lane.b32.xlu0 %v1299, 64
        %v2021 = vpop.permute.xlu0 %2020
        %2022 = vrot.lane.b32.xlu0 %v1300, 64
        %v2023 = vpop.permute.xlu0 %2022
        %2024 = vrot.lane.b32.xlu0 %v1301, 64
        %v2025 = vpop.permute.xlu0 %2024
        %2026 = vrot.lane.b32.xlu0 %v1302, 64
        %v2027 = vpop.permute.xlu0 %2026
        %2028 = vrot.lane.b32.xlu0 %v1303, 64
        %v2029 = vpop.permute.xlu0 %2028
        %2030 = vrot.lane.b32.xlu0 %v1304, 64
        %v2031 = vpop.permute.xlu0 %2030
        %2032 = vrot.lane.b32.xlu0 %v1305, 64
        %v2033 = vpop.permute.xlu0 %2032
        %2034 = vrot.lane.b32.xlu0 %v1306, 64
        %v2035 = vpop.permute.xlu0 %2034
        %v2038 = vpack.i.b16 %v2021, %v1299
        %v2039 = vshrl.u32 %v1299, 16
        %v2040 = vshrl.u32 %v2021, 16
        %v2041 = vpack.i.b16 %v2040, %v2039
        %v2044 = vpack.i.b16 %v2023, %v1300
        %v2045 = vshrl.u32 %v1300, 16
        %v2046 = vshrl.u32 %v2023, 16
        %v2047 = vpack.i.b16 %v2046, %v2045
        %v2050 = vpack.i.b16 %v2025, %v1301
        %v2051 = vshrl.u32 %v1301, 16
        %v2052 = vshrl.u32 %v2025, 16
        %v2053 = vpack.i.b16 %v2052, %v2051
        %v2056 = vpack.i.b16 %v2027, %v1302
        %v2057 = vshrl.u32 %v1302, 16
        %v2058 = vshrl.u32 %v2027, 16
        %v2059 = vpack.i.b16 %v2058, %v2057
        %v2062 = vpack.i.b16 %v2029, %v1303
        %v2063 = vshrl.u32 %v1303, 16
        %v2064 = vshrl.u32 %v2029, 16
        %v2065 = vpack.i.b16 %v2064, %v2063
        %v2068 = vpack.i.b16 %v2031, %v1304
        %v2069 = vshrl.u32 %v1304, 16
        %v2070 = vshrl.u32 %v2031, 16
        %v2071 = vpack.i.b16 %v2070, %v2069
        %v2074 = vpack.i.b16 %v2033, %v1305
        %v2075 = vshrl.u32 %v1305, 16
        %v2076 = vshrl.u32 %v2033, 16
        %v2077 = vpack.i.b16 %v2076, %v2075
        %v2080 = vpack.i.b16 %v2035, %v1306
        %v2081 = vshrl.u32 %v1306, 16
        %v2082 = vshrl.u32 %v2035, 16
        %v2083 = vpack.i.b16 %v2082, %v2081
        %v2086 = vunpack.c.l.s4 1983009808
        %v2087 = vunpack.c.0.s8 %v2086
        %v2088 = vperm.slane %v2038, %v2087
        %v2089 = vrot.slane %v2088, 4
        %v2090 = vsel %vm1393, 0, %v2089
        %v2092 = vunpack.c.l.s4 1934713408
        %v2093 = vunpack.c.0.s8 %v2092
        %v2094 = vperm.slane %v2088, %v2093
        %v2096 = vunpack.c.l.s4 1934713408
        %v2097 = vunpack.c.0.s8 %v2096
        %v2098 = vperm.slane %v2090, %v2097
        %v2099 = vrot.slane %v2094, 4
        %v2100 = vsel %vm1393, 0, %v2099
        %v2101 = vrot.slane %v2098, 4
        %v2102 = vsel %vm1393, 0, %v2101
        %v2105 = vunpack.c.l.s4 1983009808
        %v2106 = vunpack.c.0.s8 %v2105
        %v2107 = vperm.slane %v2041, %v2106
        %v2108 = vrot.slane %v2107, 4
        %v2109 = vsel %vm1393, 0, %v2108
        %v2111 = vunpack.c.l.s4 1934713408
        %v2112 = vunpack.c.0.s8 %v2111
        %v2113 = vperm.slane %v2107, %v2112
        %v2115 = vunpack.c.l.s4 1934713408
        %v2116 = vunpack.c.0.s8 %v2115
        %v2117 = vperm.slane %v2109, %v2116
        %v2118 = vrot.slane %v2113, 4
        %v2119 = vsel %vm1393, 0, %v2118
        %v2120 = vrot.slane %v2117, 4
        %v2121 = vsel %vm1393, 0, %v2120
        %v2124 = vunpack.c.l.s4 1983009808
        %v2125 = vunpack.c.0.s8 %v2124
        %v2126 = vperm.slane %v2044, %v2125
        %v2127 = vrot.slane %v2126, 4
        %v2128 = vsel %vm1393, 0, %v2127
        %v2130 = vunpack.c.l.s4 1934713408
        %v2131 = vunpack.c.0.s8 %v2130
        %v2132 = vperm.slane %v2126, %v2131
        %v2134 = vunpack.c.l.s4 1934713408
        %v2135 = vunpack.c.0.s8 %v2134
        %v2136 = vperm.slane %v2128, %v2135
        %v2137 = vrot.slane %v2132, 4
        %v2138 = vsel %vm1393, 0, %v2137
        %v2139 = vrot.slane %v2136, 4
        %v2140 = vsel %vm1393, 0, %v2139
        %v2143 = vunpack.c.l.s4 1983009808
        %v2144 = vunpack.c.0.s8 %v2143
        %v2145 = vperm.slane %v2047, %v2144
        %v2146 = vrot.slane %v2145, 4
        %v2147 = vsel %vm1393, 0, %v2146
        %v2149 = vunpack.c.l.s4 1934713408
        %v2150 = vunpack.c.0.s8 %v2149
        %v2151 = vperm.slane %v2145, %v2150
        %v2153 = vunpack.c.l.s4 1934713408
        %v2154 = vunpack.c.0.s8 %v2153
        %v2155 = vperm.slane %v2147, %v2154
        %v2156 = vrot.slane %v2151, 4
        %v2157 = vsel %vm1393, 0, %v2156
        %v2158 = vrot.slane %v2155, 4
        %v2159 = vsel %vm1393, 0, %v2158
        %v2162 = vunpack.c.l.s4 1983009808
        %v2163 = vunpack.c.0.s8 %v2162
        %v2164 = vperm.slane %v2050, %v2163
        %v2165 = vrot.slane %v2164, 4
        %v2166 = vsel %vm1393, 0, %v2165
        %v2168 = vunpack.c.l.s4 1934713408
        %v2169 = vunpack.c.0.s8 %v2168
        %v2170 = vperm.slane %v2164, %v2169
        %v2172 = vunpack.c.l.s4 1934713408
        %v2173 = vunpack.c.0.s8 %v2172
        %v2174 = vperm.slane %v2166, %v2173
        %v2175 = vrot.slane %v2170, 4
        %v2176 = vsel %vm1393, 0, %v2175
        %v2177 = vrot.slane %v2174, 4
        %v2178 = vsel %vm1393, 0, %v2177
        %v2181 = vunpack.c.l.s4 1983009808
        %v2182 = vunpack.c.0.s8 %v2181
        %v2183 = vperm.slane %v2053, %v2182
        %v2184 = vrot.slane %v2183, 4
        %v2185 = vsel %vm1393, 0, %v2184
        %v2187 = vunpack.c.l.s4 1934713408
        %v2188 = vunpack.c.0.s8 %v2187
        %v2189 = vperm.slane %v2183, %v2188
        %v2191 = vunpack.c.l.s4 1934713408
        %v2192 = vunpack.c.0.s8 %v2191
        %v2193 = vperm.slane %v2185, %v2192
        %v2194 = vrot.slane %v2189, 4
        %v2195 = vsel %vm1393, 0, %v2194
        %v2196 = vrot.slane %v2193, 4
        %v2197 = vsel %vm1393, 0, %v2196
        %v2200 = vunpack.c.l.s4 1983009808
        %v2201 = vunpack.c.0.s8 %v2200
        %v2202 = vperm.slane %v2056, %v2201
        %v2203 = vrot.slane %v2202, 4
        %v2204 = vsel %vm1393, 0, %v2203
        %v2206 = vunpack.c.l.s4 1934713408
        %v2207 = vunpack.c.0.s8 %v2206
        %v2208 = vperm.slane %v2202, %v2207
        %v2210 = vunpack.c.l.s4 1934713408
        %v2211 = vunpack.c.0.s8 %v2210
        %v2212 = vperm.slane %v2204, %v2211
        %v2213 = vrot.slane %v2208, 4
        %v2214 = vsel %vm1393, 0, %v2213
        %v2215 = vrot.slane %v2212, 4
        %v2216 = vsel %vm1393, 0, %v2215
        %v2219 = vunpack.c.l.s4 1983009808
        %v2220 = vunpack.c.0.s8 %v2219
        %v2221 = vperm.slane %v2059, %v2220
        %v2222 = vrot.slane %v2221, 4
        %v2223 = vsel %vm1393, 0, %v2222
        %v2225 = vunpack.c.l.s4 1934713408
        %v2226 = vunpack.c.0.s8 %v2225
        %v2227 = vperm.slane %v2221, %v2226
        %v2229 = vunpack.c.l.s4 1934713408
        %v2230 = vunpack.c.0.s8 %v2229
        %v2231 = vperm.slane %v2223, %v2230
        %v2232 = vrot.slane %v2227, 4
        %v2233 = vsel %vm1393, 0, %v2232
        %v2234 = vrot.slane %v2231, 4
        %v2235 = vsel %vm1393, 0, %v2234
        %v2238 = vunpack.c.l.s4 1983009808
        %v2239 = vunpack.c.0.s8 %v2238
        %v2240 = vperm.slane %v2062, %v2239
        %v2241 = vrot.slane %v2240, 4
        %v2242 = vsel %vm1393, 0, %v2241
        %v2244 = vunpack.c.l.s4 1934713408
        %v2245 = vunpack.c.0.s8 %v2244
        %v2246 = vperm.slane %v2240, %v2245
        %v2248 = vunpack.c.l.s4 1934713408
        %v2249 = vunpack.c.0.s8 %v2248
        %v2250 = vperm.slane %v2242, %v2249
        %v2251 = vrot.slane %v2246, 4
        %v2252 = vsel %vm1393, 0, %v2251
        %v2253 = vrot.slane %v2250, 4
        %v2254 = vsel %vm1393, 0, %v2253
        %v2257 = vunpack.c.l.s4 1983009808
        %v2258 = vunpack.c.0.s8 %v2257
        %v2259 = vperm.slane %v2065, %v2258
        %v2260 = vrot.slane %v2259, 4
        %v2261 = vsel %vm1393, 0, %v2260
        %v2263 = vunpack.c.l.s4 1934713408
        %v2264 = vunpack.c.0.s8 %v2263
        %v2265 = vperm.slane %v2259, %v2264
        %v2267 = vunpack.c.l.s4 1934713408
        %v2268 = vunpack.c.0.s8 %v2267
        %v2269 = vperm.slane %v2261, %v2268
        %v2270 = vrot.slane %v2265, 4
        %v2271 = vsel %vm1393, 0, %v2270
        %v2272 = vrot.slane %v2269, 4
        %v2273 = vsel %vm1393, 0, %v2272
        %v2276 = vunpack.c.l.s4 1983009808
        %v2277 = vunpack.c.0.s8 %v2276
        %v2278 = vperm.slane %v2068, %v2277
        %v2279 = vrot.slane %v2278, 4
        %v2280 = vsel %vm1393, 0, %v2279
        %v2282 = vunpack.c.l.s4 1934713408
        %v2283 = vunpack.c.0.s8 %v2282
        %v2284 = vperm.slane %v2278, %v2283
        %v2286 = vunpack.c.l.s4 1934713408
        %v2287 = vunpack.c.0.s8 %v2286
        %v2288 = vperm.slane %v2280, %v2287
        %v2289 = vrot.slane %v2284, 4
        %v2290 = vsel %vm1393, 0, %v2289
        %v2291 = vrot.slane %v2288, 4
        %v2292 = vsel %vm1393, 0, %v2291
        %v2295 = vunpack.c.l.s4 1983009808
        %v2296 = vunpack.c.0.s8 %v2295
        %v2297 = vperm.slane %v2071, %v2296
        %v2298 = vrot.slane %v2297, 4
        %v2299 = vsel %vm1393, 0, %v2298
        %v2301 = vunpack.c.l.s4 1934713408
        %v2302 = vunpack.c.0.s8 %v2301
        %v2303 = vperm.slane %v2297, %v2302
        %v2305 = vunpack.c.l.s4 1934713408
        %v2306 = vunpack.c.0.s8 %v2305
        %v2307 = vperm.slane %v2299, %v2306
        %v2308 = vrot.slane %v2303, 4
        %v2309 = vsel %vm1393, 0, %v2308
        %v2310 = vrot.slane %v2307, 4
        %v2311 = vsel %vm1393, 0, %v2310
        %v2314 = vunpack.c.l.s4 1983009808
        %v2315 = vunpack.c.0.s8 %v2314
        %v2316 = vperm.slane %v2074, %v2315
        %v2317 = vrot.slane %v2316, 4
        %v2318 = vsel %vm1393, 0, %v2317
        %v2320 = vunpack.c.l.s4 1934713408
        %v2321 = vunpack.c.0.s8 %v2320
        %v2322 = vperm.slane %v2316, %v2321
        %v2324 = vunpack.c.l.s4 1934713408
        %v2325 = vunpack.c.0.s8 %v2324
        %v2326 = vperm.slane %v2318, %v2325
        %v2327 = vrot.slane %v2322, 4
        %v2328 = vsel %vm1393, 0, %v2327
        %v2329 = vrot.slane %v2326, 4
        %v2330 = vsel %vm1393, 0, %v2329
        %v2333 = vunpack.c.l.s4 1983009808
        %v2334 = vunpack.c.0.s8 %v2333
        %v2335 = vperm.slane %v2077, %v2334
        %v2336 = vrot.slane %v2335, 4
        %v2337 = vsel %vm1393, 0, %v2336
        %v2339 = vunpack.c.l.s4 1934713408
        %v2340 = vunpack.c.0.s8 %v2339
        %v2341 = vperm.slane %v2335, %v2340
        %v2343 = vunpack.c.l.s4 1934713408
        %v2344 = vunpack.c.0.s8 %v2343
        %v2345 = vperm.slane %v2337, %v2344
        %v2346 = vrot.slane %v2341, 4
        %v2347 = vsel %vm1393, 0, %v2346
        %v2348 = vrot.slane %v2345, 4
        %v2349 = vsel %vm1393, 0, %v2348
        %v2352 = vunpack.c.l.s4 1983009808
        %v2353 = vunpack.c.0.s8 %v2352
        %v2354 = vperm.slane %v2080, %v2353
        %v2355 = vrot.slane %v2354, 4
        %v2356 = vsel %vm1393, 0, %v2355
        %v2358 = vunpack.c.l.s4 1934713408
        %v2359 = vunpack.c.0.s8 %v2358
        %v2360 = vperm.slane %v2354, %v2359
        %v2362 = vunpack.c.l.s4 1934713408
        %v2363 = vunpack.c.0.s8 %v2362
        %v2364 = vperm.slane %v2356, %v2363
        %v2365 = vrot.slane %v2360, 4
        %v2366 = vsel %vm1393, 0, %v2365
        %v2367 = vrot.slane %v2364, 4
        %v2368 = vsel %vm1393, 0, %v2367
        %v2371 = vunpack.c.l.s4 1983009808
        %v2372 = vunpack.c.0.s8 %v2371
        %v2373 = vperm.slane %v2083, %v2372
        %v2374 = vrot.slane %v2373, 4
        %v2375 = vsel %vm1393, 0, %v2374
        %v2377 = vunpack.c.l.s4 1934713408
        %v2378 = vunpack.c.0.s8 %v2377
        %v2379 = vperm.slane %v2373, %v2378
        %v2381 = vunpack.c.l.s4 1934713408
        %v2382 = vunpack.c.0.s8 %v2381
        %v2383 = vperm.slane %v2375, %v2382
        %v2384 = vrot.slane %v2379, 4
        %v2385 = vsel %vm1393, 0, %v2384
        %v2386 = vrot.slane %v2383, 4
        %v2387 = vsel %vm1393, 0, %v2386
        %v2388 = vsel %vm1393, %v2101, %v2094
        %v2390 = vunpack.c.l.s4 1983009808
        %v2391 = vunpack.c.0.s8 %v2390
        %v2392 = vperm.slane %v2388, %v2391
        %v2393 = vrot.slane %v2102, 4
        %v2394 = vsel %vm1393, %v2393, %v2100
        %v2396 = vunpack.c.l.s4 1983009808
        %v2397 = vunpack.c.0.s8 %v2396
        %v2398 = vperm.slane %v2394, %v2397
        %v2399 = vrot.slane %v2398, 4
        %v2400 = vsel %vm1393, %v2399, %v2392
        %v2402 = vunpack.c.l.s4 1934713408
        %v2403 = vunpack.c.0.s8 %v2402
        %v2404 = vperm.slane %v2400, %v2403
        %v2405 = vsel %vm1393, %v2120, %v2113
        %v2407 = vunpack.c.l.s4 1983009808
        %v2408 = vunpack.c.0.s8 %v2407
        %v2409 = vperm.slane %v2405, %v2408
        %v2410 = vrot.slane %v2121, 4
        %v2411 = vsel %vm1393, %v2410, %v2119
        %v2413 = vunpack.c.l.s4 1983009808
        %v2414 = vunpack.c.0.s8 %v2413
        %v2415 = vperm.slane %v2411, %v2414
        %v2416 = vrot.slane %v2415, 4
        %v2417 = vsel %vm1393, %v2416, %v2409
        %v2419 = vunpack.c.l.s4 1934713408
        %v2420 = vunpack.c.0.s8 %v2419
        %v2421 = vperm.slane %v2417, %v2420
        %v2422 = vsel %vm1393, %v2139, %v2132
        %v2424 = vunpack.c.l.s4 1983009808
        %v2425 = vunpack.c.0.s8 %v2424
        %v2426 = vperm.slane %v2422, %v2425
        %v2427 = vrot.slane %v2140, 4
        %v2428 = vsel %vm1393, %v2427, %v2138
        %v2430 = vunpack.c.l.s4 1983009808
        %v2431 = vunpack.c.0.s8 %v2430
        %v2432 = vperm.slane %v2428, %v2431
        %v2433 = vrot.slane %v2432, 4
        %v2434 = vsel %vm1393, %v2433, %v2426
        %v2436 = vunpack.c.l.s4 1934713408
        %v2437 = vunpack.c.0.s8 %v2436
        %v2438 = vperm.slane %v2434, %v2437
        %v2439 = vsel %vm1393, %v2158, %v2151
        %v2441 = vunpack.c.l.s4 1983009808
        %v2442 = vunpack.c.0.s8 %v2441
        %v2443 = vperm.slane %v2439, %v2442
        %v2444 = vrot.slane %v2159, 4
        %v2445 = vsel %vm1393, %v2444, %v2157
        %v2447 = vunpack.c.l.s4 1983009808
        %v2448 = vunpack.c.0.s8 %v2447
        %v2449 = vperm.slane %v2445, %v2448
        %v2450 = vrot.slane %v2449, 4
        %v2451 = vsel %vm1393, %v2450, %v2443
        %v2453 = vunpack.c.l.s4 1934713408
        %v2454 = vunpack.c.0.s8 %v2453
        %v2455 = vperm.slane %v2451, %v2454
        %v2456 = vsel %vm1393, %v2177, %v2170
        %v2458 = vunpack.c.l.s4 1983009808
        %v2459 = vunpack.c.0.s8 %v2458
        %v2460 = vperm.slane %v2456, %v2459
        %v2461 = vrot.slane %v2178, 4
        %v2462 = vsel %vm1393, %v2461, %v2176
        %v2464 = vunpack.c.l.s4 1983009808
        %v2465 = vunpack.c.0.s8 %v2464
        %v2466 = vperm.slane %v2462, %v2465
        %v2467 = vrot.slane %v2466, 4
        %v2468 = vsel %vm1393, %v2467, %v2460
        %v2470 = vunpack.c.l.s4 1934713408
        %v2471 = vunpack.c.0.s8 %v2470
        %v2472 = vperm.slane %v2468, %v2471
        %v2473 = vsel %vm1393, %v2196, %v2189
        %v2475 = vunpack.c.l.s4 1983009808
        %v2476 = vunpack.c.0.s8 %v2475
        %v2477 = vperm.slane %v2473, %v2476
        %v2478 = vrot.slane %v2197, 4
        %v2479 = vsel %vm1393, %v2478, %v2195
        %v2481 = vunpack.c.l.s4 1983009808
        %v2482 = vunpack.c.0.s8 %v2481
        %v2483 = vperm.slane %v2479, %v2482
        %v2484 = vrot.slane %v2483, 4
        %v2485 = vsel %vm1393, %v2484, %v2477
        %v2487 = vunpack.c.l.s4 1934713408
        %v2488 = vunpack.c.0.s8 %v2487
        %v2489 = vperm.slane %v2485, %v2488
        %v2490 = vsel %vm1393, %v2215, %v2208
        %v2492 = vunpack.c.l.s4 1983009808
        %v2493 = vunpack.c.0.s8 %v2492
        %v2494 = vperm.slane %v2490, %v2493
        %v2495 = vrot.slane %v2216, 4
        %v2496 = vsel %vm1393, %v2495, %v2214
        %v2498 = vunpack.c.l.s4 1983009808
        %v2499 = vunpack.c.0.s8 %v2498
        %v2500 = vperm.slane %v2496, %v2499
        %v2501 = vrot.slane %v2500, 4
        %v2502 = vsel %vm1393, %v2501, %v2494
        %v2504 = vunpack.c.l.s4 1934713408
        %v2505 = vunpack.c.0.s8 %v2504
        %v2506 = vperm.slane %v2502, %v2505
        %v2507 = vsel %vm1393, %v2234, %v2227
        %v2509 = vunpack.c.l.s4 1983009808
        %v2510 = vunpack.c.0.s8 %v2509
        %v2511 = vperm.slane %v2507, %v2510
        %v2512 = vrot.slane %v2235, 4
        %v2513 = vsel %vm1393, %v2512, %v2233
        %v2515 = vunpack.c.l.s4 1983009808
        %v2516 = vunpack.c.0.s8 %v2515
        %v2517 = vperm.slane %v2513, %v2516
        %v2518 = vrot.slane %v2517, 4
        %v2519 = vsel %vm1393, %v2518, %v2511
        %v2521 = vunpack.c.l.s4 1934713408
        %v2522 = vunpack.c.0.s8 %v2521
        %v2523 = vperm.slane %v2519, %v2522
        %v2524 = vsel %vm1393, %v2253, %v2246
        %v2526 = vunpack.c.l.s4 1983009808
        %v2527 = vunpack.c.0.s8 %v2526
        %v2528 = vperm.slane %v2524, %v2527
        %v2529 = vrot.slane %v2254, 4
        %v2530 = vsel %vm1393, %v2529, %v2252
        %v2532 = vunpack.c.l.s4 1983009808
        %v2533 = vunpack.c.0.s8 %v2532
        %v2534 = vperm.slane %v2530, %v2533
        %v2535 = vrot.slane %v2534, 4
        %v2536 = vsel %vm1393, %v2535, %v2528
        %v2538 = vunpack.c.l.s4 1934713408
        %v2539 = vunpack.c.0.s8 %v2538
        %v2540 = vperm.slane %v2536, %v2539
        %v2541 = vsel %vm1393, %v2272, %v2265
        %v2543 = vunpack.c.l.s4 1983009808
        %v2544 = vunpack.c.0.s8 %v2543
        %v2545 = vperm.slane %v2541, %v2544
        %v2546 = vrot.slane %v2273, 4
        %v2547 = vsel %vm1393, %v2546, %v2271
        %v2549 = vunpack.c.l.s4 1983009808
        %v2550 = vunpack.c.0.s8 %v2549
        %v2551 = vperm.slane %v2547, %v2550
        %v2552 = vrot.slane %v2551, 4
        %v2553 = vsel %vm1393, %v2552, %v2545
        %v2555 = vunpack.c.l.s4 1934713408
        %v2556 = vunpack.c.0.s8 %v2555
        %v2557 = vperm.slane %v2553, %v2556
        %v2558 = vsel %vm1393, %v2291, %v2284
        %v2560 = vunpack.c.l.s4 1983009808
        %v2561 = vunpack.c.0.s8 %v2560
        %v2562 = vperm.slane %v2558, %v2561
        %v2563 = vrot.slane %v2292, 4
        %v2564 = vsel %vm1393, %v2563, %v2290
        %v2566 = vunpack.c.l.s4 1983009808
        %v2567 = vunpack.c.0.s8 %v2566
        %v2568 = vperm.slane %v2564, %v2567
        %v2569 = vrot.slane %v2568, 4
        %v2570 = vsel %vm1393, %v2569, %v2562
        %v2572 = vunpack.c.l.s4 1934713408
        %v2573 = vunpack.c.0.s8 %v2572
        %v2574 = vperm.slane %v2570, %v2573
        %v2575 = vsel %vm1393, %v2310, %v2303
        %v2577 = vunpack.c.l.s4 1983009808
        %v2578 = vunpack.c.0.s8 %v2577
        %v2579 = vperm.slane %v2575, %v2578
        %v2580 = vrot.slane %v2311, 4
        %v2581 = vsel %vm1393, %v2580, %v2309
        %v2583 = vunpack.c.l.s4 1983009808
        %v2584 = vunpack.c.0.s8 %v2583
        %v2585 = vperm.slane %v2581, %v2584
        %v2586 = vrot.slane %v2585, 4
        %v2587 = vsel %vm1393, %v2586, %v2579
        %v2589 = vunpack.c.l.s4 1934713408
        %v2590 = vunpack.c.0.s8 %v2589
        %v2591 = vperm.slane %v2587, %v2590
        %v2592 = vsel %vm1393, %v2329, %v2322
        %v2594 = vunpack.c.l.s4 1983009808
        %v2595 = vunpack.c.0.s8 %v2594
        %v2596 = vperm.slane %v2592, %v2595
        %v2597 = vrot.slane %v2330, 4
        %v2598 = vsel %vm1393, %v2597, %v2328
        %v2600 = vunpack.c.l.s4 1983009808
        %v2601 = vunpack.c.0.s8 %v2600
        %v2602 = vperm.slane %v2598, %v2601
        %v2603 = vrot.slane %v2602, 4
        %v2604 = vsel %vm1393, %v2603, %v2596
        %v2606 = vunpack.c.l.s4 1934713408
        %v2607 = vunpack.c.0.s8 %v2606
        %v2608 = vperm.slane %v2604, %v2607
        %v2609 = vsel %vm1393, %v2348, %v2341
        %v2611 = vunpack.c.l.s4 1983009808
        %v2612 = vunpack.c.0.s8 %v2611
        %v2613 = vperm.slane %v2609, %v2612
        %v2614 = vrot.slane %v2349, 4
        %v2615 = vsel %vm1393, %v2614, %v2347
        %v2617 = vunpack.c.l.s4 1983009808
        %v2618 = vunpack.c.0.s8 %v2617
        %v2619 = vperm.slane %v2615, %v2618
        %v2620 = vrot.slane %v2619, 4
        %v2621 = vsel %vm1393, %v2620, %v2613
        %v2623 = vunpack.c.l.s4 1934713408
        %v2624 = vunpack.c.0.s8 %v2623
        %v2625 = vperm.slane %v2621, %v2624
        %v2626 = vsel %vm1393, %v2367, %v2360
        %v2628 = vunpack.c.l.s4 1983009808
        %v2629 = vunpack.c.0.s8 %v2628
        %v2630 = vperm.slane %v2626, %v2629
        %v2631 = vrot.slane %v2368, 4
        %v2632 = vsel %vm1393, %v2631, %v2366
        %v2634 = vunpack.c.l.s4 1983009808
        %v2635 = vunpack.c.0.s8 %v2634
        %v2636 = vperm.slane %v2632, %v2635
        %v2637 = vrot.slane %v2636, 4
        %v2638 = vsel %vm1393, %v2637, %v2630
        %v2640 = vunpack.c.l.s4 1934713408
        %v2641 = vunpack.c.0.s8 %v2640
        %v2642 = vperm.slane %v2638, %v2641
        %v2643 = vsel %vm1393, %v2386, %v2379
        %v2645 = vunpack.c.l.s4 1983009808
        %v2646 = vunpack.c.0.s8 %v2645
        %v2647 = vperm.slane %v2643, %v2646
        %v2648 = vrot.slane %v2387, 4
        %v2649 = vsel %vm1393, %v2648, %v2385
        %v2651 = vunpack.c.l.s4 1983009808
        %v2652 = vunpack.c.0.s8 %v2651
        %v2653 = vperm.slane %v2649, %v2652
        %v2654 = vrot.slane %v2653, 4
        %v2655 = vsel %vm1393, %v2654, %v2647
        %v2657 = vunpack.c.l.s4 1934713408
        %v2658 = vunpack.c.0.s8 %v2657
        %v2659 = vperm.slane %v2655, %v2658
        %v2662 = vpack.i.b16 %v2421, %v2404
        %v2663 = vshrl.u32 %v2404, 16
        %v2664 = vshrl.u32 %v2421, 16
        %v2665 = vpack.i.b16 %v2664, %v2663
        %v2668 = vpack.i.b16 %v2455, %v2438
        %v2669 = vshrl.u32 %v2438, 16
        %v2670 = vshrl.u32 %v2455, 16
        %v2671 = vpack.i.b16 %v2670, %v2669
        %v2674 = vpack.i.b16 %v2489, %v2472
        %v2675 = vshrl.u32 %v2472, 16
        %v2676 = vshrl.u32 %v2489, 16
        %v2677 = vpack.i.b16 %v2676, %v2675
        %v2680 = vpack.i.b16 %v2523, %v2506
        %v2681 = vshrl.u32 %v2506, 16
        %v2682 = vshrl.u32 %v2523, 16
        %v2683 = vpack.i.b16 %v2682, %v2681
        %v2686 = vpack.i.b16 %v2557, %v2540
        %v2687 = vshrl.u32 %v2540, 16
        %v2688 = vshrl.u32 %v2557, 16
        %v2689 = vpack.i.b16 %v2688, %v2687
        %v2692 = vpack.i.b16 %v2591, %v2574
        %v2693 = vshrl.u32 %v2574, 16
        %v2694 = vshrl.u32 %v2591, 16
        %v2695 = vpack.i.b16 %v2694, %v2693
        %v2698 = vpack.i.b16 %v2625, %v2608
        %v2699 = vshrl.u32 %v2608, 16
        %v2700 = vshrl.u32 %v2625, 16
        %v2701 = vpack.i.b16 %v2700, %v2699
        %v2704 = vpack.i.b16 %v2659, %v2642
        %v2705 = vshrl.u32 %v2642, 16
        %v2706 = vshrl.u32 %v2659, 16
        %v2707 = vpack.i.b16 %v2706, %v2705
        %2716 = vrot.lane.b32.xlu0 %v1307, 64
        %v2717 = vpop.permute.xlu0 %2716
        %2718 = vrot.lane.b32.xlu0 %v1308, 64
        %v2719 = vpop.permute.xlu0 %2718
        %2720 = vrot.lane.b32.xlu0 %v1309, 64
        %v2721 = vpop.permute.xlu0 %2720
        %2722 = vrot.lane.b32.xlu0 %v1310, 64
        %v2723 = vpop.permute.xlu0 %2722
        %2724 = vrot.lane.b32.xlu0 %v1311, 64
        %v2725 = vpop.permute.xlu0 %2724
        %2726 = vrot.lane.b32.xlu0 %v1312, 64
        %v2727 = vpop.permute.xlu0 %2726
        %2728 = vrot.lane.b32.xlu0 %v1313, 64
        %v2729 = vpop.permute.xlu0 %2728
        %2730 = vrot.lane.b32.xlu0 %v1314, 64
        %v2731 = vpop.permute.xlu0 %2730
        %v2734 = vpack.i.b16 %v2717, %v1307
        %v2735 = vshrl.u32 %v1307, 16
        %v2736 = vshrl.u32 %v2717, 16
        %v2737 = vpack.i.b16 %v2736, %v2735
        %v2740 = vpack.i.b16 %v2719, %v1308
        %v2741 = vshrl.u32 %v1308, 16
        %v2742 = vshrl.u32 %v2719, 16
        %v2743 = vpack.i.b16 %v2742, %v2741
        %v2746 = vpack.i.b16 %v2721, %v1309
        %v2747 = vshrl.u32 %v1309, 16
        %v2748 = vshrl.u32 %v2721, 16
        %v2749 = vpack.i.b16 %v2748, %v2747
        %v2752 = vpack.i.b16 %v2723, %v1310
        %v2753 = vshrl.u32 %v1310, 16
        %v2754 = vshrl.u32 %v2723, 16
        %v2755 = vpack.i.b16 %v2754, %v2753
        %v2758 = vpack.i.b16 %v2725, %v1311
        %v2759 = vshrl.u32 %v1311, 16
        %v2760 = vshrl.u32 %v2725, 16
        %v2761 = vpack.i.b16 %v2760, %v2759
        %v2764 = vpack.i.b16 %v2727, %v1312
        %v2765 = vshrl.u32 %v1312, 16
        %v2766 = vshrl.u32 %v2727, 16
        %v2767 = vpack.i.b16 %v2766, %v2765
        %v2770 = vpack.i.b16 %v2729, %v1313
        %v2771 = vshrl.u32 %v1313, 16
        %v2772 = vshrl.u32 %v2729, 16
        %v2773 = vpack.i.b16 %v2772, %v2771
        %v2776 = vpack.i.b16 %v2731, %v1314
        %v2777 = vshrl.u32 %v1314, 16
        %v2778 = vshrl.u32 %v2731, 16
        %v2779 = vpack.i.b16 %v2778, %v2777
        %v2782 = vunpack.c.l.s4 1983009808
        %v2783 = vunpack.c.0.s8 %v2782
        %v2784 = vperm.slane %v2734, %v2783
        %v2785 = vrot.slane %v2784, 4
        %v2786 = vsel %vm1393, 0, %v2785
        %v2788 = vunpack.c.l.s4 1934713408
        %v2789 = vunpack.c.0.s8 %v2788
        %v2790 = vperm.slane %v2784, %v2789
        %v2792 = vunpack.c.l.s4 1934713408
        %v2793 = vunpack.c.0.s8 %v2792
        %v2794 = vperm.slane %v2786, %v2793
        %v2795 = vrot.slane %v2790, 4
        %v2796 = vsel %vm1393, 0, %v2795
        %v2797 = vrot.slane %v2794, 4
        %v2798 = vsel %vm1393, 0, %v2797
        %v2801 = vunpack.c.l.s4 1983009808
        %v2802 = vunpack.c.0.s8 %v2801
        %v2803 = vperm.slane %v2737, %v2802
        %v2804 = vrot.slane %v2803, 4
        %v2805 = vsel %vm1393, 0, %v2804
        %v2807 = vunpack.c.l.s4 1934713408
        %v2808 = vunpack.c.0.s8 %v2807
        %v2809 = vperm.slane %v2803, %v2808
        %v2811 = vunpack.c.l.s4 1934713408
        %v2812 = vunpack.c.0.s8 %v2811
        %v2813 = vperm.slane %v2805, %v2812
        %v2814 = vrot.slane %v2809, 4
        %v2815 = vsel %vm1393, 0, %v2814
        %v2816 = vrot.slane %v2813, 4
        %v2817 = vsel %vm1393, 0, %v2816
        %v2820 = vunpack.c.l.s4 1983009808
        %v2821 = vunpack.c.0.s8 %v2820
        %v2822 = vperm.slane %v2740, %v2821
        %v2823 = vrot.slane %v2822, 4
        %v2824 = vsel %vm1393, 0, %v2823
        %v2826 = vunpack.c.l.s4 1934713408
        %v2827 = vunpack.c.0.s8 %v2826
        %v2828 = vperm.slane %v2822, %v2827
        %v2830 = vunpack.c.l.s4 1934713408
        %v2831 = vunpack.c.0.s8 %v2830
        %v2832 = vperm.slane %v2824, %v2831
        %v2833 = vrot.slane %v2828, 4
        %v2834 = vsel %vm1393, 0, %v2833
        %v2835 = vrot.slane %v2832, 4
        %v2836 = vsel %vm1393, 0, %v2835
        %v2839 = vunpack.c.l.s4 1983009808
        %v2840 = vunpack.c.0.s8 %v2839
        %v2841 = vperm.slane %v2743, %v2840
        %v2842 = vrot.slane %v2841, 4
        %v2843 = vsel %vm1393, 0, %v2842
        %v2845 = vunpack.c.l.s4 1934713408
        %v2846 = vunpack.c.0.s8 %v2845
        %v2847 = vperm.slane %v2841, %v2846
        %v2849 = vunpack.c.l.s4 1934713408
        %v2850 = vunpack.c.0.s8 %v2849
        %v2851 = vperm.slane %v2843, %v2850
        %v2852 = vrot.slane %v2847, 4
        %v2853 = vsel %vm1393, 0, %v2852
        %v2854 = vrot.slane %v2851, 4
        %v2855 = vsel %vm1393, 0, %v2854
        %v2858 = vunpack.c.l.s4 1983009808
        %v2859 = vunpack.c.0.s8 %v2858
        %v2860 = vperm.slane %v2746, %v2859
        %v2861 = vrot.slane %v2860, 4
        %v2862 = vsel %vm1393, 0, %v2861
        %v2864 = vunpack.c.l.s4 1934713408
        %v2865 = vunpack.c.0.s8 %v2864
        %v2866 = vperm.slane %v2860, %v2865
        %v2868 = vunpack.c.l.s4 1934713408
        %v2869 = vunpack.c.0.s8 %v2868
        %v2870 = vperm.slane %v2862, %v2869
        %v2871 = vrot.slane %v2866, 4
        %v2872 = vsel %vm1393, 0, %v2871
        %v2873 = vrot.slane %v2870, 4
        %v2874 = vsel %vm1393, 0, %v2873
        %v2877 = vunpack.c.l.s4 1983009808
        %v2878 = vunpack.c.0.s8 %v2877
        %v2879 = vperm.slane %v2749, %v2878
        %v2880 = vrot.slane %v2879, 4
        %v2881 = vsel %vm1393, 0, %v2880
        %v2883 = vunpack.c.l.s4 1934713408
        %v2884 = vunpack.c.0.s8 %v2883
        %v2885 = vperm.slane %v2879, %v2884
        %v2887 = vunpack.c.l.s4 1934713408
        %v2888 = vunpack.c.0.s8 %v2887
        %v2889 = vperm.slane %v2881, %v2888
        %v2890 = vrot.slane %v2885, 4
        %v2891 = vsel %vm1393, 0, %v2890
        %v2892 = vrot.slane %v2889, 4
        %v2893 = vsel %vm1393, 0, %v2892
        %v2896 = vunpack.c.l.s4 1983009808
        %v2897 = vunpack.c.0.s8 %v2896
        %v2898 = vperm.slane %v2752, %v2897
        %v2899 = vrot.slane %v2898, 4
        %v2900 = vsel %vm1393, 0, %v2899
        %v2902 = vunpack.c.l.s4 1934713408
        %v2903 = vunpack.c.0.s8 %v2902
        %v2904 = vperm.slane %v2898, %v2903
        %v2906 = vunpack.c.l.s4 1934713408
        %v2907 = vunpack.c.0.s8 %v2906
        %v2908 = vperm.slane %v2900, %v2907
        %v2909 = vrot.slane %v2904, 4
        %v2910 = vsel %vm1393, 0, %v2909
        %v2911 = vrot.slane %v2908, 4
        %v2912 = vsel %vm1393, 0, %v2911
        %v2915 = vunpack.c.l.s4 1983009808
        %v2916 = vunpack.c.0.s8 %v2915
        %v2917 = vperm.slane %v2755, %v2916
        %v2918 = vrot.slane %v2917, 4
        %v2919 = vsel %vm1393, 0, %v2918
        %v2921 = vunpack.c.l.s4 1934713408
        %v2922 = vunpack.c.0.s8 %v2921
        %v2923 = vperm.slane %v2917, %v2922
        %v2925 = vunpack.c.l.s4 1934713408
        %v2926 = vunpack.c.0.s8 %v2925
        %v2927 = vperm.slane %v2919, %v2926
        %v2928 = vrot.slane %v2923, 4
        %v2929 = vsel %vm1393, 0, %v2928
        %v2930 = vrot.slane %v2927, 4
        %v2931 = vsel %vm1393, 0, %v2930
        %v2934 = vunpack.c.l.s4 1983009808
        %v2935 = vunpack.c.0.s8 %v2934
        %v2936 = vperm.slane %v2758, %v2935
        %v2937 = vrot.slane %v2936, 4
        %v2938 = vsel %vm1393, 0, %v2937
        %v2940 = vunpack.c.l.s4 1934713408
        %v2941 = vunpack.c.0.s8 %v2940
        %v2942 = vperm.slane %v2936, %v2941
        %v2944 = vunpack.c.l.s4 1934713408
        %v2945 = vunpack.c.0.s8 %v2944
        %v2946 = vperm.slane %v2938, %v2945
        %v2947 = vrot.slane %v2942, 4
        %v2948 = vsel %vm1393, 0, %v2947
        %v2949 = vrot.slane %v2946, 4
        %v2950 = vsel %vm1393, 0, %v2949
        %v2953 = vunpack.c.l.s4 1983009808
        %v2954 = vunpack.c.0.s8 %v2953
        %v2955 = vperm.slane %v2761, %v2954
        %v2956 = vrot.slane %v2955, 4
        %v2957 = vsel %vm1393, 0, %v2956
        %v2959 = vunpack.c.l.s4 1934713408
        %v2960 = vunpack.c.0.s8 %v2959
        %v2961 = vperm.slane %v2955, %v2960
        %v2963 = vunpack.c.l.s4 1934713408
        %v2964 = vunpack.c.0.s8 %v2963
        %v2965 = vperm.slane %v2957, %v2964
        %v2966 = vrot.slane %v2961, 4
        %v2967 = vsel %vm1393, 0, %v2966
        %v2968 = vrot.slane %v2965, 4
        %v2969 = vsel %vm1393, 0, %v2968
        %v2972 = vunpack.c.l.s4 1983009808
        %v2973 = vunpack.c.0.s8 %v2972
        %v2974 = vperm.slane %v2764, %v2973
        %v2975 = vrot.slane %v2974, 4
        %v2976 = vsel %vm1393, 0, %v2975
        %v2978 = vunpack.c.l.s4 1934713408
        %v2979 = vunpack.c.0.s8 %v2978
        %v2980 = vperm.slane %v2974, %v2979
        %v2982 = vunpack.c.l.s4 1934713408
        %v2983 = vunpack.c.0.s8 %v2982
        %v2984 = vperm.slane %v2976, %v2983
        %v2985 = vrot.slane %v2980, 4
        %v2986 = vsel %vm1393, 0, %v2985
        %v2987 = vrot.slane %v2984, 4
        %v2988 = vsel %vm1393, 0, %v2987
        %v2991 = vunpack.c.l.s4 1983009808
        %v2992 = vunpack.c.0.s8 %v2991
        %v2993 = vperm.slane %v2767, %v2992
        %v2994 = vrot.slane %v2993, 4
        %v2995 = vsel %vm1393, 0, %v2994
        %v2997 = vunpack.c.l.s4 1934713408
        %v2998 = vunpack.c.0.s8 %v2997
        %v2999 = vperm.slane %v2993, %v2998
        %v3001 = vunpack.c.l.s4 1934713408
        %v3002 = vunpack.c.0.s8 %v3001
        %v3003 = vperm.slane %v2995, %v3002
        %v3004 = vrot.slane %v2999, 4
        %v3005 = vsel %vm1393, 0, %v3004
        %v3006 = vrot.slane %v3003, 4
        %v3007 = vsel %vm1393, 0, %v3006
        %v3010 = vunpack.c.l.s4 1983009808
        %v3011 = vunpack.c.0.s8 %v3010
        %v3012 = vperm.slane %v2770, %v3011
        %v3013 = vrot.slane %v3012, 4
        %v3014 = vsel %vm1393, 0, %v3013
        %v3016 = vunpack.c.l.s4 1934713408
        %v3017 = vunpack.c.0.s8 %v3016
        %v3018 = vperm.slane %v3012, %v3017
        %v3020 = vunpack.c.l.s4 1934713408
        %v3021 = vunpack.c.0.s8 %v3020
        %v3022 = vperm.slane %v3014, %v3021
        %v3023 = vrot.slane %v3018, 4
        %v3024 = vsel %vm1393, 0, %v3023
        %v3025 = vrot.slane %v3022, 4
        %v3026 = vsel %vm1393, 0, %v3025
        %v3029 = vunpack.c.l.s4 1983009808
        %v3030 = vunpack.c.0.s8 %v3029
        %v3031 = vperm.slane %v2773, %v3030
        %v3032 = vrot.slane %v3031, 4
        %v3033 = vsel %vm1393, 0, %v3032
        %v3035 = vunpack.c.l.s4 1934713408
        %v3036 = vunpack.c.0.s8 %v3035
        %v3037 = vperm.slane %v3031, %v3036
        %v3039 = vunpack.c.l.s4 1934713408
        %v3040 = vunpack.c.0.s8 %v3039
        %v3041 = vperm.slane %v3033, %v3040
        %v3042 = vrot.slane %v3037, 4
        %v3043 = vsel %vm1393, 0, %v3042
        %v3044 = vrot.slane %v3041, 4
        %v3045 = vsel %vm1393, 0, %v3044
        %v3048 = vunpack.c.l.s4 1983009808
        %v3049 = vunpack.c.0.s8 %v3048
        %v3050 = vperm.slane %v2776, %v3049
        %v3051 = vrot.slane %v3050, 4
        %v3052 = vsel %vm1393, 0, %v3051
        %v3054 = vunpack.c.l.s4 1934713408
        %v3055 = vunpack.c.0.s8 %v3054
        %v3056 = vperm.slane %v3050, %v3055
        %v3058 = vunpack.c.l.s4 1934713408
        %v3059 = vunpack.c.0.s8 %v3058
        %v3060 = vperm.slane %v3052, %v3059
        %v3061 = vrot.slane %v3056, 4
        %v3062 = vsel %vm1393, 0, %v3061
        %v3063 = vrot.slane %v3060, 4
        %v3064 = vsel %vm1393, 0, %v3063
        %v3067 = vunpack.c.l.s4 1983009808
        %v3068 = vunpack.c.0.s8 %v3067
        %v3069 = vperm.slane %v2779, %v3068
        %v3070 = vrot.slane %v3069, 4
        %v3071 = vsel %vm1393, 0, %v3070
        %v3073 = vunpack.c.l.s4 1934713408
        %v3074 = vunpack.c.0.s8 %v3073
        %v3075 = vperm.slane %v3069, %v3074
        %v3077 = vunpack.c.l.s4 1934713408
        %v3078 = vunpack.c.0.s8 %v3077
        %v3079 = vperm.slane %v3071, %v3078
        %v3080 = vrot.slane %v3075, 4
        %v3081 = vsel %vm1393, 0, %v3080
        %v3082 = vrot.slane %v3079, 4
        %v3083 = vsel %vm1393, 0, %v3082
        %v3084 = vsel %vm1393, %v2797, %v2790
        %v3086 = vunpack.c.l.s4 1983009808
        %v3087 = vunpack.c.0.s8 %v3086
        %v3088 = vperm.slane %v3084, %v3087
        %v3089 = vrot.slane %v2798, 4
        %v3090 = vsel %vm1393, %v3089, %v2796
        %v3092 = vunpack.c.l.s4 1983009808
        %v3093 = vunpack.c.0.s8 %v3092
        %v3094 = vperm.slane %v3090, %v3093
        %v3095 = vrot.slane %v3094, 4
        %v3096 = vsel %vm1393, %v3095, %v3088
        %v3098 = vunpack.c.l.s4 1934713408
        %v3099 = vunpack.c.0.s8 %v3098
        %v3100 = vperm.slane %v3096, %v3099
        %v3101 = vsel %vm1393, %v2816, %v2809
        %v3103 = vunpack.c.l.s4 1983009808
        %v3104 = vunpack.c.0.s8 %v3103
        %v3105 = vperm.slane %v3101, %v3104
        %v3106 = vrot.slane %v2817, 4
        %v3107 = vsel %vm1393, %v3106, %v2815
        %v3109 = vunpack.c.l.s4 1983009808
        %v3110 = vunpack.c.0.s8 %v3109
        %v3111 = vperm.slane %v3107, %v3110
        %v3112 = vrot.slane %v3111, 4
        %v3113 = vsel %vm1393, %v3112, %v3105
        %v3115 = vunpack.c.l.s4 1934713408
        %v3116 = vunpack.c.0.s8 %v3115
        %v3117 = vperm.slane %v3113, %v3116
        %v3118 = vsel %vm1393, %v2835, %v2828
        %v3120 = vunpack.c.l.s4 1983009808
        %v3121 = vunpack.c.0.s8 %v3120
        %v3122 = vperm.slane %v3118, %v3121
        %v3123 = vrot.slane %v2836, 4
        %v3124 = vsel %vm1393, %v3123, %v2834
        %v3126 = vunpack.c.l.s4 1983009808
        %v3127 = vunpack.c.0.s8 %v3126
        %v3128 = vperm.slane %v3124, %v3127
        %v3129 = vrot.slane %v3128, 4
        %v3130 = vsel %vm1393, %v3129, %v3122
        %v3132 = vunpack.c.l.s4 1934713408
        %v3133 = vunpack.c.0.s8 %v3132
        %v3134 = vperm.slane %v3130, %v3133
        %v3135 = vsel %vm1393, %v2854, %v2847
        %v3137 = vunpack.c.l.s4 1983009808
        %v3138 = vunpack.c.0.s8 %v3137
        %v3139 = vperm.slane %v3135, %v3138
        %v3140 = vrot.slane %v2855, 4
        %v3141 = vsel %vm1393, %v3140, %v2853
        %v3143 = vunpack.c.l.s4 1983009808
        %v3144 = vunpack.c.0.s8 %v3143
        %v3145 = vperm.slane %v3141, %v3144
        %v3146 = vrot.slane %v3145, 4
        %v3147 = vsel %vm1393, %v3146, %v3139
        %v3149 = vunpack.c.l.s4 1934713408
        %v3150 = vunpack.c.0.s8 %v3149
        %v3151 = vperm.slane %v3147, %v3150
        %v3152 = vsel %vm1393, %v2873, %v2866
        %v3154 = vunpack.c.l.s4 1983009808
        %v3155 = vunpack.c.0.s8 %v3154
        %v3156 = vperm.slane %v3152, %v3155
        %v3157 = vrot.slane %v2874, 4
        %v3158 = vsel %vm1393, %v3157, %v2872
        %v3160 = vunpack.c.l.s4 1983009808
        %v3161 = vunpack.c.0.s8 %v3160
        %v3162 = vperm.slane %v3158, %v3161
        %v3163 = vrot.slane %v3162, 4
        %v3164 = vsel %vm1393, %v3163, %v3156
        %v3166 = vunpack.c.l.s4 1934713408
        %v3167 = vunpack.c.0.s8 %v3166
        %v3168 = vperm.slane %v3164, %v3167
        %v3169 = vsel %vm1393, %v2892, %v2885
        %v3171 = vunpack.c.l.s4 1983009808
        %v3172 = vunpack.c.0.s8 %v3171
        %v3173 = vperm.slane %v3169, %v3172
        %v3174 = vrot.slane %v2893, 4
        %v3175 = vsel %vm1393, %v3174, %v2891
        %v3177 = vunpack.c.l.s4 1983009808
        %v3178 = vunpack.c.0.s8 %v3177
        %v3179 = vperm.slane %v3175, %v3178
        %v3180 = vrot.slane %v3179, 4
        %v3181 = vsel %vm1393, %v3180, %v3173
        %v3183 = vunpack.c.l.s4 1934713408
        %v3184 = vunpack.c.0.s8 %v3183
        %v3185 = vperm.slane %v3181, %v3184
        %v3186 = vsel %vm1393, %v2911, %v2904
        %v3188 = vunpack.c.l.s4 1983009808
        %v3189 = vunpack.c.0.s8 %v3188
        %v3190 = vperm.slane %v3186, %v3189
        %v3191 = vrot.slane %v2912, 4
        %v3192 = vsel %vm1393, %v3191, %v2910
        %v3194 = vunpack.c.l.s4 1983009808
        %v3195 = vunpack.c.0.s8 %v3194
        %v3196 = vperm.slane %v3192, %v3195
        %v3197 = vrot.slane %v3196, 4
        %v3198 = vsel %vm1393, %v3197, %v3190
        %v3200 = vunpack.c.l.s4 1934713408
        %v3201 = vunpack.c.0.s8 %v3200
        %v3202 = vperm.slane %v3198, %v3201
        %v3203 = vsel %vm1393, %v2930, %v2923
        %v3205 = vunpack.c.l.s4 1983009808
        %v3206 = vunpack.c.0.s8 %v3205
        %v3207 = vperm.slane %v3203, %v3206
        %v3208 = vrot.slane %v2931, 4
        %v3209 = vsel %vm1393, %v3208, %v2929
        %v3211 = vunpack.c.l.s4 1983009808
        %v3212 = vunpack.c.0.s8 %v3211
        %v3213 = vperm.slane %v3209, %v3212
        %v3214 = vrot.slane %v3213, 4
        %v3215 = vsel %vm1393, %v3214, %v3207
        %v3217 = vunpack.c.l.s4 1934713408
        %v3218 = vunpack.c.0.s8 %v3217
        %v3219 = vperm.slane %v3215, %v3218
        %v3220 = vsel %vm1393, %v2949, %v2942
        %v3222 = vunpack.c.l.s4 1983009808
        %v3223 = vunpack.c.0.s8 %v3222
        %v3224 = vperm.slane %v3220, %v3223
        %v3225 = vrot.slane %v2950, 4
        %v3226 = vsel %vm1393, %v3225, %v2948
        %v3228 = vunpack.c.l.s4 1983009808
        %v3229 = vunpack.c.0.s8 %v3228
        %v3230 = vperm.slane %v3226, %v3229
        %v3231 = vrot.slane %v3230, 4
        %v3232 = vsel %vm1393, %v3231, %v3224
        %v3234 = vunpack.c.l.s4 1934713408
        %v3235 = vunpack.c.0.s8 %v3234
        %v3236 = vperm.slane %v3232, %v3235
        %v3237 = vsel %vm1393, %v2968, %v2961
        %v3239 = vunpack.c.l.s4 1983009808
        %v3240 = vunpack.c.0.s8 %v3239
        %v3241 = vperm.slane %v3237, %v3240
        %v3242 = vrot.slane %v2969, 4
        %v3243 = vsel %vm1393, %v3242, %v2967
        %v3245 = vunpack.c.l.s4 1983009808
        %v3246 = vunpack.c.0.s8 %v3245
        %v3247 = vperm.slane %v3243, %v3246
        %v3248 = vrot.slane %v3247, 4
        %v3249 = vsel %vm1393, %v3248, %v3241
        %v3251 = vunpack.c.l.s4 1934713408
        %v3252 = vunpack.c.0.s8 %v3251
        %v3253 = vperm.slane %v3249, %v3252
        %v3254 = vsel %vm1393, %v2987, %v2980
        %v3256 = vunpack.c.l.s4 1983009808
        %v3257 = vunpack.c.0.s8 %v3256
        %v3258 = vperm.slane %v3254, %v3257
        %v3259 = vrot.slane %v2988, 4
        %v3260 = vsel %vm1393, %v3259, %v2986
        %v3262 = vunpack.c.l.s4 1983009808
        %v3263 = vunpack.c.0.s8 %v3262
        %v3264 = vperm.slane %v3260, %v3263
        %v3265 = vrot.slane %v3264, 4
        %v3266 = vsel %vm1393, %v3265, %v3258
        %v3268 = vunpack.c.l.s4 1934713408
        %v3269 = vunpack.c.0.s8 %v3268
        %v3270 = vperm.slane %v3266, %v3269
        %v3271 = vsel %vm1393, %v3006, %v2999
        %v3273 = vunpack.c.l.s4 1983009808
        %v3274 = vunpack.c.0.s8 %v3273
        %v3275 = vperm.slane %v3271, %v3274
        %v3276 = vrot.slane %v3007, 4
        %v3277 = vsel %vm1393, %v3276, %v3005
        %v3279 = vunpack.c.l.s4 1983009808
        %v3280 = vunpack.c.0.s8 %v3279
        %v3281 = vperm.slane %v3277, %v3280
        %v3282 = vrot.slane %v3281, 4
        %v3283 = vsel %vm1393, %v3282, %v3275
        %v3285 = vunpack.c.l.s4 1934713408
        %v3286 = vunpack.c.0.s8 %v3285
        %v3287 = vperm.slane %v3283, %v3286
        %v3288 = vsel %vm1393, %v3025, %v3018
        %v3290 = vunpack.c.l.s4 1983009808
        %v3291 = vunpack.c.0.s8 %v3290
        %v3292 = vperm.slane %v3288, %v3291
        %v3293 = vrot.slane %v3026, 4
        %v3294 = vsel %vm1393, %v3293, %v3024
        %v3296 = vunpack.c.l.s4 1983009808
        %v3297 = vunpack.c.0.s8 %v3296
        %v3298 = vperm.slane %v3294, %v3297
        %v3299 = vrot.slane %v3298, 4
        %v3300 = vsel %vm1393, %v3299, %v3292
        %v3302 = vunpack.c.l.s4 1934713408
        %v3303 = vunpack.c.0.s8 %v3302
        %v3304 = vperm.slane %v3300, %v3303
        %v3305 = vsel %vm1393, %v3044, %v3037
        %v3307 = vunpack.c.l.s4 1983009808
        %v3308 = vunpack.c.0.s8 %v3307
        %v3309 = vperm.slane %v3305, %v3308
        %v3310 = vrot.slane %v3045, 4
        %v3311 = vsel %vm1393, %v3310, %v3043
        %v3313 = vunpack.c.l.s4 1983009808
        %v3314 = vunpack.c.0.s8 %v3313
        %v3315 = vperm.slane %v3311, %v3314
        %v3316 = vrot.slane %v3315, 4
        %v3317 = vsel %vm1393, %v3316, %v3309
        %v3319 = vunpack.c.l.s4 1934713408
        %v3320 = vunpack.c.0.s8 %v3319
        %v3321 = vperm.slane %v3317, %v3320
        %v3322 = vsel %vm1393, %v3063, %v3056
        %v3324 = vunpack.c.l.s4 1983009808
        %v3325 = vunpack.c.0.s8 %v3324
        %v3326 = vperm.slane %v3322, %v3325
        %v3327 = vrot.slane %v3064, 4
        %v3328 = vsel %vm1393, %v3327, %v3062
        %v3330 = vunpack.c.l.s4 1983009808
        %v3331 = vunpack.c.0.s8 %v3330
        %v3332 = vperm.slane %v3328, %v3331
        %v3333 = vrot.slane %v3332, 4
        %v3334 = vsel %vm1393, %v3333, %v3326
        %v3336 = vunpack.c.l.s4 1934713408
        %v3337 = vunpack.c.0.s8 %v3336
        %v3338 = vperm.slane %v3334, %v3337
        %v3339 = vsel %vm1393, %v3082, %v3075
        %v3341 = vunpack.c.l.s4 1983009808
        %v3342 = vunpack.c.0.s8 %v3341
        %v3343 = vperm.slane %v3339, %v3342
        %v3344 = vrot.slane %v3083, 4
        %v3345 = vsel %vm1393, %v3344, %v3081
        %v3347 = vunpack.c.l.s4 1983009808
        %v3348 = vunpack.c.0.s8 %v3347
        %v3349 = vperm.slane %v3345, %v3348
        %v3350 = vrot.slane %v3349, 4
        %v3351 = vsel %vm1393, %v3350, %v3343
        %v3353 = vunpack.c.l.s4 1934713408
        %v3354 = vunpack.c.0.s8 %v3353
        %v3355 = vperm.slane %v3351, %v3354
        %v3358 = vpack.i.b16 %v3117, %v3100
        %v3359 = vshrl.u32 %v3100, 16
        %v3360 = vshrl.u32 %v3117, 16
        %v3361 = vpack.i.b16 %v3360, %v3359
        %v3364 = vpack.i.b16 %v3151, %v3134
        %v3365 = vshrl.u32 %v3134, 16
        %v3366 = vshrl.u32 %v3151, 16
        %v3367 = vpack.i.b16 %v3366, %v3365
        %v3370 = vpack.i.b16 %v3185, %v3168
        %v3371 = vshrl.u32 %v3168, 16
        %v3372 = vshrl.u32 %v3185, 16
        %v3373 = vpack.i.b16 %v3372, %v3371
        %v3376 = vpack.i.b16 %v3219, %v3202
        %v3377 = vshrl.u32 %v3202, 16
        %v3378 = vshrl.u32 %v3219, 16
        %v3379 = vpack.i.b16 %v3378, %v3377
        %v3382 = vpack.i.b16 %v3253, %v3236
        %v3383 = vshrl.u32 %v3236, 16
        %v3384 = vshrl.u32 %v3253, 16
        %v3385 = vpack.i.b16 %v3384, %v3383
        %v3388 = vpack.i.b16 %v3287, %v3270
        %v3389 = vshrl.u32 %v3270, 16
        %v3390 = vshrl.u32 %v3287, 16
        %v3391 = vpack.i.b16 %v3390, %v3389
        %v3394 = vpack.i.b16 %v3321, %v3304
        %v3395 = vshrl.u32 %v3304, 16
        %v3396 = vshrl.u32 %v3321, 16
        %v3397 = vpack.i.b16 %v3396, %v3395
        %v3400 = vpack.i.b16 %v3355, %v3338
        %v3401 = vshrl.u32 %v3338, 16
        %v3402 = vshrl.u32 %v3355, 16
        %v3403 = vpack.i.b16 %v3402, %v3401
        %v3404 = vunpack.c.l.b16 %v1966
        %v3405 = vunpack.c.l.b16 %v1972
        %v3406 = vpack.c.b16 %v3405, %v3404
        %v3407 = vunpack.c.l.b16 %v2662
        %v3408 = vunpack.c.l.b16 %v2668
        %v3409 = vpack.c.b16 %v3408, %v3407
        %vm3410 = vcmask 523264
        %v3412 = vsel %vm3410, %v3406, 0
        %v3415 = vsel %vm3410, %v3409, 0
        %3417 = vmatpush.bf16.xpose.msra.mxu0 0
        %3418 = vmatpush.bf16.xpose.msra.mxu0 0
        %3419 = vmatpush.bf16.xpose.msra.mxu0 0
        %3420 = vmatpush.bf16.xpose.msra.mxu0 0
        %3421 = vmatpush.bf16.xpose.msra.mxu0 0
        %3422 = vmatpush.bf16.xpose.msra.mxu0 0
        %3423 = vmatpush.bf16.xpose.msra.mxu0 0
        %3424 = vmatpush.bf16.xpose.msra.mxu0 %v3415
        %3425 = vmatmul.bf16.gmra.mxu0 %v3412
        %v3426 = vpop.f32.mrf.mxu0
        %v3427 = vadd.f32 0.0, %v3426
        %v3428 = vpop.f32.mrf.mxu0
        %v3429 = vadd.f32 0.0, %v3428
        %3430 = vdwg.mxu0
        %v3431 = vunpack.c.l.b16 %v1969
        %v3432 = vunpack.c.l.b16 %v1975
        %v3433 = vpack.c.b16 %v3432, %v3431
        %v3434 = vunpack.c.l.b16 %v2665
        %v3435 = vunpack.c.l.b16 %v2671
        %v3436 = vpack.c.b16 %v3435, %v3434
        %v3438 = vsel %vm3410, %v3433, 0
        %v3441 = vsel %vm3410, %v3436, 0
        %3443 = vmatpush.bf16.xpose.msra.mxu0 0
        %3444 = vmatpush.bf16.xpose.msra.mxu0 0
        %3445 = vmatpush.bf16.xpose.msra.mxu0 0
        %3446 = vmatpush.bf16.xpose.msra.mxu0 0
        %3447 = vmatpush.bf16.xpose.msra.mxu0 0
        %3448 = vmatpush.bf16.xpose.msra.mxu0 0
        %3449 = vmatpush.bf16.xpose.msra.mxu0 0
        %3450 = vmatpush.bf16.xpose.msra.mxu0 %v3441
        %3451 = vmatmul.bf16.gmra.mxu0 %v3438
        %v3452 = vpop.f32.mrf.mxu0
        %v3453 = vadd.f32 0.0, %v3452
        %v3454 = vpop.f32.mrf.mxu0
        %v3455 = vadd.f32 0.0, %v3454
        %3456 = vdwg.mxu0
        %v3457 = vunpack.c.l.b16 %v1978
        %v3458 = vunpack.c.l.b16 %v1984
        %v3459 = vpack.c.b16 %v3458, %v3457
        %v3460 = vunpack.c.l.b16 %v2674
        %v3461 = vunpack.c.l.b16 %v2680
        %v3462 = vpack.c.b16 %v3461, %v3460
        %v3464 = vsel %vm3410, %v3459, 0
        %v3467 = vsel %vm3410, %v3462, 0
        %3469 = vmatpush.bf16.xpose.msra.mxu0 0
        %3470 = vmatpush.bf16.xpose.msra.mxu0 0
        %3471 = vmatpush.bf16.xpose.msra.mxu0 0
        %3472 = vmatpush.bf16.xpose.msra.mxu0 0
        %3473 = vmatpush.bf16.xpose.msra.mxu0 0
        %3474 = vmatpush.bf16.xpose.msra.mxu0 0
        %3475 = vmatpush.bf16.xpose.msra.mxu0 0
        %3476 = vmatpush.bf16.xpose.msra.mxu0 %v3467
        %3477 = vmatmul.bf16.gmra.mxu0 %v3464
        %v3478 = vpop.f32.mrf.mxu0
        %v3479 = vadd.f32 0.0, %v3478
        %v3480 = vpop.f32.mrf.mxu0
        %v3481 = vadd.f32 0.0, %v3480
        %3482 = vdwg.mxu0
        %v3483 = vunpack.c.l.b16 %v1981
        %v3484 = vunpack.c.l.b16 %v1987
        %v3485 = vpack.c.b16 %v3484, %v3483
        %v3486 = vunpack.c.l.b16 %v2677
        %v3487 = vunpack.c.l.b16 %v2683
        %v3488 = vpack.c.b16 %v3487, %v3486
        %v3490 = vsel %vm3410, %v3485, 0
        %v3493 = vsel %vm3410, %v3488, 0
        %3495 = vmatpush.bf16.xpose.msra.mxu0 0
        %3496 = vmatpush.bf16.xpose.msra.mxu0 0
        %3497 = vmatpush.bf16.xpose.msra.mxu0 0
        %3498 = vmatpush.bf16.xpose.msra.mxu0 0
        %3499 = vmatpush.bf16.xpose.msra.mxu0 0
        %3500 = vmatpush.bf16.xpose.msra.mxu0 0
        %3501 = vmatpush.bf16.xpose.msra.mxu0 0
        %3502 = vmatpush.bf16.xpose.msra.mxu0 %v3493
        %3503 = vmatmul.bf16.gmra.mxu0 %v3490
        %v3504 = vpop.f32.mrf.mxu0
        %v3505 = vadd.f32 0.0, %v3504
        %v3506 = vpop.f32.mrf.mxu0
        %v3507 = vadd.f32 0.0, %v3506
        %3508 = vdwg.mxu0
        %v3509 = vunpack.c.l.b16 %v1990
        %v3510 = vunpack.c.l.b16 %v1996
        %v3511 = vpack.c.b16 %v3510, %v3509
        %v3512 = vunpack.c.l.b16 %v2686
        %v3513 = vunpack.c.l.b16 %v2692
        %v3514 = vpack.c.b16 %v3513, %v3512
        %v3516 = vsel %vm3410, %v3511, 0
        %v3519 = vsel %vm3410, %v3514, 0
        %3521 = vmatpush.bf16.xpose.msra.mxu0 0
        %3522 = vmatpush.bf16.xpose.msra.mxu0 0
        %3523 = vmatpush.bf16.xpose.msra.mxu0 0
        %3524 = vmatpush.bf16.xpose.msra.mxu0 0
        %3525 = vmatpush.bf16.xpose.msra.mxu0 0
        %3526 = vmatpush.bf16.xpose.msra.mxu0 0
        %3527 = vmatpush.bf16.xpose.msra.mxu0 0
        %3528 = vmatpush.bf16.xpose.msra.mxu0 %v3519
        %3529 = vmatmul.bf16.gmra.mxu0 %v3516
        %v3530 = vpop.f32.mrf.mxu0
        %v3531 = vadd.f32 0.0, %v3530
        %v3532 = vpop.f32.mrf.mxu0
        %v3533 = vadd.f32 0.0, %v3532
        %3534 = vdwg.mxu0
        %v3535 = vunpack.c.l.b16 %v1993
        %v3536 = vunpack.c.l.b16 %v1999
        %v3537 = vpack.c.b16 %v3536, %v3535
        %v3538 = vunpack.c.l.b16 %v2689
        %v3539 = vunpack.c.l.b16 %v2695
        %v3540 = vpack.c.b16 %v3539, %v3538
        %v3542 = vsel %vm3410, %v3537, 0
        %v3545 = vsel %vm3410, %v3540, 0
        %3547 = vmatpush.bf16.xpose.msra.mxu0 0
        %3548 = vmatpush.bf16.xpose.msra.mxu0 0
        %3549 = vmatpush.bf16.xpose.msra.mxu0 0
        %3550 = vmatpush.bf16.xpose.msra.mxu0 0
        %3551 = vmatpush.bf16.xpose.msra.mxu0 0
        %3552 = vmatpush.bf16.xpose.msra.mxu0 0
        %3553 = vmatpush.bf16.xpose.msra.mxu0 0
        %3554 = vmatpush.bf16.xpose.msra.mxu0 %v3545
        %3555 = vmatmul.bf16.gmra.mxu0 %v3542
        %v3556 = vpop.f32.mrf.mxu0
        %v3557 = vadd.f32 0.0, %v3556
        %v3558 = vpop.f32.mrf.mxu0
        %v3559 = vadd.f32 0.0, %v3558
        %3560 = vdwg.mxu0
        %v3561 = vunpack.c.l.b16 %v2002
        %v3562 = vunpack.c.l.b16 %v2008
        %v3563 = vpack.c.b16 %v3562, %v3561
        %v3564 = vunpack.c.l.b16 %v2698
        %v3565 = vunpack.c.l.b16 %v2704
        %v3566 = vpack.c.b16 %v3565, %v3564
        %v3568 = vsel %vm3410, %v3563, 0
        %v3571 = vsel %vm3410, %v3566, 0
        %3573 = vmatpush.bf16.xpose.msra.mxu0 0
        %3574 = vmatpush.bf16.xpose.msra.mxu0 0
        %3575 = vmatpush.bf16.xpose.msra.mxu0 0
        %3576 = vmatpush.bf16.xpose.msra.mxu0 0
        %3577 = vmatpush.bf16.xpose.msra.mxu0 0
        %3578 = vmatpush.bf16.xpose.msra.mxu0 0
        %3579 = vmatpush.bf16.xpose.msra.mxu0 0
        %3580 = vmatpush.bf16.xpose.msra.mxu0 %v3571
        %3581 = vmatmul.bf16.gmra.mxu0 %v3568
        %v3582 = vpop.f32.mrf.mxu0
        %v3583 = vadd.f32 0.0, %v3582
        %v3584 = vpop.f32.mrf.mxu0
        %v3585 = vadd.f32 0.0, %v3584
        %3586 = vdwg.mxu0
        %v3587 = vunpack.c.l.b16 %v2005
        %v3588 = vunpack.c.l.b16 %v2011
        %v3589 = vpack.c.b16 %v3588, %v3587
        %v3590 = vunpack.c.l.b16 %v2701
        %v3591 = vunpack.c.l.b16 %v2707
        %v3592 = vpack.c.b16 %v3591, %v3590
        %v3594 = vsel %vm3410, %v3589, 0
        %v3597 = vsel %vm3410, %v3592, 0
        %3599 = vmatpush.bf16.xpose.msra.mxu0 0
        %3600 = vmatpush.bf16.xpose.msra.mxu0 0
        %3601 = vmatpush.bf16.xpose.msra.mxu0 0
        %3602 = vmatpush.bf16.xpose.msra.mxu0 0
        %3603 = vmatpush.bf16.xpose.msra.mxu0 0
        %3604 = vmatpush.bf16.xpose.msra.mxu0 0
        %3605 = vmatpush.bf16.xpose.msra.mxu0 0
        %3606 = vmatpush.bf16.xpose.msra.mxu0 %v3597
        %3607 = vmatmul.bf16.gmra.mxu0 %v3594
        %v3608 = vpop.f32.mrf.mxu0
        %v3609 = vadd.f32 0.0, %v3608
        %v3610 = vpop.f32.mrf.mxu0
        %v3611 = vadd.f32 0.0, %v3610
        %3612 = vdwg.mxu0
        %vm3613 = vcmask 130048
        %v3614 = vsel %vm3613, %v3427, -inf
        %3615 = vmax.xlane.f32.xlu0 %v3614
        %v3616 = vpop.xlane.xlu0 %3615
        %v3617 = vsel %vm3613, %v3429, -inf
        %3618 = vmax.xlane.f32.xlu0 %v3617
        %v3619 = vpop.xlane.xlu0 %3618
        %v3620 = vsel %vm3613, %v3453, -inf
        %3621 = vmax.xlane.f32.xlu0 %v3620
        %v3622 = vpop.xlane.xlu0 %3621
        %v3623 = vsel %vm3613, %v3455, -inf
        %3624 = vmax.xlane.f32.xlu0 %v3623
        %v3625 = vpop.xlane.xlu0 %3624
        %v3626 = vsel %vm3613, %v3479, -inf
        %3627 = vmax.xlane.f32.xlu0 %v3626
        %v3628 = vpop.xlane.xlu0 %3627
        %v3629 = vsel %vm3613, %v3481, -inf
        %3630 = vmax.xlane.f32.xlu0 %v3629
        %v3631 = vpop.xlane.xlu0 %3630
        %v3632 = vsel %vm3613, %v3505, -inf
        %3633 = vmax.xlane.f32.xlu0 %v3632
        %v3634 = vpop.xlane.xlu0 %3633
        %v3635 = vsel %vm3613, %v3507, -inf
        %3636 = vmax.xlane.f32.xlu0 %v3635
        %v3637 = vpop.xlane.xlu0 %3636
        %v3638 = vsel %vm3613, %v3531, -inf
        %3639 = vmax.xlane.f32.xlu0 %v3638
        %v3640 = vpop.xlane.xlu0 %3639
        %v3641 = vsel %vm3613, %v3533, -inf
        %3642 = vmax.xlane.f32.xlu0 %v3641
        %v3643 = vpop.xlane.xlu0 %3642
        %v3644 = vsel %vm3613, %v3557, -inf
        %3645 = vmax.xlane.f32.xlu0 %v3644
        %v3646 = vpop.xlane.xlu0 %3645
        %v3647 = vsel %vm3613, %v3559, -inf
        %3648 = vmax.xlane.f32.xlu0 %v3647
        %v3649 = vpop.xlane.xlu0 %3648
        %v3650 = vsel %vm3613, %v3583, -inf
        %3651 = vmax.xlane.f32.xlu0 %v3650
        %v3652 = vpop.xlane.xlu0 %3651
        %v3653 = vsel %vm3613, %v3585, -inf
        %3654 = vmax.xlane.f32.xlu0 %v3653
        %v3655 = vpop.xlane.xlu0 %3654
        %v3656 = vsel %vm3613, %v3609, -inf
        %3657 = vmax.xlane.f32.xlu0 %v3656
        %v3658 = vpop.xlane.xlu0 %3657
        %v3659 = vsel %vm3613, %v3611, -inf
        %3660 = vmax.xlane.f32.xlu0 %v3659
        %v3661 = vpop.xlane.xlu0 %3660
        %v3662 = vsub.f32 %v3427, %v3616
        %v3663 = vsub.f32 %v3429, %v3619
        %v3664 = vsub.f32 %v3453, %v3622
        %v3665 = vsub.f32 %v3455, %v3625
        %v3666 = vsub.f32 %v3479, %v3628
        %v3667 = vsub.f32 %v3481, %v3631
        %v3668 = vsub.f32 %v3505, %v3634
        %v3669 = vsub.f32 %v3507, %v3637
        %v3670 = vsub.f32 %v3531, %v3640
        %v3671 = vsub.f32 %v3533, %v3643
        %v3672 = vsub.f32 %v3557, %v3646
        %v3673 = vsub.f32 %v3559, %v3649
        %v3674 = vsub.f32 %v3583, %v3652
        %v3675 = vsub.f32 %v3585, %v3655
        %v3676 = vsub.f32 %v3609, %v3658
        %v3677 = vsub.f32 %v3611, %v3661
        %v3678 = vmul.f32 %v3662, 1.442695
        %v3679 = vpow.pop %v3678
        %v3680 = vmul.f32 %v3663, 1.442695
        %v3681 = vpow.pop %v3680
        %v3682 = vmul.f32 %v3664, 1.442695
        %v3683 = vpow.pop %v3682
        %v3684 = vmul.f32 %v3665, 1.442695
        %v3685 = vpow.pop %v3684
        %v3686 = vmul.f32 %v3666, 1.442695
        %v3687 = vpow.pop %v3686
        %v3688 = vmul.f32 %v3667, 1.442695
        %v3689 = vpow.pop %v3688
        %v3690 = vmul.f32 %v3668, 1.442695
        %v3691 = vpow.pop %v3690
        %v3692 = vmul.f32 %v3669, 1.442695
        %v3693 = vpow.pop %v3692
        %v3694 = vmul.f32 %v3670, 1.442695
        %v3695 = vpow.pop %v3694
        %v3696 = vmul.f32 %v3671, 1.442695
        %v3697 = vpow.pop %v3696
        %v3698 = vmul.f32 %v3672, 1.442695
        %v3699 = vpow.pop %v3698
        %v3700 = vmul.f32 %v3673, 1.442695
        %v3701 = vpow.pop %v3700
        %v3702 = vmul.f32 %v3674, 1.442695
        %v3703 = vpow.pop %v3702
        %v3704 = vmul.f32 %v3675, 1.442695
        %v3705 = vpow.pop %v3704
        %v3706 = vmul.f32 %v3676, 1.442695
        %v3707 = vpow.pop %v3706
        %v3708 = vmul.f32 %v3677, 1.442695
        %v3709 = vpow.pop %v3708
        %v3710 = vsel %vm3613, %v3679, 0.0
        %3711 = vadd.xlane.f32.xlu0 %v3710
        %v3712 = vpop.xlane.xlu0 %3711
        %v3713 = vsel %vm3613, %v3681, 0.0
        %3714 = vadd.xlane.f32.xlu0 %v3713
        %v3715 = vpop.xlane.xlu0 %3714
        %v3716 = vsel %vm3613, %v3683, 0.0
        %3717 = vadd.xlane.f32.xlu0 %v3716
        %v3718 = vpop.xlane.xlu0 %3717
        %v3719 = vsel %vm3613, %v3685, 0.0
        %3720 = vadd.xlane.f32.xlu0 %v3719
        %v3721 = vpop.xlane.xlu0 %3720
        %v3722 = vsel %vm3613, %v3687, 0.0
        %3723 = vadd.xlane.f32.xlu0 %v3722
        %v3724 = vpop.xlane.xlu0 %3723
        %v3725 = vsel %vm3613, %v3689, 0.0
        %3726 = vadd.xlane.f32.xlu0 %v3725
        %v3727 = vpop.xlane.xlu0 %3726
        %v3728 = vsel %vm3613, %v3691, 0.0
        %3729 = vadd.xlane.f32.xlu0 %v3728
        %v3730 = vpop.xlane.xlu0 %3729
        %v3731 = vsel %vm3613, %v3693, 0.0
        %3732 = vadd.xlane.f32.xlu0 %v3731
        %v3733 = vpop.xlane.xlu0 %3732
        %v3734 = vsel %vm3613, %v3695, 0.0
        %3735 = vadd.xlane.f32.xlu0 %v3734
        %v3736 = vpop.xlane.xlu0 %3735
        %v3737 = vsel %vm3613, %v3697, 0.0
        %3738 = vadd.xlane.f32.xlu0 %v3737
        %v3739 = vpop.xlane.xlu0 %3738
        %v3740 = vsel %vm3613, %v3699, 0.0
        %3741 = vadd.xlane.f32.xlu0 %v3740
        %v3742 = vpop.xlane.xlu0 %3741
        %v3743 = vsel %vm3613, %v3701, 0.0
        %3744 = vadd.xlane.f32.xlu0 %v3743
        %v3745 = vpop.xlane.xlu0 %3744
        %v3746 = vsel %vm3613, %v3703, 0.0
        %3747 = vadd.xlane.f32.xlu0 %v3746
        %v3748 = vpop.xlane.xlu0 %3747
        %v3749 = vsel %vm3613, %v3705, 0.0
        %3750 = vadd.xlane.f32.xlu0 %v3749
        %v3751 = vpop.xlane.xlu0 %3750
        %v3752 = vsel %vm3613, %v3707, 0.0
        %3753 = vadd.xlane.f32.xlu0 %v3752
        %v3754 = vpop.xlane.xlu0 %3753
        %v3755 = vsel %vm3613, %v3709, 0.0
        %3756 = vadd.xlane.f32.xlu0 %v3755
        %v3757 = vpop.xlane.xlu0 %3756
        %v3758 = vrcp.pop %v3712
        %v3759 = vrcp.pop %v3715
        %v3760 = vrcp.pop %v3718
        %v3761 = vrcp.pop %v3721
        %v3762 = vrcp.pop %v3724
        %v3763 = vrcp.pop %v3727
        %v3764 = vrcp.pop %v3730
        %v3765 = vrcp.pop %v3733
        %v3766 = vrcp.pop %v3736
        %v3767 = vrcp.pop %v3739
        %v3768 = vrcp.pop %v3742
        %v3769 = vrcp.pop %v3745
        %v3770 = vrcp.pop %v3748
        %v3771 = vrcp.pop %v3751
        %v3772 = vrcp.pop %v3754
        %v3773 = vrcp.pop %v3757
        %v3774 = vmul.f32 %v3679, %v3758
        %v3775 = vmul.f32 %v3681, %v3759
        %v3776 = vmul.f32 %v3683, %v3760
        %v3777 = vmul.f32 %v3685, %v3761
        %v3778 = vmul.f32 %v3687, %v3762
        %v3779 = vmul.f32 %v3689, %v3763
        %v3780 = vmul.f32 %v3691, %v3764
        %v3781 = vmul.f32 %v3693, %v3765
        %v3782 = vmul.f32 %v3695, %v3766
        %v3783 = vmul.f32 %v3697, %v3767
        %v3784 = vmul.f32 %v3699, %v3768
        %v3785 = vmul.f32 %v3701, %v3769
        %v3786 = vmul.f32 %v3703, %v3770
        %v3787 = vmul.f32 %v3705, %v3771
        %v3788 = vmul.f32 %v3707, %v3772
        %v3789 = vmul.f32 %v3709, %v3773
        %v3790 = vpack.c.bf16 %v3774, %v3774
        %v3791 = vpack.c.bf16 %v3775, %v3775
        %v3792 = vpack.c.bf16 %v3776, %v3776
        %v3793 = vpack.c.bf16 %v3777, %v3777
        %v3794 = vpack.c.bf16 %v3778, %v3778
        %v3795 = vpack.c.bf16 %v3779, %v3779
        %v3796 = vpack.c.bf16 %v3780, %v3780
        %v3797 = vpack.c.bf16 %v3781, %v3781
        %v3798 = vpack.c.bf16 %v3782, %v3782
        %v3799 = vpack.c.bf16 %v3783, %v3783
        %v3800 = vpack.c.bf16 %v3784, %v3784
        %v3801 = vpack.c.bf16 %v3785, %v3785
        %v3802 = vpack.c.bf16 %v3786, %v3786
        %v3803 = vpack.c.bf16 %v3787, %v3787
        %v3804 = vpack.c.bf16 %v3788, %v3788
        %v3805 = vpack.c.bf16 %v3789, %v3789
        %v3808 = vunpack.c.l.b16 %v3790
        %v3809 = vunpack.c.l.b16 %v3791
        %v3810 = vpack.c.b16 %v3809, %v3808
        %v3811 = vunpack.c.l.b16 %v3358
        %v3812 = vunpack.c.l.b16 %v3364
        %v3813 = vpack.c.b16 %v3812, %v3811
        %v3816 = vsel %vm3613, %v3810, 0
        %3818 = vmatpush.bf16.msra.mxu0 0
        %3819 = vmatpush.bf16.msra.mxu0 0
        %3820 = vmatpush.bf16.msra.mxu0 0
        %3821 = vmatpush.bf16.msra.mxu0 0
        %3822 = vmatpush.bf16.msra.mxu0 0
        %3823 = vmatpush.bf16.msra.mxu0 0
        %3824 = vmatpush.bf16.msra.mxu0 0
        %3825 = vmatpush.bf16.msra.mxu0 %v3813
        %3826 = vmatmul.bf16.gmra.mxu0 %v3816
        %v3827 = vpop.f32.mrf.mxu0
        %v3828 = vadd.f32 0.0, %v3827
        %v3829 = vpop.f32.mrf.mxu0
        %v3830 = vadd.f32 0.0, %v3829
        %3831 = vdwg.mxu0
        %v3834 = vunpack.c.l.b16 %v3792
        %v3835 = vunpack.c.l.b16 %v3793
        %v3836 = vpack.c.b16 %v3835, %v3834
        %v3837 = vunpack.c.l.b16 %v3361
        %v3838 = vunpack.c.l.b16 %v3367
        %v3839 = vpack.c.b16 %v3838, %v3837
        %v3842 = vsel %vm3613, %v3836, 0
        %3844 = vmatpush.bf16.msra.mxu0 0
        %3845 = vmatpush.bf16.msra.mxu0 0
        %3846 = vmatpush.bf16.msra.mxu0 0
        %3847 = vmatpush.bf16.msra.mxu0 0
        %3848 = vmatpush.bf16.msra.mxu0 0
        %3849 = vmatpush.bf16.msra.mxu0 0
        %3850 = vmatpush.bf16.msra.mxu0 0
        %3851 = vmatpush.bf16.msra.mxu0 %v3839
        %3852 = vmatmul.bf16.gmra.mxu0 %v3842
        %v3853 = vpop.f32.mrf.mxu0
        %v3854 = vadd.f32 0.0, %v3853
        %v3855 = vpop.f32.mrf.mxu0
        %v3856 = vadd.f32 0.0, %v3855
        %3857 = vdwg.mxu0
        %v3860 = vunpack.c.l.b16 %v3794
        %v3861 = vunpack.c.l.b16 %v3795
        %v3862 = vpack.c.b16 %v3861, %v3860
        %v3863 = vunpack.c.l.b16 %v3370
        %v3864 = vunpack.c.l.b16 %v3376
        %v3865 = vpack.c.b16 %v3864, %v3863
        %v3868 = vsel %vm3613, %v3862, 0
        %3870 = vmatpush.bf16.msra.mxu0 0
        %3871 = vmatpush.bf16.msra.mxu0 0
        %3872 = vmatpush.bf16.msra.mxu0 0
        %3873 = vmatpush.bf16.msra.mxu0 0
        %3874 = vmatpush.bf16.msra.mxu0 0
        %3875 = vmatpush.bf16.msra.mxu0 0
        %3876 = vmatpush.bf16.msra.mxu0 0
        %3877 = vmatpush.bf16.msra.mxu0 %v3865
        %3878 = vmatmul.bf16.gmra.mxu0 %v3868
        %v3879 = vpop.f32.mrf.mxu0
        %v3880 = vadd.f32 0.0, %v3879
        %v3881 = vpop.f32.mrf.mxu0
        %v3882 = vadd.f32 0.0, %v3881
        %3883 = vdwg.mxu0
        %v3886 = vunpack.c.l.b16 %v3796
        %v3887 = vunpack.c.l.b16 %v3797
        %v3888 = vpack.c.b16 %v3887, %v3886
        %v3889 = vunpack.c.l.b16 %v3373
        %v3890 = vunpack.c.l.b16 %v3379
        %v3891 = vpack.c.b16 %v3890, %v3889
        %v3894 = vsel %vm3613, %v3888, 0
        %3896 = vmatpush.bf16.msra.mxu0 0
        %3897 = vmatpush.bf16.msra.mxu0 0
        %3898 = vmatpush.bf16.msra.mxu0 0
        %3899 = vmatpush.bf16.msra.mxu0 0
        %3900 = vmatpush.bf16.msra.mxu0 0
        %3901 = vmatpush.bf16.msra.mxu0 0
        %3902 = vmatpush.bf16.msra.mxu0 0
        %3903 = vmatpush.bf16.msra.mxu0 %v3891
        %3904 = vmatmul.bf16.gmra.mxu0 %v3894
        %v3905 = vpop.f32.mrf.mxu0
        %v3906 = vadd.f32 0.0, %v3905
        %v3907 = vpop.f32.mrf.mxu0
        %v3908 = vadd.f32 0.0, %v3907
        %3909 = vdwg.mxu0
        %v3912 = vunpack.c.l.b16 %v3798
        %v3913 = vunpack.c.l.b16 %v3799
        %v3914 = vpack.c.b16 %v3913, %v3912
        %v3915 = vunpack.c.l.b16 %v3382
        %v3916 = vunpack.c.l.b16 %v3388
        %v3917 = vpack.c.b16 %v3916, %v3915
        %v3920 = vsel %vm3613, %v3914, 0
        %3922 = vmatpush.bf16.msra.mxu0 0
        %3923 = vmatpush.bf16.msra.mxu0 0
        %3924 = vmatpush.bf16.msra.mxu0 0
        %3925 = vmatpush.bf16.msra.mxu0 0
        %3926 = vmatpush.bf16.msra.mxu0 0
        %3927 = vmatpush.bf16.msra.mxu0 0
        %3928 = vmatpush.bf16.msra.mxu0 0
        %3929 = vmatpush.bf16.msra.mxu0 %v3917
        %3930 = vmatmul.bf16.gmra.mxu0 %v3920
        %v3931 = vpop.f32.mrf.mxu0
        %v3932 = vadd.f32 0.0, %v3931
        %v3933 = vpop.f32.mrf.mxu0
        %v3934 = vadd.f32 0.0, %v3933
        %3935 = vdwg.mxu0
        %v3938 = vunpack.c.l.b16 %v3800
        %v3939 = vunpack.c.l.b16 %v3801
        %v3940 = vpack.c.b16 %v3939, %v3938
        %v3941 = vunpack.c.l.b16 %v3385
        %v3942 = vunpack.c.l.b16 %v3391
        %v3943 = vpack.c.b16 %v3942, %v3941
        %v3946 = vsel %vm3613, %v3940, 0
        %3948 = vmatpush.bf16.msra.mxu0 0
        %3949 = vmatpush.bf16.msra.mxu0 0
        %3950 = vmatpush.bf16.msra.mxu0 0
        %3951 = vmatpush.bf16.msra.mxu0 0
        %3952 = vmatpush.bf16.msra.mxu0 0
        %3953 = vmatpush.bf16.msra.mxu0 0
        %3954 = vmatpush.bf16.msra.mxu0 0
        %3955 = vmatpush.bf16.msra.mxu0 %v3943
        %3956 = vmatmul.bf16.gmra.mxu0 %v3946
        %v3957 = vpop.f32.mrf.mxu0
        %v3958 = vadd.f32 0.0, %v3957
        %v3959 = vpop.f32.mrf.mxu0
        %v3960 = vadd.f32 0.0, %v3959
        %3961 = vdwg.mxu0
        %v3964 = vunpack.c.l.b16 %v3802
        %v3965 = vunpack.c.l.b16 %v3803
        %v3966 = vpack.c.b16 %v3965, %v3964
        %v3967 = vunpack.c.l.b16 %v3394
        %v3968 = vunpack.c.l.b16 %v3400
        %v3969 = vpack.c.b16 %v3968, %v3967
        %v3972 = vsel %vm3613, %v3966, 0
        %3974 = vmatpush.bf16.msra.mxu0 0
        %3975 = vmatpush.bf16.msra.mxu0 0
        %3976 = vmatpush.bf16.msra.mxu0 0
        %3977 = vmatpush.bf16.msra.mxu0 0
        %3978 = vmatpush.bf16.msra.mxu0 0
        %3979 = vmatpush.bf16.msra.mxu0 0
        %3980 = vmatpush.bf16.msra.mxu0 0
        %3981 = vmatpush.bf16.msra.mxu0 %v3969
        %3982 = vmatmul.bf16.gmra.mxu0 %v3972
        %v3983 = vpop.f32.mrf.mxu0
        %v3984 = vadd.f32 0.0, %v3983
        %v3985 = vpop.f32.mrf.mxu0
        %v3986 = vadd.f32 0.0, %v3985
        %3987 = vdwg.mxu0
        %v3990 = vunpack.c.l.b16 %v3804
        %v3991 = vunpack.c.l.b16 %v3805
        %v3992 = vpack.c.b16 %v3991, %v3990
        %v3993 = vunpack.c.l.b16 %v3397
        %v3994 = vunpack.c.l.b16 %v3403
        %v3995 = vpack.c.b16 %v3994, %v3993
        %v3998 = vsel %vm3613, %v3992, 0
        %4000 = vmatpush.bf16.msra.mxu0 0
        %4001 = vmatpush.bf16.msra.mxu0 0
        %4002 = vmatpush.bf16.msra.mxu0 0
        %4003 = vmatpush.bf16.msra.mxu0 0
        %4004 = vmatpush.bf16.msra.mxu0 0
        %4005 = vmatpush.bf16.msra.mxu0 0
        %4006 = vmatpush.bf16.msra.mxu0 0
        %4007 = vmatpush.bf16.msra.mxu0 %v3995
        %4008 = vmatmul.bf16.gmra.mxu0 %v3998
        %v4009 = vpop.f32.mrf.mxu0
        %v4010 = vadd.f32 0.0, %v4009
        %v4011 = vpop.f32.mrf.mxu0
        %v4012 = vadd.f32 0.0, %v4011
        %4013 = vdwg.mxu0
        %v4014 = vrot.slane %v3828, 4
        %vm4015 = vcmask 1047556
        %v4016 = vsel %vm4015, 0.0, %v4014
        %v4018 = vunpack.c.l.s4 1983009808
        %v4019 = vunpack.c.0.s8 %v4018
        %v4020 = vperm.slane %v3828, %v4019
        %v4022 = vunpack.c.l.s4 1983009808
        %v4023 = vunpack.c.0.s8 %v4022
        %v4024 = vperm.slane %v4016, %v4023
        %v4025 = vrot.slane %v3854, 4
        %v4026 = vsel %vm4015, 0.0, %v4025
        %v4028 = vunpack.c.l.s4 1983009808
        %v4029 = vunpack.c.0.s8 %v4028
        %v4030 = vperm.slane %v3854, %v4029
        %v4032 = vunpack.c.l.s4 1983009808
        %v4033 = vunpack.c.0.s8 %v4032
        %v4034 = vperm.slane %v4026, %v4033
        %v4035 = vrot.slane %v4030, 4
        %v4036 = vsel %vm4015, %v4035, %v4020
        %v4037 = vrot.slane %v4020, 4
        %v4038 = vsel %vm4015, %v4030, %v4037
        %v4040 = vunpack.c.l.s4 1934713408
        %v4041 = vunpack.c.0.s8 %v4040
        %v4042 = vperm.slane %v4036, %v4041
        %v4044 = vunpack.c.l.s4 1934713408
        %v4045 = vunpack.c.0.s8 %v4044
        %v4046 = vperm.slane %v4038, %v4045
        %v4047 = vrot.slane %v4034, 4
        %v4048 = vsel %vm4015, %v4047, %v4024
        %v4049 = vrot.slane %v4024, 4
        %v4050 = vsel %vm4015, %v4034, %v4049
        %v4052 = vunpack.c.l.s4 1934713408
        %v4053 = vunpack.c.0.s8 %v4052
        %v4054 = vperm.slane %v4048, %v4053
        %v4056 = vunpack.c.l.s4 1934713408
        %v4057 = vunpack.c.0.s8 %v4056
        %v4058 = vperm.slane %v4050, %v4057
        %v4059 = vrot.slane %v4042, 4
        %v4060 = vsel %vm4015, 0.0, %v4059
        %v4061 = vrot.slane %v4046, 4
        %v4062 = vsel %vm4015, 0.0, %v4061
        %v4063 = vrot.slane %v4054, 4
        %v4064 = vsel %vm4015, 0.0, %v4063
        %v4065 = vrot.slane %v4058, 4
        %v4066 = vsel %vm4015, 0.0, %v4065
        %v4067 = vrot.slane %v3830, 4
        %v4068 = vsel %vm4015, 0.0, %v4067
        %v4070 = vunpack.c.l.s4 1983009808
        %v4071 = vunpack.c.0.s8 %v4070
        %v4072 = vperm.slane %v3830, %v4071
        %v4074 = vunpack.c.l.s4 1983009808
        %v4075 = vunpack.c.0.s8 %v4074
        %v4076 = vperm.slane %v4068, %v4075
        %v4077 = vrot.slane %v3856, 4
        %v4078 = vsel %vm4015, 0.0, %v4077
        %v4080 = vunpack.c.l.s4 1983009808
        %v4081 = vunpack.c.0.s8 %v4080
        %v4082 = vperm.slane %v3856, %v4081
        %v4084 = vunpack.c.l.s4 1983009808
        %v4085 = vunpack.c.0.s8 %v4084
        %v4086 = vperm.slane %v4078, %v4085
        %v4087 = vrot.slane %v4082, 4
        %v4088 = vsel %vm4015, %v4087, %v4072
        %v4089 = vrot.slane %v4072, 4
        %v4090 = vsel %vm4015, %v4082, %v4089
        %v4092 = vunpack.c.l.s4 1934713408
        %v4093 = vunpack.c.0.s8 %v4092
        %v4094 = vperm.slane %v4088, %v4093
        %v4096 = vunpack.c.l.s4 1934713408
        %v4097 = vunpack.c.0.s8 %v4096
        %v4098 = vperm.slane %v4090, %v4097
        %v4099 = vrot.slane %v4086, 4
        %v4100 = vsel %vm4015, %v4099, %v4076
        %v4101 = vrot.slane %v4076, 4
        %v4102 = vsel %vm4015, %v4086, %v4101
        %v4104 = vunpack.c.l.s4 1934713408
        %v4105 = vunpack.c.0.s8 %v4104
        %v4106 = vperm.slane %v4100, %v4105
        %v4108 = vunpack.c.l.s4 1934713408
        %v4109 = vunpack.c.0.s8 %v4108
        %v4110 = vperm.slane %v4102, %v4109
        %v4111 = vrot.slane %v4094, 4
        %v4112 = vsel %vm4015, 0.0, %v4111
        %v4113 = vrot.slane %v4098, 4
        %v4114 = vsel %vm4015, 0.0, %v4113
        %v4115 = vrot.slane %v4106, 4
        %v4116 = vsel %vm4015, 0.0, %v4115
        %v4117 = vrot.slane %v4110, 4
        %v4118 = vsel %vm4015, 0.0, %v4117
        %v4119 = vrot.slane %v3880, 4
        %v4120 = vsel %vm4015, 0.0, %v4119
        %v4122 = vunpack.c.l.s4 1983009808
        %v4123 = vunpack.c.0.s8 %v4122
        %v4124 = vperm.slane %v3880, %v4123
        %v4126 = vunpack.c.l.s4 1983009808
        %v4127 = vunpack.c.0.s8 %v4126
        %v4128 = vperm.slane %v4120, %v4127
        %v4129 = vrot.slane %v3906, 4
        %v4130 = vsel %vm4015, 0.0, %v4129
        %v4132 = vunpack.c.l.s4 1983009808
        %v4133 = vunpack.c.0.s8 %v4132
        %v4134 = vperm.slane %v3906, %v4133
        %v4136 = vunpack.c.l.s4 1983009808
        %v4137 = vunpack.c.0.s8 %v4136
        %v4138 = vperm.slane %v4130, %v4137
        %v4139 = vrot.slane %v4134, 4
        %v4140 = vsel %vm4015, %v4139, %v4124
        %v4141 = vrot.slane %v4124, 4
        %v4142 = vsel %vm4015, %v4134, %v4141
        %v4144 = vunpack.c.l.s4 1934713408
        %v4145 = vunpack.c.0.s8 %v4144
        %v4146 = vperm.slane %v4140, %v4145
        %v4148 = vunpack.c.l.s4 1934713408
        %v4149 = vunpack.c.0.s8 %v4148
        %v4150 = vperm.slane %v4142, %v4149
        %v4151 = vrot.slane %v4138, 4
        %v4152 = vsel %vm4015, %v4151, %v4128
        %v4153 = vrot.slane %v4128, 4
        %v4154 = vsel %vm4015, %v4138, %v4153
        %v4156 = vunpack.c.l.s4 1934713408
        %v4157 = vunpack.c.0.s8 %v4156
        %v4158 = vperm.slane %v4152, %v4157
        %v4160 = vunpack.c.l.s4 1934713408
        %v4161 = vunpack.c.0.s8 %v4160
        %v4162 = vperm.slane %v4154, %v4161
        %v4163 = vrot.slane %v4146, 4
        %v4164 = vsel %vm4015, 0.0, %v4163
        %v4165 = vrot.slane %v4150, 4
        %v4166 = vsel %vm4015, 0.0, %v4165
        %v4167 = vrot.slane %v4158, 4
        %v4168 = vsel %vm4015, 0.0, %v4167
        %v4169 = vrot.slane %v4162, 4
        %v4170 = vsel %vm4015, 0.0, %v4169
        %v4171 = vrot.slane %v3882, 4
        %v4172 = vsel %vm4015, 0.0, %v4171
        %v4174 = vunpack.c.l.s4 1983009808
        %v4175 = vunpack.c.0.s8 %v4174
        %v4176 = vperm.slane %v3882, %v4175
        %v4178 = vunpack.c.l.s4 1983009808
        %v4179 = vunpack.c.0.s8 %v4178
        %v4180 = vperm.slane %v4172, %v4179
        %v4181 = vrot.slane %v3908, 4
        %v4182 = vsel %vm4015, 0.0, %v4181
        %v4184 = vunpack.c.l.s4 1983009808
        %v4185 = vunpack.c.0.s8 %v4184
        %v4186 = vperm.slane %v3908, %v4185
        %v4188 = vunpack.c.l.s4 1983009808
        %v4189 = vunpack.c.0.s8 %v4188
        %v4190 = vperm.slane %v4182, %v4189
        %v4191 = vrot.slane %v4186, 4
        %v4192 = vsel %vm4015, %v4191, %v4176
        %v4193 = vrot.slane %v4176, 4
        %v4194 = vsel %vm4015, %v4186, %v4193
        %v4196 = vunpack.c.l.s4 1934713408
        %v4197 = vunpack.c.0.s8 %v4196
        %v4198 = vperm.slane %v4192, %v4197
        %v4200 = vunpack.c.l.s4 1934713408
        %v4201 = vunpack.c.0.s8 %v4200
        %v4202 = vperm.slane %v4194, %v4201
        %v4203 = vrot.slane %v4190, 4
        %v4204 = vsel %vm4015, %v4203, %v4180
        %v4205 = vrot.slane %v4180, 4
        %v4206 = vsel %vm4015, %v4190, %v4205
        %v4208 = vunpack.c.l.s4 1934713408
        %v4209 = vunpack.c.0.s8 %v4208
        %v4210 = vperm.slane %v4204, %v4209
        %v4212 = vunpack.c.l.s4 1934713408
        %v4213 = vunpack.c.0.s8 %v4212
        %v4214 = vperm.slane %v4206, %v4213
        %v4215 = vrot.slane %v4198, 4
        %v4216 = vsel %vm4015, 0.0, %v4215
        %v4217 = vrot.slane %v4202, 4
        %v4218 = vsel %vm4015, 0.0, %v4217
        %v4219 = vrot.slane %v4210, 4
        %v4220 = vsel %vm4015, 0.0, %v4219
        %v4221 = vrot.slane %v4214, 4
        %v4222 = vsel %vm4015, 0.0, %v4221
        %v4223 = vrot.slane %v3932, 4
        %v4224 = vsel %vm4015, 0.0, %v4223
        %v4226 = vunpack.c.l.s4 1983009808
        %v4227 = vunpack.c.0.s8 %v4226
        %v4228 = vperm.slane %v3932, %v4227
        %v4230 = vunpack.c.l.s4 1983009808
        %v4231 = vunpack.c.0.s8 %v4230
        %v4232 = vperm.slane %v4224, %v4231
        %v4233 = vrot.slane %v3958, 4
        %v4234 = vsel %vm4015, 0.0, %v4233
        %v4236 = vunpack.c.l.s4 1983009808
        %v4237 = vunpack.c.0.s8 %v4236
        %v4238 = vperm.slane %v3958, %v4237
        %v4240 = vunpack.c.l.s4 1983009808
        %v4241 = vunpack.c.0.s8 %v4240
        %v4242 = vperm.slane %v4234, %v4241
        %v4243 = vrot.slane %v4238, 4
        %v4244 = vsel %vm4015, %v4243, %v4228
        %v4245 = vrot.slane %v4228, 4
        %v4246 = vsel %vm4015, %v4238, %v4245
        %v4248 = vunpack.c.l.s4 1934713408
        %v4249 = vunpack.c.0.s8 %v4248
        %v4250 = vperm.slane %v4244, %v4249
        %v4252 = vunpack.c.l.s4 1934713408
        %v4253 = vunpack.c.0.s8 %v4252
        %v4254 = vperm.slane %v4246, %v4253
        %v4255 = vrot.slane %v4242, 4
        %v4256 = vsel %vm4015, %v4255, %v4232
        %v4257 = vrot.slane %v4232, 4
        %v4258 = vsel %vm4015, %v4242, %v4257
        %v4260 = vunpack.c.l.s4 1934713408
        %v4261 = vunpack.c.0.s8 %v4260
        %v4262 = vperm.slane %v4256, %v4261
        %v4264 = vunpack.c.l.s4 1934713408
        %v4265 = vunpack.c.0.s8 %v4264
        %v4266 = vperm.slane %v4258, %v4265
        %v4267 = vrot.slane %v4250, 4
        %v4268 = vsel %vm4015, 0.0, %v4267
        %v4269 = vrot.slane %v4254, 4
        %v4270 = vsel %vm4015, 0.0, %v4269
        %v4271 = vrot.slane %v4262, 4
        %v4272 = vsel %vm4015, 0.0, %v4271
        %v4273 = vrot.slane %v4266, 4
        %v4274 = vsel %vm4015, 0.0, %v4273
        %v4275 = vrot.slane %v3934, 4
        %v4276 = vsel %vm4015, 0.0, %v4275
        %v4278 = vunpack.c.l.s4 1983009808
        %v4279 = vunpack.c.0.s8 %v4278
        %v4280 = vperm.slane %v3934, %v4279
        %v4282 = vunpack.c.l.s4 1983009808
        %v4283 = vunpack.c.0.s8 %v4282
        %v4284 = vperm.slane %v4276, %v4283
        %v4285 = vrot.slane %v3960, 4
        %v4286 = vsel %vm4015, 0.0, %v4285
        %v4288 = vunpack.c.l.s4 1983009808
        %v4289 = vunpack.c.0.s8 %v4288
        %v4290 = vperm.slane %v3960, %v4289
        %v4292 = vunpack.c.l.s4 1983009808
        %v4293 = vunpack.c.0.s8 %v4292
        %v4294 = vperm.slane %v4286, %v4293
        %v4295 = vrot.slane %v4290, 4
        %v4296 = vsel %vm4015, %v4295, %v4280
        %v4297 = vrot.slane %v4280, 4
        %v4298 = vsel %vm4015, %v4290, %v4297
        %v4300 = vunpack.c.l.s4 1934713408
        %v4301 = vunpack.c.0.s8 %v4300
        %v4302 = vperm.slane %v4296, %v4301
        %v4304 = vunpack.c.l.s4 1934713408
        %v4305 = vunpack.c.0.s8 %v4304
        %v4306 = vperm.slane %v4298, %v4305
        %v4307 = vrot.slane %v4294, 4
        %v4308 = vsel %vm4015, %v4307, %v4284
        %v4309 = vrot.slane %v4284, 4
        %v4310 = vsel %vm4015, %v4294, %v4309
        %v4312 = vunpack.c.l.s4 1934713408
        %v4313 = vunpack.c.0.s8 %v4312
        %v4314 = vperm.slane %v4308, %v4313
        %v4316 = vunpack.c.l.s4 1934713408
        %v4317 = vunpack.c.0.s8 %v4316
        %v4318 = vperm.slane %v4310, %v4317
        %v4319 = vrot.slane %v4302, 4
        %v4320 = vsel %vm4015, 0.0, %v4319
        %v4321 = vrot.slane %v4306, 4
        %v4322 = vsel %vm4015, 0.0, %v4321
        %v4323 = vrot.slane %v4314, 4
        %v4324 = vsel %vm4015, 0.0, %v4323
        %v4325 = vrot.slane %v4318, 4
        %v4326 = vsel %vm4015, 0.0, %v4325
        %v4327 = vrot.slane %v3984, 4
        %v4328 = vsel %vm4015, 0.0, %v4327
        %v4330 = vunpack.c.l.s4 1983009808
        %v4331 = vunpack.c.0.s8 %v4330
        %v4332 = vperm.slane %v3984, %v4331
        %v4334 = vunpack.c.l.s4 1983009808
        %v4335 = vunpack.c.0.s8 %v4334
        %v4336 = vperm.slane %v4328, %v4335
        %v4337 = vrot.slane %v4010, 4
        %v4338 = vsel %vm4015, 0.0, %v4337
        %v4340 = vunpack.c.l.s4 1983009808
        %v4341 = vunpack.c.0.s8 %v4340
        %v4342 = vperm.slane %v4010, %v4341
        %v4344 = vunpack.c.l.s4 1983009808
        %v4345 = vunpack.c.0.s8 %v4344
        %v4346 = vperm.slane %v4338, %v4345
        %v4347 = vrot.slane %v4342, 4
        %v4348 = vsel %vm4015, %v4347, %v4332
        %v4349 = vrot.slane %v4332, 4
        %v4350 = vsel %vm4015, %v4342, %v4349
        %v4352 = vunpack.c.l.s4 1934713408
        %v4353 = vunpack.c.0.s8 %v4352
        %v4354 = vperm.slane %v4348, %v4353
        %v4356 = vunpack.c.l.s4 1934713408
        %v4357 = vunpack.c.0.s8 %v4356
        %v4358 = vperm.slane %v4350, %v4357
        %v4359 = vrot.slane %v4346, 4
        %v4360 = vsel %vm4015, %v4359, %v4336
        %v4361 = vrot.slane %v4336, 4
        %v4362 = vsel %vm4015, %v4346, %v4361
        %v4364 = vunpack.c.l.s4 1934713408
        %v4365 = vunpack.c.0.s8 %v4364
        %v4366 = vperm.slane %v4360, %v4365
        %v4368 = vunpack.c.l.s4 1934713408
        %v4369 = vunpack.c.0.s8 %v4368
        %v4370 = vperm.slane %v4362, %v4369
        %v4371 = vrot.slane %v4354, 4
        %v4372 = vsel %vm4015, 0.0, %v4371
        %v4373 = vrot.slane %v4358, 4
        %v4374 = vsel %vm4015, 0.0, %v4373
        %v4375 = vrot.slane %v4366, 4
        %v4376 = vsel %vm4015, 0.0, %v4375
        %v4377 = vrot.slane %v4370, 4
        %v4378 = vsel %vm4015, 0.0, %v4377
        %v4379 = vrot.slane %v3986, 4
        %v4380 = vsel %vm4015, 0.0, %v4379
        %v4382 = vunpack.c.l.s4 1983009808
        %v4383 = vunpack.c.0.s8 %v4382
        %v4384 = vperm.slane %v3986, %v4383
        %v4386 = vunpack.c.l.s4 1983009808
        %v4387 = vunpack.c.0.s8 %v4386
        %v4388 = vperm.slane %v4380, %v4387
        %v4389 = vrot.slane %v4012, 4
        %v4390 = vsel %vm4015, 0.0, %v4389
        %v4392 = vunpack.c.l.s4 1983009808
        %v4393 = vunpack.c.0.s8 %v4392
        %v4394 = vperm.slane %v4012, %v4393
        %v4396 = vunpack.c.l.s4 1983009808
        %v4397 = vunpack.c.0.s8 %v4396
        %v4398 = vperm.slane %v4390, %v4397
        %v4399 = vrot.slane %v4394, 4
        %v4400 = vsel %vm4015, %v4399, %v4384
        %v4401 = vrot.slane %v4384, 4
        %v4402 = vsel %vm4015, %v4394, %v4401
        %v4404 = vunpack.c.l.s4 1934713408
        %v4405 = vunpack.c.0.s8 %v4404
        %v4406 = vperm.slane %v4400, %v4405
        %v4408 = vunpack.c.l.s4 1934713408
        %v4409 = vunpack.c.0.s8 %v4408
        %v4410 = vperm.slane %v4402, %v4409
        %v4411 = vrot.slane %v4398, 4
        %v4412 = vsel %vm4015, %v4411, %v4388
        %v4413 = vrot.slane %v4388, 4
        %v4414 = vsel %vm4015, %v4398, %v4413
        %v4416 = vunpack.c.l.s4 1934713408
        %v4417 = vunpack.c.0.s8 %v4416
        %v4418 = vperm.slane %v4412, %v4417
        %v4420 = vunpack.c.l.s4 1934713408
        %v4421 = vunpack.c.0.s8 %v4420
        %v4422 = vperm.slane %v4414, %v4421
        %v4423 = vrot.slane %v4406, 4
        %v4424 = vsel %vm4015, 0.0, %v4423
        %v4425 = vrot.slane %v4410, 4
        %v4426 = vsel %vm4015, 0.0, %v4425
        %v4427 = vrot.slane %v4418, 4
        %v4428 = vsel %vm4015, 0.0, %v4427
        %v4429 = vrot.slane %v4422, 4
        %v4430 = vsel %vm4015, 0.0, %v4429
        %v4431 = vsel %vm4015, %v4061, %v4042
        %v4433 = vunpack.c.l.s4 1983009808
        %v4434 = vunpack.c.0.s8 %v4433
        %v4435 = vperm.slane %v4431, %v4434
        %v4436 = vrot.slane %v4062, 4
        %v4437 = vsel %vm4015, %v4436, %v4060
        %v4439 = vunpack.c.l.s4 1983009808
        %v4440 = vunpack.c.0.s8 %v4439
        %v4441 = vperm.slane %v4437, %v4440
        %v4442 = vsel %vm4015, %v4065, %v4054
        %v4444 = vunpack.c.l.s4 1983009808
        %v4445 = vunpack.c.0.s8 %v4444
        %v4446 = vperm.slane %v4442, %v4445
        %v4447 = vrot.slane %v4066, 4
        %v4448 = vsel %vm4015, %v4447, %v4064
        %v4450 = vunpack.c.l.s4 1983009808
        %v4451 = vunpack.c.0.s8 %v4450
        %v4452 = vperm.slane %v4448, %v4451
        %v4453 = vrot.slane %v4441, 4
        %v4454 = vsel %vm4015, %v4453, %v4435
        %v4456 = vunpack.c.l.s4 1934713408
        %v4457 = vunpack.c.0.s8 %v4456
        %v4458 = vperm.slane %v4454, %v4457
        %v4459 = vrot.slane %v4452, 4
        %v4460 = vsel %vm4015, %v4459, %v4446
        %v4462 = vunpack.c.l.s4 1934713408
        %v4463 = vunpack.c.0.s8 %v4462
        %v4464 = vperm.slane %v4460, %v4463
        %v4465 = vrot.slane %v4464, 4
        %v4466 = vsel %vm4015, %v4465, %v4458
        %v4467 = vrot.slane %v4458, 4
        %v4468 = vsel %vm4015, %v4464, %v4467
        %v4469 = vsel %vm4015, %v4113, %v4094
        %v4471 = vunpack.c.l.s4 1983009808
        %v4472 = vunpack.c.0.s8 %v4471
        %v4473 = vperm.slane %v4469, %v4472
        %v4474 = vrot.slane %v4114, 4
        %v4475 = vsel %vm4015, %v4474, %v4112
        %v4477 = vunpack.c.l.s4 1983009808
        %v4478 = vunpack.c.0.s8 %v4477
        %v4479 = vperm.slane %v4475, %v4478
        %v4480 = vsel %vm4015, %v4117, %v4106
        %v4482 = vunpack.c.l.s4 1983009808
        %v4483 = vunpack.c.0.s8 %v4482
        %v4484 = vperm.slane %v4480, %v4483
        %v4485 = vrot.slane %v4118, 4
        %v4486 = vsel %vm4015, %v4485, %v4116
        %v4488 = vunpack.c.l.s4 1983009808
        %v4489 = vunpack.c.0.s8 %v4488
        %v4490 = vperm.slane %v4486, %v4489
        %v4491 = vrot.slane %v4479, 4
        %v4492 = vsel %vm4015, %v4491, %v4473
        %v4494 = vunpack.c.l.s4 1934713408
        %v4495 = vunpack.c.0.s8 %v4494
        %v4496 = vperm.slane %v4492, %v4495
        %v4497 = vrot.slane %v4490, 4
        %v4498 = vsel %vm4015, %v4497, %v4484
        %v4500 = vunpack.c.l.s4 1934713408
        %v4501 = vunpack.c.0.s8 %v4500
        %v4502 = vperm.slane %v4498, %v4501
        %v4503 = vrot.slane %v4502, 4
        %v4504 = vsel %vm4015, %v4503, %v4496
        %v4505 = vrot.slane %v4496, 4
        %v4506 = vsel %vm4015, %v4502, %v4505
        %v4507 = vsel %vm4015, %v4165, %v4146
        %v4509 = vunpack.c.l.s4 1983009808
        %v4510 = vunpack.c.0.s8 %v4509
        %v4511 = vperm.slane %v4507, %v4510
        %v4512 = vrot.slane %v4166, 4
        %v4513 = vsel %vm4015, %v4512, %v4164
        %v4515 = vunpack.c.l.s4 1983009808
        %v4516 = vunpack.c.0.s8 %v4515
        %v4517 = vperm.slane %v4513, %v4516
        %v4518 = vsel %vm4015, %v4169, %v4158
        %v4520 = vunpack.c.l.s4 1983009808
        %v4521 = vunpack.c.0.s8 %v4520
        %v4522 = vperm.slane %v4518, %v4521
        %v4523 = vrot.slane %v4170, 4
        %v4524 = vsel %vm4015, %v4523, %v4168
        %v4526 = vunpack.c.l.s4 1983009808
        %v4527 = vunpack.c.0.s8 %v4526
        %v4528 = vperm.slane %v4524, %v4527
        %v4529 = vrot.slane %v4517, 4
        %v4530 = vsel %vm4015, %v4529, %v4511
        %v4532 = vunpack.c.l.s4 1934713408
        %v4533 = vunpack.c.0.s8 %v4532
        %v4534 = vperm.slane %v4530, %v4533
        %v4535 = vrot.slane %v4528, 4
        %v4536 = vsel %vm4015, %v4535, %v4522
        %v4538 = vunpack.c.l.s4 1934713408
        %v4539 = vunpack.c.0.s8 %v4538
        %v4540 = vperm.slane %v4536, %v4539
        %v4541 = vrot.slane %v4540, 4
        %v4542 = vsel %vm4015, %v4541, %v4534
        %v4543 = vrot.slane %v4534, 4
        %v4544 = vsel %vm4015, %v4540, %v4543
        %v4545 = vsel %vm4015, %v4217, %v4198
        %v4547 = vunpack.c.l.s4 1983009808
        %v4548 = vunpack.c.0.s8 %v4547
        %v4549 = vperm.slane %v4545, %v4548
        %v4550 = vrot.slane %v4218, 4
        %v4551 = vsel %vm4015, %v4550, %v4216
        %v4553 = vunpack.c.l.s4 1983009808
        %v4554 = vunpack.c.0.s8 %v4553
        %v4555 = vperm.slane %v4551, %v4554
        %v4556 = vsel %vm4015, %v4221, %v4210
        %v4558 = vunpack.c.l.s4 1983009808
        %v4559 = vunpack.c.0.s8 %v4558
        %v4560 = vperm.slane %v4556, %v4559
        %v4561 = vrot.slane %v4222, 4
        %v4562 = vsel %vm4015, %v4561, %v4220
        %v4564 = vunpack.c.l.s4 1983009808
        %v4565 = vunpack.c.0.s8 %v4564
        %v4566 = vperm.slane %v4562, %v4565
        %v4567 = vrot.slane %v4555, 4
        %v4568 = vsel %vm4015, %v4567, %v4549
        %v4570 = vunpack.c.l.s4 1934713408
        %v4571 = vunpack.c.0.s8 %v4570
        %v4572 = vperm.slane %v4568, %v4571
        %v4573 = vrot.slane %v4566, 4
        %v4574 = vsel %vm4015, %v4573, %v4560
        %v4576 = vunpack.c.l.s4 1934713408
        %v4577 = vunpack.c.0.s8 %v4576
        %v4578 = vperm.slane %v4574, %v4577
        %v4579 = vrot.slane %v4578, 4
        %v4580 = vsel %vm4015, %v4579, %v4572
        %v4581 = vrot.slane %v4572, 4
        %v4582 = vsel %vm4015, %v4578, %v4581
        %v4583 = vsel %vm4015, %v4269, %v4250
        %v4585 = vunpack.c.l.s4 1983009808
        %v4586 = vunpack.c.0.s8 %v4585
        %v4587 = vperm.slane %v4583, %v4586
        %v4588 = vrot.slane %v4270, 4
        %v4589 = vsel %vm4015, %v4588, %v4268
        %v4591 = vunpack.c.l.s4 1983009808
        %v4592 = vunpack.c.0.s8 %v4591
        %v4593 = vperm.slane %v4589, %v4592
        %v4594 = vsel %vm4015, %v4273, %v4262
        %v4596 = vunpack.c.l.s4 1983009808
        %v4597 = vunpack.c.0.s8 %v4596
        %v4598 = vperm.slane %v4594, %v4597
        %v4599 = vrot.slane %v4274, 4
        %v4600 = vsel %vm4015, %v4599, %v4272
        %v4602 = vunpack.c.l.s4 1983009808
        %v4603 = vunpack.c.0.s8 %v4602
        %v4604 = vperm.slane %v4600, %v4603
        %v4605 = vrot.slane %v4593, 4
        %v4606 = vsel %vm4015, %v4605, %v4587
        %v4608 = vunpack.c.l.s4 1934713408
        %v4609 = vunpack.c.0.s8 %v4608
        %v4610 = vperm.slane %v4606, %v4609
        %v4611 = vrot.slane %v4604, 4
        %v4612 = vsel %vm4015, %v4611, %v4598
        %v4614 = vunpack.c.l.s4 1934713408
        %v4615 = vunpack.c.0.s8 %v4614
        %v4616 = vperm.slane %v4612, %v4615
        %v4617 = vrot.slane %v4616, 4
        %v4618 = vsel %vm4015, %v4617, %v4610
        %v4619 = vrot.slane %v4610, 4
        %v4620 = vsel %vm4015, %v4616, %v4619
        %v4621 = vsel %vm4015, %v4321, %v4302
        %v4623 = vunpack.c.l.s4 1983009808
        %v4624 = vunpack.c.0.s8 %v4623
        %v4625 = vperm.slane %v4621, %v4624
        %v4626 = vrot.slane %v4322, 4
        %v4627 = vsel %vm4015, %v4626, %v4320
        %v4629 = vunpack.c.l.s4 1983009808
        %v4630 = vunpack.c.0.s8 %v4629
        %v4631 = vperm.slane %v4627, %v4630
        %v4632 = vsel %vm4015, %v4325, %v4314
        %v4634 = vunpack.c.l.s4 1983009808
        %v4635 = vunpack.c.0.s8 %v4634
        %v4636 = vperm.slane %v4632, %v4635
        %v4637 = vrot.slane %v4326, 4
        %v4638 = vsel %vm4015, %v4637, %v4324
        %v4640 = vunpack.c.l.s4 1983009808
        %v4641 = vunpack.c.0.s8 %v4640
        %v4642 = vperm.slane %v4638, %v4641
        %v4643 = vrot.slane %v4631, 4
        %v4644 = vsel %vm4015, %v4643, %v4625
        %v4646 = vunpack.c.l.s4 1934713408
        %v4647 = vunpack.c.0.s8 %v4646
        %v4648 = vperm.slane %v4644, %v4647
        %v4649 = vrot.slane %v4642, 4
        %v4650 = vsel %vm4015, %v4649, %v4636
        %v4652 = vunpack.c.l.s4 1934713408
        %v4653 = vunpack.c.0.s8 %v4652
        %v4654 = vperm.slane %v4650, %v4653
        %v4655 = vrot.slane %v4654, 4
        %v4656 = vsel %vm4015, %v4655, %v4648
        %v4657 = vrot.slane %v4648, 4
        %v4658 = vsel %vm4015, %v4654, %v4657
        %v4659 = vsel %vm4015, %v4373, %v4354
        %v4661 = vunpack.c.l.s4 1983009808
        %v4662 = vunpack.c.0.s8 %v4661
        %v4663 = vperm.slane %v4659, %v4662
        %v4664 = vrot.slane %v4374, 4
        %v4665 = vsel %vm4015, %v4664, %v4372
        %v4667 = vunpack.c.l.s4 1983009808
        %v4668 = vunpack.c.0.s8 %v4667
        %v4669 = vperm.slane %v4665, %v4668
        %v4670 = vsel %vm4015, %v4377, %v4366
        %v4672 = vunpack.c.l.s4 1983009808
        %v4673 = vunpack.c.0.s8 %v4672
        %v4674 = vperm.slane %v4670, %v4673
        %v4675 = vrot.slane %v4378, 4
        %v4676 = vsel %vm4015, %v4675, %v4376
        %v4678 = vunpack.c.l.s4 1983009808
        %v4679 = vunpack.c.0.s8 %v4678
        %v4680 = vperm.slane %v4676, %v4679
        %v4681 = vrot.slane %v4669, 4
        %v4682 = vsel %vm4015, %v4681, %v4663
        %v4684 = vunpack.c.l.s4 1934713408
        %v4685 = vunpack.c.0.s8 %v4684
        %v4686 = vperm.slane %v4682, %v4685
        %v4687 = vrot.slane %v4680, 4
        %v4688 = vsel %vm4015, %v4687, %v4674
        %v4690 = vunpack.c.l.s4 1934713408
        %v4691 = vunpack.c.0.s8 %v4690
        %v4692 = vperm.slane %v4688, %v4691
        %v4693 = vrot.slane %v4692, 4
        %v4694 = vsel %vm4015, %v4693, %v4686
        %v4695 = vrot.slane %v4686, 4
        %v4696 = vsel %vm4015, %v4692, %v4695
        %v4697 = vsel %vm4015, %v4425, %v4406
        %v4699 = vunpack.c.l.s4 1983009808
        %v4700 = vunpack.c.0.s8 %v4699
        %v4701 = vperm.slane %v4697, %v4700
        %v4702 = vrot.slane %v4426, 4
        %v4703 = vsel %vm4015, %v4702, %v4424
        %v4705 = vunpack.c.l.s4 1983009808
        %v4706 = vunpack.c.0.s8 %v4705
        %v4707 = vperm.slane %v4703, %v4706
        %v4708 = vsel %vm4015, %v4429, %v4418
        %v4710 = vunpack.c.l.s4 1983009808
        %v4711 = vunpack.c.0.s8 %v4710
        %v4712 = vperm.slane %v4708, %v4711
        %v4713 = vrot.slane %v4430, 4
        %v4714 = vsel %vm4015, %v4713, %v4428
        %v4716 = vunpack.c.l.s4 1983009808
        %v4717 = vunpack.c.0.s8 %v4716
        %v4718 = vperm.slane %v4714, %v4717
        %v4719 = vrot.slane %v4707, 4
        %v4720 = vsel %vm4015, %v4719, %v4701
        %v4722 = vunpack.c.l.s4 1934713408
        %v4723 = vunpack.c.0.s8 %v4722
        %v4724 = vperm.slane %v4720, %v4723
        %v4725 = vrot.slane %v4718, 4
        %v4726 = vsel %vm4015, %v4725, %v4712
        %v4728 = vunpack.c.l.s4 1934713408
        %v4729 = vunpack.c.0.s8 %v4728
        %v4730 = vperm.slane %v4726, %v4729
        %v4731 = vrot.slane %v4730, 4
        %v4732 = vsel %vm4015, %v4731, %v4724
        %v4733 = vrot.slane %v4724, 4
        %v4734 = vsel %vm4015, %v4730, %v4733
        %4743 = vrot.lane.b32.xlu0 %v4468, 64
        %v4744 = vpop.permute.xlu0 %4743
        %4745 = vrot.lane.b32.xlu0 %v4506, 64
        %v4746 = vpop.permute.xlu0 %4745
        %4747 = vrot.lane.b32.xlu0 %v4544, 64
        %v4748 = vpop.permute.xlu0 %4747
        %4749 = vrot.lane.b32.xlu0 %v4582, 64
        %v4750 = vpop.permute.xlu0 %4749
        %4751 = vrot.lane.b32.xlu0 %v4620, 64
        %v4752 = vpop.permute.xlu0 %4751
        %4753 = vrot.lane.b32.xlu0 %v4658, 64
        %v4754 = vpop.permute.xlu0 %4753
        %4755 = vrot.lane.b32.xlu0 %v4696, 64
        %v4756 = vpop.permute.xlu0 %4755
        %4757 = vrot.lane.b32.xlu0 %v4734, 64
        %v4758 = vpop.permute.xlu0 %4757
        %v4767 = vsel %vm3410, %v4466, %v4744
        %v4768 = vsel %vm3410, %v4504, %v4746
        %v4769 = vsel %vm3410, %v4542, %v4748
        %v4770 = vsel %vm3410, %v4580, %v4750
        %v4771 = vsel %vm3410, %v4618, %v4752
        %v4772 = vsel %vm3410, %v4656, %v4754
        %v4773 = vsel %vm3410, %v4694, %v4756
        %v4774 = vsel %vm3410, %v4732, %v4758
        %v4775 = vpack.c.bf16 %v4768, %v4767
        %v4776 = vpack.c.bf16 %v4770, %v4769
        %v4777 = vpack.c.bf16 %v4772, %v4771
        %v4778 = vpack.c.bf16 %v4774, %v4773
        %v4779 = vld [vmem:[%s688] sm:$0xf]
        %v4780 = vld [vmem:[%s688 + $0x4] sm:$0xf]
        %v4781 = vld [vmem:[%s688 + $0x8] sm:$0xf]
        %v4782 = vld [vmem:[%s688 + $0xc] sm:$0xf]
        %v4783 = vld [vmem:[%s688 + $0x10] sm:$0xf]
        %v4784 = vld [vmem:[%s688 + $0x14] sm:$0xf]
        %v4785 = vld [vmem:[%s688 + $0x18] sm:$0xf]
        %v4786 = vld [vmem:[%s688 + $0x1c] sm:$0xf]
        %v4787 = vld [vmem:[%s688 + $0x20] sm:$0xf]
        %v4788 = vld [vmem:[%s688 + $0x24] sm:$0xf]
        %v4789 = vld [vmem:[%s688 + $0x28] sm:$0xf]
        %v4790 = vld [vmem:[%s688 + $0x2c] sm:$0xf]
        %v4791 = vld [vmem:[%s688 + $0x30] sm:$0xf]
        %v4792 = vld [vmem:[%s688 + $0x34] sm:$0xf]
        %v4793 = vld [vmem:[%s688 + $0x38] sm:$0xf]
        %v4794 = vld [vmem:[%s688 + $0x3c] sm:$0xf]
        %v4795 = vld [vmem:[%s811] sm:$0x1]
        %v4797 = vperm.slane %v4795, 0
        %v4815 = vunpack.c.l.b16 %v4779
        %v4816 = vunpack.c.l.b16 %v4780
        %v4817 = vunpack.c.l.b16 %v4781
        %v4818 = vunpack.c.l.b16 %v4782
        %v4819 = vunpack.c.l.b16 %v4783
        %v4820 = vunpack.c.l.b16 %v4784
        %v4821 = vunpack.c.l.b16 %v4785
        %v4822 = vunpack.c.l.b16 %v4786
        %v4823 = vunpack.c.l.b16 %v4787
        %v4824 = vunpack.c.l.b16 %v4788
        %v4825 = vunpack.c.l.b16 %v4789
        %v4826 = vunpack.c.l.b16 %v4790
        %v4827 = vunpack.c.l.b16 %v4791
        %v4828 = vunpack.c.l.b16 %v4792
        %v4829 = vunpack.c.l.b16 %v4793
        %v4830 = vunpack.c.l.b16 %v4794
        %v4831 = vpack.c.b16 %v4816, %v4815
        %v4832 = vpack.c.b16 %v4818, %v4817
        %v4833 = vpack.c.b16 %v4820, %v4819
        %v4834 = vpack.c.b16 %v4822, %v4821
        %v4835 = vpack.c.b16 %v4824, %v4823
        %v4836 = vpack.c.b16 %v4826, %v4825
        %v4837 = vpack.c.b16 %v4828, %v4827
        %v4838 = vpack.c.b16 %v4830, %v4829
        %4847 = vmatpush.bf16.msra.mxu0 %v4838
        %4848 = vmatpush.bf16.msra.mxu0 %v4837
        %4849 = vmatpush.bf16.msra.mxu0 %v4836
        %4850 = vmatpush.bf16.msra.mxu0 %v4835
        %4851 = vmatpush.bf16.msra.mxu0 %v4834
        %4852 = vmatpush.bf16.msra.mxu0 %v4833
        %4853 = vmatpush.bf16.msra.mxu0 %v4832
        %4854 = vmatpush.bf16.msra.mxu0 %v4831
        %4855 = vmatmul.bf16.gmra.mxu0 %v4775
        %v4856 = vpop.f32.mrf.mxu0
        %v4857 = vadd.f32 %v4797, %v4856
        %v4858 = vpop.f32.mrf.mxu0
        %v4859 = vadd.f32 %v4797, %v4858
        %4860 = vmatmul.bf16.gmra.mxu0 %v4776
        %v4861 = vpop.f32.mrf.mxu0
        %v4862 = vadd.f32 %v4797, %v4861
        %v4863 = vpop.f32.mrf.mxu0
        %v4864 = vadd.f32 %v4797, %v4863
        %4865 = vmatmul.bf16.gmra.mxu0 %v4777
        %v4866 = vpop.f32.mrf.mxu0
        %v4867 = vadd.f32 %v4797, %v4866
        %v4868 = vpop.f32.mrf.mxu0
        %v4869 = vadd.f32 %v4797, %v4868
        %4870 = vmatmul.bf16.gmra.mxu0 %v4778
        %v4871 = vpop.f32.mrf.mxu0
        %v4872 = vadd.f32 %v4797, %v4871
        %v4873 = vpop.f32.mrf.mxu0
        %v4874 = vadd.f32 %v4797, %v4873
        %4875 = vdwg.mxu0
        %v4876 = vadd.f32 %v841, %v4857
        %v4877 = vadd.f32 %v842, %v4859
        %v4878 = vadd.f32 %v843, %v4862
        %v4879 = vadd.f32 %v844, %v4864
        %v4880 = vadd.f32 %v845, %v4867
        %v4881 = vadd.f32 %v846, %v4869
        %v4882 = vadd.f32 %v847, %v4872
        %v4883 = vadd.f32 %v848, %v4874
        %v4884 = vld [vmem:[%s697] sm:$0x1]
        %v4885 = vld [vmem:[%s706] sm:$0x1]
        %4886 = vadd.xlane.f32.xlu0 %v4876
        %v4887 = vpop.xlane.xlu0 %4886
        %4888 = vadd.xlane.f32.xlu0 %v4877
        %v4889 = vpop.xlane.xlu0 %4888
        %4890 = vadd.xlane.f32.xlu0 %v4878
        %v4891 = vpop.xlane.xlu0 %4890
        %4892 = vadd.xlane.f32.xlu0 %v4879
        %v4893 = vpop.xlane.xlu0 %4892
        %4894 = vadd.xlane.f32.xlu0 %v4880
        %v4895 = vpop.xlane.xlu0 %4894
        %4896 = vadd.xlane.f32.xlu0 %v4881
        %v4897 = vpop.xlane.xlu0 %4896
        %4898 = vadd.xlane.f32.xlu0 %v4882
        %v4899 = vpop.xlane.xlu0 %4898
        %4900 = vadd.xlane.f32.xlu0 %v4883
        %v4901 = vpop.xlane.xlu0 %4900
        %v4902 = vmul.f32 %v4887, %v873
        %v4903 = vmul.f32 %v4889, %v873
        %v4904 = vmul.f32 %v4891, %v873
        %v4905 = vmul.f32 %v4893, %v873
        %v4906 = vmul.f32 %v4895, %v873
        %v4907 = vmul.f32 %v4897, %v873
        %v4908 = vmul.f32 %v4899, %v873
        %v4909 = vmul.f32 %v4901, %v873
        %v4910 = vsub.f32 %v4876, %v4902
        %v4911 = vsub.f32 %v4877, %v4903
        %v4912 = vsub.f32 %v4878, %v4904
        %v4913 = vsub.f32 %v4879, %v4905
        %v4914 = vsub.f32 %v4880, %v4906
        %v4915 = vsub.f32 %v4881, %v4907
        %v4916 = vsub.f32 %v4882, %v4908
        %v4917 = vsub.f32 %v4883, %v4909
        %v4918 = vmul.f32 %v4910, %v4910
        %v4919 = vmul.f32 %v4911, %v4911
        %v4920 = vmul.f32 %v4912, %v4912
        %v4921 = vmul.f32 %v4913, %v4913
        %v4922 = vmul.f32 %v4914, %v4914
        %v4923 = vmul.f32 %v4915, %v4915
        %v4924 = vmul.f32 %v4916, %v4916
        %v4925 = vmul.f32 %v4917, %v4917
        %4926 = vadd.xlane.f32.xlu0 %v4918
        %v4927 = vpop.xlane.xlu0 %4926
        %4928 = vadd.xlane.f32.xlu0 %v4919
        %v4929 = vpop.xlane.xlu0 %4928
        %4930 = vadd.xlane.f32.xlu0 %v4920
        %v4931 = vpop.xlane.xlu0 %4930
        %4932 = vadd.xlane.f32.xlu0 %v4921
        %v4933 = vpop.xlane.xlu0 %4932
        %4934 = vadd.xlane.f32.xlu0 %v4922
        %v4935 = vpop.xlane.xlu0 %4934
        %4936 = vadd.xlane.f32.xlu0 %v4923
        %v4937 = vpop.xlane.xlu0 %4936
        %4938 = vadd.xlane.f32.xlu0 %v4924
        %v4939 = vpop.xlane.xlu0 %4938
        %4940 = vadd.xlane.f32.xlu0 %v4925
        %v4941 = vpop.xlane.xlu0 %4940
        %v4942 = vmul.f32 %v4927, %v873
        %v4943 = vmul.f32 %v4929, %v873
        %v4944 = vmul.f32 %v4931, %v873
        %v4945 = vmul.f32 %v4933, %v873
        %v4946 = vmul.f32 %v4935, %v873
        %v4947 = vmul.f32 %v4937, %v873
        %v4948 = vmul.f32 %v4939, %v873
        %v4949 = vmul.f32 %v4941, %v873
        %v4950 = vadd.f32 %v4942, 1e-05
        %v4951 = vadd.f32 %v4943, 1e-05
        %v4952 = vadd.f32 %v4944, 1e-05
        %v4953 = vadd.f32 %v4945, 1e-05
        %v4954 = vadd.f32 %v4946, 1e-05
        %v4955 = vadd.f32 %v4947, 1e-05
        %v4956 = vadd.f32 %v4948, 1e-05
        %v4957 = vadd.f32 %v4949, 1e-05
        %v4958 = vrsqrt.pop %v4950
        %v4959 = vmul.f32 %v4958, %v4950
        %v4960 = vmul.f32 %v4959, %v4958
        %v4961 = vmul.f32 0.5, %v4960
        %v4962 = vsub.f32 1.5, %v4961
        %v4963 = vmul.f32 %v4958, %v4962
        %vm4964 = vweird.f32 %v4950
        %vm4965 = vweird.f32 %v4958
        %vm4966 = vmor %vm4964, %vm4965
        %v4967 = vsel %vm4966, %v4958, %v4963
        %v4968 = vrsqrt.pop %v4951
        %v4969 = vmul.f32 %v4968, %v4951
        %v4970 = vmul.f32 %v4969, %v4968
        %v4971 = vmul.f32 0.5, %v4970
        %v4972 = vsub.f32 1.5, %v4971
        %v4973 = vmul.f32 %v4968, %v4972
        %vm4974 = vweird.f32 %v4951
        %vm4975 = vweird.f32 %v4968
        %vm4976 = vmor %vm4974, %vm4975
        %v4977 = vsel %vm4976, %v4968, %v4973
        %v4978 = vrsqrt.pop %v4952
        %v4979 = vmul.f32 %v4978, %v4952
        %v4980 = vmul.f32 %v4979, %v4978
        %v4981 = vmul.f32 0.5, %v4980
        %v4982 = vsub.f32 1.5, %v4981
        %v4983 = vmul.f32 %v4978, %v4982
        %vm4984 = vweird.f32 %v4952
        %vm4985 = vweird.f32 %v4978
        %vm4986 = vmor %vm4984, %vm4985
        %v4987 = vsel %vm4986, %v4978, %v4983
        %v4988 = vrsqrt.pop %v4953
        %v4989 = vmul.f32 %v4988, %v4953
        %v4990 = vmul.f32 %v4989, %v4988
        %v4991 = vmul.f32 0.5, %v4990
        %v4992 = vsub.f32 1.5, %v4991
        %v4993 = vmul.f32 %v4988, %v4992
        %vm4994 = vweird.f32 %v4953
        %vm4995 = vweird.f32 %v4988
        %vm4996 = vmor %vm4994, %vm4995
        %v4997 = vsel %vm4996, %v4988, %v4993
        %v4998 = vrsqrt.pop %v4954
        %v4999 = vmul.f32 %v4998, %v4954
        %v5000 = vmul.f32 %v4999, %v4998
        %v5001 = vmul.f32 0.5, %v5000
        %v5002 = vsub.f32 1.5, %v5001
        %v5003 = vmul.f32 %v4998, %v5002
        %vm5004 = vweird.f32 %v4954
        %vm5005 = vweird.f32 %v4998
        %vm5006 = vmor %vm5004, %vm5005
        %v5007 = vsel %vm5006, %v4998, %v5003
        %v5008 = vrsqrt.pop %v4955
        %v5009 = vmul.f32 %v5008, %v4955
        %v5010 = vmul.f32 %v5009, %v5008
        %v5011 = vmul.f32 0.5, %v5010
        %v5012 = vsub.f32 1.5, %v5011
        %v5013 = vmul.f32 %v5008, %v5012
        %vm5014 = vweird.f32 %v4955
        %vm5015 = vweird.f32 %v5008
        %vm5016 = vmor %vm5014, %vm5015
        %v5017 = vsel %vm5016, %v5008, %v5013
        %v5018 = vrsqrt.pop %v4956
        %v5019 = vmul.f32 %v5018, %v4956
        %v5020 = vmul.f32 %v5019, %v5018
        %v5021 = vmul.f32 0.5, %v5020
        %v5022 = vsub.f32 1.5, %v5021
        %v5023 = vmul.f32 %v5018, %v5022
        %vm5024 = vweird.f32 %v4956
        %vm5025 = vweird.f32 %v5018
        %vm5026 = vmor %vm5024, %vm5025
        %v5027 = vsel %vm5026, %v5018, %v5023
        %v5028 = vrsqrt.pop %v4957
        %v5029 = vmul.f32 %v5028, %v4957
        %v5030 = vmul.f32 %v5029, %v5028
        %v5031 = vmul.f32 0.5, %v5030
        %v5032 = vsub.f32 1.5, %v5031
        %v5033 = vmul.f32 %v5028, %v5032
        %vm5034 = vweird.f32 %v4957
        %vm5035 = vweird.f32 %v5028
        %vm5036 = vmor %vm5034, %vm5035
        %v5037 = vsel %vm5036, %v5028, %v5033
        %v5038 = vmul.f32 %v4910, %v4967
        %v5039 = vmul.f32 %v4911, %v4977
        %v5040 = vmul.f32 %v4912, %v4987
        %v5041 = vmul.f32 %v4913, %v4997
        %v5042 = vmul.f32 %v4914, %v5007
        %v5043 = vmul.f32 %v4915, %v5017
        %v5044 = vmul.f32 %v4916, %v5027
        %v5045 = vmul.f32 %v4917, %v5037
        %v5047 = vperm.slane %v4884, 0
        %v5049 = vmul.f32 %v5038, %v5047
        %v5050 = vmul.f32 %v5039, %v5047
        %v5051 = vmul.f32 %v5040, %v5047
        %v5052 = vmul.f32 %v5041, %v5047
        %v5053 = vmul.f32 %v5042, %v5047
        %v5054 = vmul.f32 %v5043, %v5047
        %v5055 = vmul.f32 %v5044, %v5047
        %v5056 = vmul.f32 %v5045, %v5047
        %v5058 = vperm.slane %v4885, 0
        %v5060 = vadd.f32 %v5049, %v5058
        %v5061 = vadd.f32 %v5050, %v5058
        %v5062 = vadd.f32 %v5051, %v5058
        %v5063 = vadd.f32 %v5052, %v5058
        %v5064 = vadd.f32 %v5053, %v5058
        %v5065 = vadd.f32 %v5054, %v5058
        %v5066 = vadd.f32 %v5055, %v5058
        %v5067 = vadd.f32 %v5056, %v5058
        %v5068 = vpack.c.bf16 %v5061, %v5060
        %v5069 = vpack.c.bf16 %v5063, %v5062
        %v5070 = vpack.c.bf16 %v5065, %v5064
        %v5071 = vpack.c.bf16 %v5067, %v5066
        %v5072 = vld [vmem:[%s716] sm:$0xff]
        %v5073 = vld [vmem:[%s716 + $0x8] sm:$0xff]
        %v5074 = vld [vmem:[%s716 + $0x10] sm:$0xff]
        %v5075 = vld [vmem:[%s716 + $0x18] sm:$0xff]
        %v5076 = vld [vmem:[%s716 + $0x20] sm:$0xff]
        %v5077 = vld [vmem:[%s716 + $0x28] sm:$0xff]
        %v5078 = vld [vmem:[%s716 + $0x30] sm:$0xff]
        %v5079 = vld [vmem:[%s716 + $0x38] sm:$0xff]
        %v5080 = vld [vmem:[%s716 + $0x40] sm:$0xff]
        %v5081 = vld [vmem:[%s716 + $0x48] sm:$0xff]
        %v5082 = vld [vmem:[%s716 + $0x50] sm:$0xff]
        %v5083 = vld [vmem:[%s716 + $0x58] sm:$0xff]
        %v5084 = vld [vmem:[%s716 + $0x60] sm:$0xff]
        %v5085 = vld [vmem:[%s716 + $0x68] sm:$0xff]
        %v5086 = vld [vmem:[%s716 + $0x70] sm:$0xff]
        %v5087 = vld [vmem:[%s716 + $0x78] sm:$0xff]
        %v5088 = vld [vmem:[%s815] sm:$0x3]
        %v5090 = vperm.slane %v5088, 0
        %v5091 = vperm.slane %v5088, 1
        %v5110 = vunpack.c.l.b16 %v5072
        %v5111 = vunpack.c.h.b16 %v5072
        %v5112 = vunpack.c.l.b16 %v5073
        %v5113 = vunpack.c.h.b16 %v5073
        %v5114 = vunpack.c.l.b16 %v5074
        %v5115 = vunpack.c.h.b16 %v5074
        %v5116 = vunpack.c.l.b16 %v5075
        %v5117 = vunpack.c.h.b16 %v5075
        %v5118 = vunpack.c.l.b16 %v5076
        %v5119 = vunpack.c.h.b16 %v5076
        %v5120 = vunpack.c.l.b16 %v5077
        %v5121 = vunpack.c.h.b16 %v5077
        %v5122 = vunpack.c.l.b16 %v5078
        %v5123 = vunpack.c.h.b16 %v5078
        %v5124 = vunpack.c.l.b16 %v5079
        %v5125 = vunpack.c.h.b16 %v5079
        %v5126 = vunpack.c.l.b16 %v5080
        %v5127 = vunpack.c.h.b16 %v5080
        %v5128 = vunpack.c.l.b16 %v5081
        %v5129 = vunpack.c.h.b16 %v5081
        %v5130 = vunpack.c.l.b16 %v5082
        %v5131 = vunpack.c.h.b16 %v5082
        %v5132 = vunpack.c.l.b16 %v5083
        %v5133 = vunpack.c.h.b16 %v5083
        %v5134 = vunpack.c.l.b16 %v5084
        %v5135 = vunpack.c.h.b16 %v5084
        %v5136 = vunpack.c.l.b16 %v5085
        %v5137 = vunpack.c.h.b16 %v5085
        %v5138 = vunpack.c.l.b16 %v5086
        %v5139 = vunpack.c.h.b16 %v5086
        %v5140 = vunpack.c.l.b16 %v5087
        %v5141 = vunpack.c.h.b16 %v5087
        %v5142 = vpack.c.b16 %v5112, %v5110
        %v5143 = vpack.c.b16 %v5113, %v5111
        %v5144 = vpack.c.b16 %v5116, %v5114
        %v5145 = vpack.c.b16 %v5117, %v5115
        %v5146 = vpack.c.b16 %v5120, %v5118
        %v5147 = vpack.c.b16 %v5121, %v5119
        %v5148 = vpack.c.b16 %v5124, %v5122
        %v5149 = vpack.c.b16 %v5125, %v5123
        %v5150 = vpack.c.b16 %v5128, %v5126
        %v5151 = vpack.c.b16 %v5129, %v5127
        %v5152 = vpack.c.b16 %v5132, %v5130
        %v5153 = vpack.c.b16 %v5133, %v5131
        %v5154 = vpack.c.b16 %v5136, %v5134
        %v5155 = vpack.c.b16 %v5137, %v5135
        %v5156 = vpack.c.b16 %v5140, %v5138
        %v5157 = vpack.c.b16 %v5141, %v5139
        %5174 = vmatpush.bf16.msra.mxu0 %v5156
        %5175 = vmatpush.bf16.msra.mxu0 %v5154
        %5176 = vmatpush.bf16.msra.mxu0 %v5152
        %5177 = vmatpush.bf16.msra.mxu0 %v5150
        %5178 = vmatpush.bf16.msra.mxu0 %v5148
        %5179 = vmatpush.bf16.msra.mxu0 %v5146
        %5180 = vmatpush.bf16.msra.mxu0 %v5144
        %5181 = vmatpush.bf16.msra.mxu0 %v5142
        %5182 = vmatmul.bf16.gmra.mxu0 %v5068
        %v5183 = vpop.f32.mrf.mxu0
        %v5184 = vadd.f32 %v5090, %v5183
        %v5185 = vpop.f32.mrf.mxu0
        %v5186 = vadd.f32 %v5090, %v5185
        %5187 = vmatmul.bf16.gmra.mxu0 %v5069
        %v5188 = vpop.f32.mrf.mxu0
        %v5189 = vadd.f32 %v5090, %v5188
        %v5190 = vpop.f32.mrf.mxu0
        %v5191 = vadd.f32 %v5090, %v5190
        %5192 = vmatmul.bf16.gmra.mxu0 %v5070
        %v5193 = vpop.f32.mrf.mxu0
        %v5194 = vadd.f32 %v5090, %v5193
        %v5195 = vpop.f32.mrf.mxu0
        %v5196 = vadd.f32 %v5090, %v5195
        %5197 = vmatmul.bf16.gmra.mxu0 %v5071
        %v5198 = vpop.f32.mrf.mxu0
        %v5199 = vadd.f32 %v5090, %v5198
        %v5200 = vpop.f32.mrf.mxu0
        %v5201 = vadd.f32 %v5090, %v5200
        %5202 = vdwg.mxu0
        %5203 = vmatpush.bf16.msra.mxu0 %v5157
        %5204 = vmatpush.bf16.msra.mxu0 %v5155
        %5205 = vmatpush.bf16.msra.mxu0 %v5153
        %5206 = vmatpush.bf16.msra.mxu0 %v5151
        %5207 = vmatpush.bf16.msra.mxu0 %v5149
        %5208 = vmatpush.bf16.msra.mxu0 %v5147
        %5209 = vmatpush.bf16.msra.mxu0 %v5145
        %5210 = vmatpush.bf16.msra.mxu0 %v5143
        %5211 = vmatmul.bf16.gmra.mxu0 %v5068
        %v5212 = vpop.f32.mrf.mxu0
        %v5213 = vadd.f32 %v5091, %v5212
        %v5214 = vpop.f32.mrf.mxu0
        %v5215 = vadd.f32 %v5091, %v5214
        %5216 = vmatmul.bf16.gmra.mxu0 %v5069
        %v5217 = vpop.f32.mrf.mxu0
        %v5218 = vadd.f32 %v5091, %v5217
        %v5219 = vpop.f32.mrf.mxu0
        %v5220 = vadd.f32 %v5091, %v5219
        %5221 = vmatmul.bf16.gmra.mxu0 %v5070
        %v5222 = vpop.f32.mrf.mxu0
        %v5223 = vadd.f32 %v5091, %v5222
        %v5224 = vpop.f32.mrf.mxu0
        %v5225 = vadd.f32 %v5091, %v5224
        %5226 = vmatmul.bf16.gmra.mxu0 %v5071
        %v5227 = vpop.f32.mrf.mxu0
        %v5228 = vadd.f32 %v5091, %v5227
        %v5229 = vpop.f32.mrf.mxu0
        %v5230 = vadd.f32 %v5091, %v5229
        %5231 = vdwg.mxu0
        %v5232 = vmul.f32 %v5184, 0.5
        %v5233 = vmul.f32 %v5213, 0.5
        %v5234 = vmul.f32 %v5186, 0.5
        %v5235 = vmul.f32 %v5215, 0.5
        %v5236 = vmul.f32 %v5189, 0.5
        %v5237 = vmul.f32 %v5218, 0.5
        %v5238 = vmul.f32 %v5191, 0.5
        %v5239 = vmul.f32 %v5220, 0.5
        %v5240 = vmul.f32 %v5194, 0.5
        %v5241 = vmul.f32 %v5223, 0.5
        %v5242 = vmul.f32 %v5196, 0.5
        %v5243 = vmul.f32 %v5225, 0.5
        %v5244 = vmul.f32 %v5199, 0.5
        %v5245 = vmul.f32 %v5228, 0.5
        %v5246 = vmul.f32 %v5201, 0.5
        %v5247 = vmul.f32 %v5230, 0.5
        %v5248 = vmul.f32 %v5184, 0.70710677
        %v5249 = vmul.f32 %v5213, 0.70710677
        %v5250 = vmul.f32 %v5186, 0.70710677
        %v5251 = vmul.f32 %v5215, 0.70710677
        %v5252 = vmul.f32 %v5189, 0.70710677
        %v5253 = vmul.f32 %v5218, 0.70710677
        %v5254 = vmul.f32 %v5191, 0.70710677
        %v5255 = vmul.f32 %v5220, 0.70710677
        %v5256 = vmul.f32 %v5194, 0.70710677
        %v5257 = vmul.f32 %v5223, 0.70710677
        %v5258 = vmul.f32 %v5196, 0.70710677
        %v5259 = vmul.f32 %v5225, 0.70710677
        %v5260 = vmul.f32 %v5199, 0.70710677
        %v5261 = vmul.f32 %v5228, 0.70710677
        %v5262 = vmul.f32 %v5201, 0.70710677
        %v5263 = vmul.f32 %v5230, 0.70710677
        %v5264 = vmul.f32 %v5248, %v5248
        %v5265 = vmin.f32 16.0, %v5264
        %v5266 = vmul.f32 %v5265, 2.1237322e-06
        %v5267 = vadd.f32 %v5266, 0.00028619796
        %v5268 = vmul.f32 %v5265, %v5267
        %v5269 = vadd.f32 %v5268, 0.0036580483
        %v5270 = vmul.f32 %v5265, %v5269
        %v5271 = vadd.f32 %v5270, 0.05243302
        %v5272 = vmul.f32 %v5265, %v5271
        %v5273 = vadd.f32 %v5272, 0.18741608
        %v5274 = vmul.f32 %v5265, %v5273
        %v5275 = vadd.f32 %v5274, 1.1283791
        %v5276 = vmul.f32 %v5248, %v5275
        %v5277 = vmul.f32 %v5265, 3.8918573e-05
        %v5278 = vadd.f32 %v5277, 0.001143296
        %v5279 = vmul.f32 %v5265, %v5278
        %v5280 = vadd.f32 %v5279, 0.014752088
        %v5281 = vmul.f32 %v5265, %v5280
        %v5282 = vadd.f32 %v5281, 0.112945676
        %v5283 = vmul.f32 %v5265, %v5282
        %v5284 = vadd.f32 %v5283, 0.4994258
        %v5285 = vmul.f32 %v5265, %v5284
        %v5286 = vadd.f32 %v5285, 1.0
        %v5287 = vrcp.pop %v5286
        %v5288 = vmul.f32 %v5286, %v5287
        %v5289 = vsub.f32 1.0, %v5288
        %v5290 = vmul.f32 %v5287, %v5289
        %v5291 = vadd.f32 %v5287, %v5290
        %vm5292 = vweird.f32 %v5286
        %vm5293 = vweird.f32 %v5287
        %vm5294 = vmor %vm5292, %vm5293
        %v5295 = vsel %vm5294, %v5287, %v5291
        %v5296 = vand.u32 2147483647, %v5286
        %vm5297 = vcmp.eq.f32.partialorder %v5296, 8.507059e+37
        %v5298 = vand.u32 %v5286, 2147483648
        %v5299 = vor.u32 1.1754944e-38, %v5298
        %v5300 = vsel %vm5297, %v5299, %v5295
        %v5301 = vmul.f32 %v5276, %v5300
        %v5302 = vmin.f32 %v5301, 1.0
        %v5303 = vmax.f32 %v5302, -1.0
        %v5304 = vmul.f32 %v5249, %v5249
        %v5305 = vmin.f32 16.0, %v5304
        %v5306 = vmul.f32 %v5305, 2.1237322e-06
        %v5307 = vadd.f32 %v5306, 0.00028619796
        %v5308 = vmul.f32 %v5305, %v5307
        %v5309 = vadd.f32 %v5308, 0.0036580483
        %v5310 = vmul.f32 %v5305, %v5309
        %v5311 = vadd.f32 %v5310, 0.05243302
        %v5312 = vmul.f32 %v5305, %v5311
        %v5313 = vadd.f32 %v5312, 0.18741608
        %v5314 = vmul.f32 %v5305, %v5313
        %v5315 = vadd.f32 %v5314, 1.1283791
        %v5316 = vmul.f32 %v5249, %v5315
        %v5317 = vmul.f32 %v5305, 3.8918573e-05
        %v5318 = vadd.f32 %v5317, 0.001143296
        %v5319 = vmul.f32 %v5305, %v5318
        %v5320 = vadd.f32 %v5319, 0.014752088
        %v5321 = vmul.f32 %v5305, %v5320
        %v5322 = vadd.f32 %v5321, 0.112945676
        %v5323 = vmul.f32 %v5305, %v5322
        %v5324 = vadd.f32 %v5323, 0.4994258
        %v5325 = vmul.f32 %v5305, %v5324
        %v5326 = vadd.f32 %v5325, 1.0
        %v5327 = vrcp.pop %v5326
        %v5328 = vmul.f32 %v5326, %v5327
        %v5329 = vsub.f32 1.0, %v5328
        %v5330 = vmul.f32 %v5327, %v5329
        %v5331 = vadd.f32 %v5327, %v5330
        %vm5332 = vweird.f32 %v5326
        %vm5333 = vweird.f32 %v5327
        %vm5334 = vmor %vm5332, %vm5333
        %v5335 = vsel %vm5334, %v5327, %v5331
        %v5336 = vand.u32 2147483647, %v5326
        %vm5337 = vcmp.eq.f32.partialorder %v5336, 8.507059e+37
        %v5338 = vand.u32 %v5326, 2147483648
        %v5339 = vor.u32 1.1754944e-38, %v5338
        %v5340 = vsel %vm5337, %v5339, %v5335
        %v5341 = vmul.f32 %v5316, %v5340
        %v5342 = vmin.f32 %v5341, 1.0
        %v5343 = vmax.f32 %v5342, -1.0
        %v5344 = vmul.f32 %v5250, %v5250
        %v5345 = vmin.f32 16.0, %v5344
        %v5346 = vmul.f32 %v5345, 2.1237322e-06
        %v5347 = vadd.f32 %v5346, 0.00028619796
        %v5348 = vmul.f32 %v5345, %v5347
        %v5349 = vadd.f32 %v5348, 0.0036580483
        %v5350 = vmul.f32 %v5345, %v5349
        %v5351 = vadd.f32 %v5350, 0.05243302
        %v5352 = vmul.f32 %v5345, %v5351
        %v5353 = vadd.f32 %v5352, 0.18741608
        %v5354 = vmul.f32 %v5345, %v5353
        %v5355 = vadd.f32 %v5354, 1.1283791
        %v5356 = vmul.f32 %v5250, %v5355
        %v5357 = vmul.f32 %v5345, 3.8918573e-05
        %v5358 = vadd.f32 %v5357, 0.001143296
        %v5359 = vmul.f32 %v5345, %v5358
        %v5360 = vadd.f32 %v5359, 0.014752088
        %v5361 = vmul.f32 %v5345, %v5360
        %v5362 = vadd.f32 %v5361, 0.112945676
        %v5363 = vmul.f32 %v5345, %v5362
        %v5364 = vadd.f32 %v5363, 0.4994258
        %v5365 = vmul.f32 %v5345, %v5364
        %v5366 = vadd.f32 %v5365, 1.0
        %v5367 = vrcp.pop %v5366
        %v5368 = vmul.f32 %v5366, %v5367
        %v5369 = vsub.f32 1.0, %v5368
        %v5370 = vmul.f32 %v5367, %v5369
        %v5371 = vadd.f32 %v5367, %v5370
        %vm5372 = vweird.f32 %v5366
        %vm5373 = vweird.f32 %v5367
        %vm5374 = vmor %vm5372, %vm5373
        %v5375 = vsel %vm5374, %v5367, %v5371
        %v5376 = vand.u32 2147483647, %v5366
        %vm5377 = vcmp.eq.f32.partialorder %v5376, 8.507059e+37
        %v5378 = vand.u32 %v5366, 2147483648
        %v5379 = vor.u32 1.1754944e-38, %v5378
        %v5380 = vsel %vm5377, %v5379, %v5375
        %v5381 = vmul.f32 %v5356, %v5380
        %v5382 = vmin.f32 %v5381, 1.0
        %v5383 = vmax.f32 %v5382, -1.0
        %v5384 = vmul.f32 %v5251, %v5251
        %v5385 = vmin.f32 16.0, %v5384
        %v5386 = vmul.f32 %v5385, 2.1237322e-06
        %v5387 = vadd.f32 %v5386, 0.00028619796
        %v5388 = vmul.f32 %v5385, %v5387
        %v5389 = vadd.f32 %v5388, 0.0036580483
        %v5390 = vmul.f32 %v5385, %v5389
        %v5391 = vadd.f32 %v5390, 0.05243302
        %v5392 = vmul.f32 %v5385, %v5391
        %v5393 = vadd.f32 %v5392, 0.18741608
        %v5394 = vmul.f32 %v5385, %v5393
        %v5395 = vadd.f32 %v5394, 1.1283791
        %v5396 = vmul.f32 %v5251, %v5395
        %v5397 = vmul.f32 %v5385, 3.8918573e-05
        %v5398 = vadd.f32 %v5397, 0.001143296
        %v5399 = vmul.f32 %v5385, %v5398
        %v5400 = vadd.f32 %v5399, 0.014752088
        %v5401 = vmul.f32 %v5385, %v5400
        %v5402 = vadd.f32 %v5401, 0.112945676
        %v5403 = vmul.f32 %v5385, %v5402
        %v5404 = vadd.f32 %v5403, 0.4994258
        %v5405 = vmul.f32 %v5385, %v5404
        %v5406 = vadd.f32 %v5405, 1.0
        %v5407 = vrcp.pop %v5406
        %v5408 = vmul.f32 %v5406, %v5407
        %v5409 = vsub.f32 1.0, %v5408
        %v5410 = vmul.f32 %v5407, %v5409
        %v5411 = vadd.f32 %v5407, %v5410
        %vm5412 = vweird.f32 %v5406
        %vm5413 = vweird.f32 %v5407
        %vm5414 = vmor %vm5412, %vm5413
        %v5415 = vsel %vm5414, %v5407, %v5411
        %v5416 = vand.u32 2147483647, %v5406
        %vm5417 = vcmp.eq.f32.partialorder %v5416, 8.507059e+37
        %v5418 = vand.u32 %v5406, 2147483648
        %v5419 = vor.u32 1.1754944e-38, %v5418
        %v5420 = vsel %vm5417, %v5419, %v5415
        %v5421 = vmul.f32 %v5396, %v5420
        %v5422 = vmin.f32 %v5421, 1.0
        %v5423 = vmax.f32 %v5422, -1.0
        %v5424 = vmul.f32 %v5252, %v5252
        %v5425 = vmin.f32 16.0, %v5424
        %v5426 = vmul.f32 %v5425, 2.1237322e-06
        %v5427 = vadd.f32 %v5426, 0.00028619796
        %v5428 = vmul.f32 %v5425, %v5427
        %v5429 = vadd.f32 %v5428, 0.0036580483
        %v5430 = vmul.f32 %v5425, %v5429
        %v5431 = vadd.f32 %v5430, 0.05243302
        %v5432 = vmul.f32 %v5425, %v5431
        %v5433 = vadd.f32 %v5432, 0.18741608
        %v5434 = vmul.f32 %v5425, %v5433
        %v5435 = vadd.f32 %v5434, 1.1283791
        %v5436 = vmul.f32 %v5252, %v5435
        %v5437 = vmul.f32 %v5425, 3.8918573e-05
        %v5438 = vadd.f32 %v5437, 0.001143296
        %v5439 = vmul.f32 %v5425, %v5438
        %v5440 = vadd.f32 %v5439, 0.014752088
        %v5441 = vmul.f32 %v5425, %v5440
        %v5442 = vadd.f32 %v5441, 0.112945676
        %v5443 = vmul.f32 %v5425, %v5442
        %v5444 = vadd.f32 %v5443, 0.4994258
        %v5445 = vmul.f32 %v5425, %v5444
        %v5446 = vadd.f32 %v5445, 1.0
        %v5447 = vrcp.pop %v5446
        %v5448 = vmul.f32 %v5446, %v5447
        %v5449 = vsub.f32 1.0, %v5448
        %v5450 = vmul.f32 %v5447, %v5449
        %v5451 = vadd.f32 %v5447, %v5450
        %vm5452 = vweird.f32 %v5446
        %vm5453 = vweird.f32 %v5447
        %vm5454 = vmor %vm5452, %vm5453
        %v5455 = vsel %vm5454, %v5447, %v5451
        %v5456 = vand.u32 2147483647, %v5446
        %vm5457 = vcmp.eq.f32.partialorder %v5456, 8.507059e+37
        %v5458 = vand.u32 %v5446, 2147483648
        %v5459 = vor.u32 1.1754944e-38, %v5458
        %v5460 = vsel %vm5457, %v5459, %v5455
        %v5461 = vmul.f32 %v5436, %v5460
        %v5462 = vmin.f32 %v5461, 1.0
        %v5463 = vmax.f32 %v5462, -1.0
        %v5464 = vmul.f32 %v5253, %v5253
        %v5465 = vmin.f32 16.0, %v5464
        %v5466 = vmul.f32 %v5465, 2.1237322e-06
        %v5467 = vadd.f32 %v5466, 0.00028619796
        %v5468 = vmul.f32 %v5465, %v5467
        %v5469 = vadd.f32 %v5468, 0.0036580483
        %v5470 = vmul.f32 %v5465, %v5469
        %v5471 = vadd.f32 %v5470, 0.05243302
        %v5472 = vmul.f32 %v5465, %v5471
        %v5473 = vadd.f32 %v5472, 0.18741608
        %v5474 = vmul.f32 %v5465, %v5473
        %v5475 = vadd.f32 %v5474, 1.1283791
        %v5476 = vmul.f32 %v5253, %v5475
        %v5477 = vmul.f32 %v5465, 3.8918573e-05
        %v5478 = vadd.f32 %v5477, 0.001143296
        %v5479 = vmul.f32 %v5465, %v5478
        %v5480 = vadd.f32 %v5479, 0.014752088
        %v5481 = vmul.f32 %v5465, %v5480
        %v5482 = vadd.f32 %v5481, 0.112945676
        %v5483 = vmul.f32 %v5465, %v5482
        %v5484 = vadd.f32 %v5483, 0.4994258
        %v5485 = vmul.f32 %v5465, %v5484
        %v5486 = vadd.f32 %v5485, 1.0
        %v5487 = vrcp.pop %v5486
        %v5488 = vmul.f32 %v5486, %v5487
        %v5489 = vsub.f32 1.0, %v5488
        %v5490 = vmul.f32 %v5487, %v5489
        %v5491 = vadd.f32 %v5487, %v5490
        %vm5492 = vweird.f32 %v5486
        %vm5493 = vweird.f32 %v5487
        %vm5494 = vmor %vm5492, %vm5493
        %v5495 = vsel %vm5494, %v5487, %v5491
        %v5496 = vand.u32 2147483647, %v5486
        %vm5497 = vcmp.eq.f32.partialorder %v5496, 8.507059e+37
        %v5498 = vand.u32 %v5486, 2147483648
        %v5499 = vor.u32 1.1754944e-38, %v5498
        %v5500 = vsel %vm5497, %v5499, %v5495
        %v5501 = vmul.f32 %v5476, %v5500
        %v5502 = vmin.f32 %v5501, 1.0
        %v5503 = vmax.f32 %v5502, -1.0
        %v5504 = vmul.f32 %v5254, %v5254
        %v5505 = vmin.f32 16.0, %v5504
        %v5506 = vmul.f32 %v5505, 2.1237322e-06
        %v5507 = vadd.f32 %v5506, 0.00028619796
        %v5508 = vmul.f32 %v5505, %v5507
        %v5509 = vadd.f32 %v5508, 0.0036580483
        %v5510 = vmul.f32 %v5505, %v5509
        %v5511 = vadd.f32 %v5510, 0.05243302
        %v5512 = vmul.f32 %v5505, %v5511
        %v5513 = vadd.f32 %v5512, 0.18741608
        %v5514 = vmul.f32 %v5505, %v5513
        %v5515 = vadd.f32 %v5514, 1.1283791
        %v5516 = vmul.f32 %v5254, %v5515
        %v5517 = vmul.f32 %v5505, 3.8918573e-05
        %v5518 = vadd.f32 %v5517, 0.001143296
        %v5519 = vmul.f32 %v5505, %v5518
        %v5520 = vadd.f32 %v5519, 0.014752088
        %v5521 = vmul.f32 %v5505, %v5520
        %v5522 = vadd.f32 %v5521, 0.112945676
        %v5523 = vmul.f32 %v5505, %v5522
        %v5524 = vadd.f32 %v5523, 0.4994258
        %v5525 = vmul.f32 %v5505, %v5524
        %v5526 = vadd.f32 %v5525, 1.0
        %v5527 = vrcp.pop %v5526
        %v5528 = vmul.f32 %v5526, %v5527
        %v5529 = vsub.f32 1.0, %v5528
        %v5530 = vmul.f32 %v5527, %v5529
        %v5531 = vadd.f32 %v5527, %v5530
        %vm5532 = vweird.f32 %v5526
        %vm5533 = vweird.f32 %v5527
        %vm5534 = vmor %vm5532, %vm5533
        %v5535 = vsel %vm5534, %v5527, %v5531
        %v5536 = vand.u32 2147483647, %v5526
        %vm5537 = vcmp.eq.f32.partialorder %v5536, 8.507059e+37
        %v5538 = vand.u32 %v5526, 2147483648
        %v5539 = vor.u32 1.1754944e-38, %v5538
        %v5540 = vsel %vm5537, %v5539, %v5535
        %v5541 = vmul.f32 %v5516, %v5540
        %v5542 = vmin.f32 %v5541, 1.0
        %v5543 = vmax.f32 %v5542, -1.0
        %v5544 = vmul.f32 %v5255, %v5255
        %v5545 = vmin.f32 16.0, %v5544
        %v5546 = vmul.f32 %v5545, 2.1237322e-06
        %v5547 = vadd.f32 %v5546, 0.00028619796
        %v5548 = vmul.f32 %v5545, %v5547
        %v5549 = vadd.f32 %v5548, 0.0036580483
        %v5550 = vmul.f32 %v5545, %v5549
        %v5551 = vadd.f32 %v5550, 0.05243302
        %v5552 = vmul.f32 %v5545, %v5551
        %v5553 = vadd.f32 %v5552, 0.18741608
        %v5554 = vmul.f32 %v5545, %v5553
        %v5555 = vadd.f32 %v5554, 1.1283791
        %v5556 = vmul.f32 %v5255, %v5555
        %v5557 = vmul.f32 %v5545, 3.8918573e-05
        %v5558 = vadd.f32 %v5557, 0.001143296
        %v5559 = vmul.f32 %v5545, %v5558
        %v5560 = vadd.f32 %v5559, 0.014752088
        %v5561 = vmul.f32 %v5545, %v5560
        %v5562 = vadd.f32 %v5561, 0.112945676
        %v5563 = vmul.f32 %v5545, %v5562
        %v5564 = vadd.f32 %v5563, 0.4994258
        %v5565 = vmul.f32 %v5545, %v5564
        %v5566 = vadd.f32 %v5565, 1.0
        %v5567 = vrcp.pop %v5566
        %v5568 = vmul.f32 %v5566, %v5567
        %v5569 = vsub.f32 1.0, %v5568
        %v5570 = vmul.f32 %v5567, %v5569
        %v5571 = vadd.f32 %v5567, %v5570
        %vm5572 = vweird.f32 %v5566
        %vm5573 = vweird.f32 %v5567
        %vm5574 = vmor %vm5572, %vm5573
        %v5575 = vsel %vm5574, %v5567, %v5571
        %v5576 = vand.u32 2147483647, %v5566
        %vm5577 = vcmp.eq.f32.partialorder %v5576, 8.507059e+37
        %v5578 = vand.u32 %v5566, 2147483648
        %v5579 = vor.u32 1.1754944e-38, %v5578
        %v5580 = vsel %vm5577, %v5579, %v5575
        %v5581 = vmul.f32 %v5556, %v5580
        %v5582 = vmin.f32 %v5581, 1.0
        %v5583 = vmax.f32 %v5582, -1.0
        %v5584 = vmul.f32 %v5256, %v5256
        %v5585 = vmin.f32 16.0, %v5584
        %v5586 = vmul.f32 %v5585, 2.1237322e-06
        %v5587 = vadd.f32 %v5586, 0.00028619796
        %v5588 = vmul.f32 %v5585, %v5587
        %v5589 = vadd.f32 %v5588, 0.0036580483
        %v5590 = vmul.f32 %v5585, %v5589
        %v5591 = vadd.f32 %v5590, 0.05243302
        %v5592 = vmul.f32 %v5585, %v5591
        %v5593 = vadd.f32 %v5592, 0.18741608
        %v5594 = vmul.f32 %v5585, %v5593
        %v5595 = vadd.f32 %v5594, 1.1283791
        %v5596 = vmul.f32 %v5256, %v5595
        %v5597 = vmul.f32 %v5585, 3.8918573e-05
        %v5598 = vadd.f32 %v5597, 0.001143296
        %v5599 = vmul.f32 %v5585, %v5598
        %v5600 = vadd.f32 %v5599, 0.014752088
        %v5601 = vmul.f32 %v5585, %v5600
        %v5602 = vadd.f32 %v5601, 0.112945676
        %v5603 = vmul.f32 %v5585, %v5602
        %v5604 = vadd.f32 %v5603, 0.4994258
        %v5605 = vmul.f32 %v5585, %v5604
        %v5606 = vadd.f32 %v5605, 1.0
        %v5607 = vrcp.pop %v5606
        %v5608 = vmul.f32 %v5606, %v5607
        %v5609 = vsub.f32 1.0, %v5608
        %v5610 = vmul.f32 %v5607, %v5609
        %v5611 = vadd.f32 %v5607, %v5610
        %vm5612 = vweird.f32 %v5606
        %vm5613 = vweird.f32 %v5607
        %vm5614 = vmor %vm5612, %vm5613
        %v5615 = vsel %vm5614, %v5607, %v5611
        %v5616 = vand.u32 2147483647, %v5606
        %vm5617 = vcmp.eq.f32.partialorder %v5616, 8.507059e+37
        %v5618 = vand.u32 %v5606, 2147483648
        %v5619 = vor.u32 1.1754944e-38, %v5618
        %v5620 = vsel %vm5617, %v5619, %v5615
        %v5621 = vmul.f32 %v5596, %v5620
        %v5622 = vmin.f32 %v5621, 1.0
        %v5623 = vmax.f32 %v5622, -1.0
        %v5624 = vmul.f32 %v5257, %v5257
        %v5625 = vmin.f32 16.0, %v5624
        %v5626 = vmul.f32 %v5625, 2.1237322e-06
        %v5627 = vadd.f32 %v5626, 0.00028619796
        %v5628 = vmul.f32 %v5625, %v5627
        %v5629 = vadd.f32 %v5628, 0.0036580483
        %v5630 = vmul.f32 %v5625, %v5629
        %v5631 = vadd.f32 %v5630, 0.05243302
        %v5632 = vmul.f32 %v5625, %v5631
        %v5633 = vadd.f32 %v5632, 0.18741608
        %v5634 = vmul.f32 %v5625, %v5633
        %v5635 = vadd.f32 %v5634, 1.1283791
        %v5636 = vmul.f32 %v5257, %v5635
        %v5637 = vmul.f32 %v5625, 3.8918573e-05
        %v5638 = vadd.f32 %v5637, 0.001143296
        %v5639 = vmul.f32 %v5625, %v5638
        %v5640 = vadd.f32 %v5639, 0.014752088
        %v5641 = vmul.f32 %v5625, %v5640
        %v5642 = vadd.f32 %v5641, 0.112945676
        %v5643 = vmul.f32 %v5625, %v5642
        %v5644 = vadd.f32 %v5643, 0.4994258
        %v5645 = vmul.f32 %v5625, %v5644
        %v5646 = vadd.f32 %v5645, 1.0
        %v5647 = vrcp.pop %v5646
        %v5648 = vmul.f32 %v5646, %v5647
        %v5649 = vsub.f32 1.0, %v5648
        %v5650 = vmul.f32 %v5647, %v5649
        %v5651 = vadd.f32 %v5647, %v5650
        %vm5652 = vweird.f32 %v5646
        %vm5653 = vweird.f32 %v5647
        %vm5654 = vmor %vm5652, %vm5653
        %v5655 = vsel %vm5654, %v5647, %v5651
        %v5656 = vand.u32 2147483647, %v5646
        %vm5657 = vcmp.eq.f32.partialorder %v5656, 8.507059e+37
        %v5658 = vand.u32 %v5646, 2147483648
        %v5659 = vor.u32 1.1754944e-38, %v5658
        %v5660 = vsel %vm5657, %v5659, %v5655
        %v5661 = vmul.f32 %v5636, %v5660
        %v5662 = vmin.f32 %v5661, 1.0
        %v5663 = vmax.f32 %v5662, -1.0
        %v5664 = vmul.f32 %v5258, %v5258
        %v5665 = vmin.f32 16.0, %v5664
        %v5666 = vmul.f32 %v5665, 2.1237322e-06
        %v5667 = vadd.f32 %v5666, 0.00028619796
        %v5668 = vmul.f32 %v5665, %v5667
        %v5669 = vadd.f32 %v5668, 0.0036580483
        %v5670 = vmul.f32 %v5665, %v5669
        %v5671 = vadd.f32 %v5670, 0.05243302
        %v5672 = vmul.f32 %v5665, %v5671
        %v5673 = vadd.f32 %v5672, 0.18741608
        %v5674 = vmul.f32 %v5665, %v5673
        %v5675 = vadd.f32 %v5674, 1.1283791
        %v5676 = vmul.f32 %v5258, %v5675
        %v5677 = vmul.f32 %v5665, 3.8918573e-05
        %v5678 = vadd.f32 %v5677, 0.001143296
        %v5679 = vmul.f32 %v5665, %v5678
        %v5680 = vadd.f32 %v5679, 0.014752088
        %v5681 = vmul.f32 %v5665, %v5680
        %v5682 = vadd.f32 %v5681, 0.112945676
        %v5683 = vmul.f32 %v5665, %v5682
        %v5684 = vadd.f32 %v5683, 0.4994258
        %v5685 = vmul.f32 %v5665, %v5684
        %v5686 = vadd.f32 %v5685, 1.0
        %v5687 = vrcp.pop %v5686
        %v5688 = vmul.f32 %v5686, %v5687
        %v5689 = vsub.f32 1.0, %v5688
        %v5690 = vmul.f32 %v5687, %v5689
        %v5691 = vadd.f32 %v5687, %v5690
        %vm5692 = vweird.f32 %v5686
        %vm5693 = vweird.f32 %v5687
        %vm5694 = vmor %vm5692, %vm5693
        %v5695 = vsel %vm5694, %v5687, %v5691
        %v5696 = vand.u32 2147483647, %v5686
        %vm5697 = vcmp.eq.f32.partialorder %v5696, 8.507059e+37
        %v5698 = vand.u32 %v5686, 2147483648
        %v5699 = vor.u32 1.1754944e-38, %v5698
        %v5700 = vsel %vm5697, %v5699, %v5695
        %v5701 = vmul.f32 %v5676, %v5700
        %v5702 = vmin.f32 %v5701, 1.0
        %v5703 = vmax.f32 %v5702, -1.0
        %v5704 = vmul.f32 %v5259, %v5259
        %v5705 = vmin.f32 16.0, %v5704
        %v5706 = vmul.f32 %v5705, 2.1237322e-06
        %v5707 = vadd.f32 %v5706, 0.00028619796
        %v5708 = vmul.f32 %v5705, %v5707
        %v5709 = vadd.f32 %v5708, 0.0036580483
        %v5710 = vmul.f32 %v5705, %v5709
        %v5711 = vadd.f32 %v5710, 0.05243302
        %v5712 = vmul.f32 %v5705, %v5711
        %v5713 = vadd.f32 %v5712, 0.18741608
        %v5714 = vmul.f32 %v5705, %v5713
        %v5715 = vadd.f32 %v5714, 1.1283791
        %v5716 = vmul.f32 %v5259, %v5715
        %v5717 = vmul.f32 %v5705, 3.8918573e-05
        %v5718 = vadd.f32 %v5717, 0.001143296
        %v5719 = vmul.f32 %v5705, %v5718
        %v5720 = vadd.f32 %v5719, 0.014752088
        %v5721 = vmul.f32 %v5705, %v5720
        %v5722 = vadd.f32 %v5721, 0.112945676
        %v5723 = vmul.f32 %v5705, %v5722
        %v5724 = vadd.f32 %v5723, 0.4994258
        %v5725 = vmul.f32 %v5705, %v5724
        %v5726 = vadd.f32 %v5725, 1.0
        %v5727 = vrcp.pop %v5726
        %v5728 = vmul.f32 %v5726, %v5727
        %v5729 = vsub.f32 1.0, %v5728
        %v5730 = vmul.f32 %v5727, %v5729
        %v5731 = vadd.f32 %v5727, %v5730
        %vm5732 = vweird.f32 %v5726
        %vm5733 = vweird.f32 %v5727
        %vm5734 = vmor %vm5732, %vm5733
        %v5735 = vsel %vm5734, %v5727, %v5731
        %v5736 = vand.u32 2147483647, %v5726
        %vm5737 = vcmp.eq.f32.partialorder %v5736, 8.507059e+37
        %v5738 = vand.u32 %v5726, 2147483648
        %v5739 = vor.u32 1.1754944e-38, %v5738
        %v5740 = vsel %vm5737, %v5739, %v5735
        %v5741 = vmul.f32 %v5716, %v5740
        %v5742 = vmin.f32 %v5741, 1.0
        %v5743 = vmax.f32 %v5742, -1.0
        %v5744 = vmul.f32 %v5260, %v5260
        %v5745 = vmin.f32 16.0, %v5744
        %v5746 = vmul.f32 %v5745, 2.1237322e-06
        %v5747 = vadd.f32 %v5746, 0.00028619796
        %v5748 = vmul.f32 %v5745, %v5747
        %v5749 = vadd.f32 %v5748, 0.0036580483
        %v5750 = vmul.f32 %v5745, %v5749
        %v5751 = vadd.f32 %v5750, 0.05243302
        %v5752 = vmul.f32 %v5745, %v5751
        %v5753 = vadd.f32 %v5752, 0.18741608
        %v5754 = vmul.f32 %v5745, %v5753
        %v5755 = vadd.f32 %v5754, 1.1283791
        %v5756 = vmul.f32 %v5260, %v5755
        %v5757 = vmul.f32 %v5745, 3.8918573e-05
        %v5758 = vadd.f32 %v5757, 0.001143296
        %v5759 = vmul.f32 %v5745, %v5758
        %v5760 = vadd.f32 %v5759, 0.014752088
        %v5761 = vmul.f32 %v5745, %v5760
        %v5762 = vadd.f32 %v5761, 0.112945676
        %v5763 = vmul.f32 %v5745, %v5762
        %v5764 = vadd.f32 %v5763, 0.4994258
        %v5765 = vmul.f32 %v5745, %v5764
        %v5766 = vadd.f32 %v5765, 1.0
        %v5767 = vrcp.pop %v5766
        %v5768 = vmul.f32 %v5766, %v5767
        %v5769 = vsub.f32 1.0, %v5768
        %v5770 = vmul.f32 %v5767, %v5769
        %v5771 = vadd.f32 %v5767, %v5770
        %vm5772 = vweird.f32 %v5766
        %vm5773 = vweird.f32 %v5767
        %vm5774 = vmor %vm5772, %vm5773
        %v5775 = vsel %vm5774, %v5767, %v5771
        %v5776 = vand.u32 2147483647, %v5766
        %vm5777 = vcmp.eq.f32.partialorder %v5776, 8.507059e+37
        %v5778 = vand.u32 %v5766, 2147483648
        %v5779 = vor.u32 1.1754944e-38, %v5778
        %v5780 = vsel %vm5777, %v5779, %v5775
        %v5781 = vmul.f32 %v5756, %v5780
        %v5782 = vmin.f32 %v5781, 1.0
        %v5783 = vmax.f32 %v5782, -1.0
        %v5784 = vmul.f32 %v5261, %v5261
        %v5785 = vmin.f32 16.0, %v5784
        %v5786 = vmul.f32 %v5785, 2.1237322e-06
        %v5787 = vadd.f32 %v5786, 0.00028619796
        %v5788 = vmul.f32 %v5785, %v5787
        %v5789 = vadd.f32 %v5788, 0.0036580483
        %v5790 = vmul.f32 %v5785, %v5789
        %v5791 = vadd.f32 %v5790, 0.05243302
        %v5792 = vmul.f32 %v5785, %v5791
        %v5793 = vadd.f32 %v5792, 0.18741608
        %v5794 = vmul.f32 %v5785, %v5793
        %v5795 = vadd.f32 %v5794, 1.1283791
        %v5796 = vmul.f32 %v5261, %v5795
        %v5797 = vmul.f32 %v5785, 3.8918573e-05
        %v5798 = vadd.f32 %v5797, 0.001143296
        %v5799 = vmul.f32 %v5785, %v5798
        %v5800 = vadd.f32 %v5799, 0.014752088
        %v5801 = vmul.f32 %v5785, %v5800
        %v5802 = vadd.f32 %v5801, 0.112945676
        %v5803 = vmul.f32 %v5785, %v5802
        %v5804 = vadd.f32 %v5803, 0.4994258
        %v5805 = vmul.f32 %v5785, %v5804
        %v5806 = vadd.f32 %v5805, 1.0
        %v5807 = vrcp.pop %v5806
        %v5808 = vmul.f32 %v5806, %v5807
        %v5809 = vsub.f32 1.0, %v5808
        %v5810 = vmul.f32 %v5807, %v5809
        %v5811 = vadd.f32 %v5807, %v5810
        %vm5812 = vweird.f32 %v5806
        %vm5813 = vweird.f32 %v5807
        %vm5814 = vmor %vm5812, %vm5813
        %v5815 = vsel %vm5814, %v5807, %v5811
        %v5816 = vand.u32 2147483647, %v5806
        %vm5817 = vcmp.eq.f32.partialorder %v5816, 8.507059e+37
        %v5818 = vand.u32 %v5806, 2147483648
        %v5819 = vor.u32 1.1754944e-38, %v5818
        %v5820 = vsel %vm5817, %v5819, %v5815
        %v5821 = vmul.f32 %v5796, %v5820
        %v5822 = vmin.f32 %v5821, 1.0
        %v5823 = vmax.f32 %v5822, -1.0
        %v5824 = vmul.f32 %v5262, %v5262
        %v5825 = vmin.f32 16.0, %v5824
        %v5826 = vmul.f32 %v5825, 2.1237322e-06
        %v5827 = vadd.f32 %v5826, 0.00028619796
        %v5828 = vmul.f32 %v5825, %v5827
        %v5829 = vadd.f32 %v5828, 0.0036580483
        %v5830 = vmul.f32 %v5825, %v5829
        %v5831 = vadd.f32 %v5830, 0.05243302
        %v5832 = vmul.f32 %v5825, %v5831
        %v5833 = vadd.f32 %v5832, 0.18741608
        %v5834 = vmul.f32 %v5825, %v5833
        %v5835 = vadd.f32 %v5834, 1.1283791
        %v5836 = vmul.f32 %v5262, %v5835
        %v5837 = vmul.f32 %v5825, 3.8918573e-05
        %v5838 = vadd.f32 %v5837, 0.001143296
        %v5839 = vmul.f32 %v5825, %v5838
        %v5840 = vadd.f32 %v5839, 0.014752088
        %v5841 = vmul.f32 %v5825, %v5840
        %v5842 = vadd.f32 %v5841, 0.112945676
        %v5843 = vmul.f32 %v5825, %v5842
        %v5844 = vadd.f32 %v5843, 0.4994258
        %v5845 = vmul.f32 %v5825, %v5844
        %v5846 = vadd.f32 %v5845, 1.0
        %v5847 = vrcp.pop %v5846
        %v5848 = vmul.f32 %v5846, %v5847
        %v5849 = vsub.f32 1.0, %v5848
        %v5850 = vmul.f32 %v5847, %v5849
        %v5851 = vadd.f32 %v5847, %v5850
        %vm5852 = vweird.f32 %v5846
        %vm5853 = vweird.f32 %v5847
        %vm5854 = vmor %vm5852, %vm5853
        %v5855 = vsel %vm5854, %v5847, %v5851
        %v5856 = vand.u32 2147483647, %v5846
        %vm5857 = vcmp.eq.f32.partialorder %v5856, 8.507059e+37
        %v5858 = vand.u32 %v5846, 2147483648
        %v5859 = vor.u32 1.1754944e-38, %v5858
        %v5860 = vsel %vm5857, %v5859, %v5855
        %v5861 = vmul.f32 %v5836, %v5860
        %v5862 = vmin.f32 %v5861, 1.0
        %v5863 = vmax.f32 %v5862, -1.0
        %v5864 = vmul.f32 %v5263, %v5263
        %v5865 = vmin.f32 16.0, %v5864
        %v5866 = vmul.f32 %v5865, 2.1237322e-06
        %v5867 = vadd.f32 %v5866, 0.00028619796
        %v5868 = vmul.f32 %v5865, %v5867
        %v5869 = vadd.f32 %v5868, 0.0036580483
        %v5870 = vmul.f32 %v5865, %v5869
        %v5871 = vadd.f32 %v5870, 0.05243302
        %v5872 = vmul.f32 %v5865, %v5871
        %v5873 = vadd.f32 %v5872, 0.18741608
        %v5874 = vmul.f32 %v5865, %v5873
        %v5875 = vadd.f32 %v5874, 1.1283791
        %v5876 = vmul.f32 %v5263, %v5875
        %v5877 = vmul.f32 %v5865, 3.8918573e-05
        %v5878 = vadd.f32 %v5877, 0.001143296
        %v5879 = vmul.f32 %v5865, %v5878
        %v5880 = vadd.f32 %v5879, 0.014752088
        %v5881 = vmul.f32 %v5865, %v5880
        %v5882 = vadd.f32 %v5881, 0.112945676
        %v5883 = vmul.f32 %v5865, %v5882
        %v5884 = vadd.f32 %v5883, 0.4994258
        %v5885 = vmul.f32 %v5865, %v5884
        %v5886 = vadd.f32 %v5885, 1.0
        %v5887 = vrcp.pop %v5886
        %v5888 = vmul.f32 %v5886, %v5887
        %v5889 = vsub.f32 1.0, %v5888
        %v5890 = vmul.f32 %v5887, %v5889
        %v5891 = vadd.f32 %v5887, %v5890
        %vm5892 = vweird.f32 %v5886
        %vm5893 = vweird.f32 %v5887
        %vm5894 = vmor %vm5892, %vm5893
        %v5895 = vsel %vm5894, %v5887, %v5891
        %v5896 = vand.u32 2147483647, %v5886
        %vm5897 = vcmp.eq.f32.partialorder %v5896, 8.507059e+37
        %v5898 = vand.u32 %v5886, 2147483648
        %v5899 = vor.u32 1.1754944e-38, %v5898
        %v5900 = vsel %vm5897, %v5899, %v5895
        %v5901 = vmul.f32 %v5876, %v5900
        %v5902 = vmin.f32 %v5901, 1.0
        %v5903 = vmax.f32 %v5902, -1.0
        %v5904 = vadd.f32 %v5303, 1.0
        %v5905 = vadd.f32 %v5343, 1.0
        %v5906 = vadd.f32 %v5383, 1.0
        %v5907 = vadd.f32 %v5423, 1.0
        %v5908 = vadd.f32 %v5463, 1.0
        %v5909 = vadd.f32 %v5503, 1.0
        %v5910 = vadd.f32 %v5543, 1.0
        %v5911 = vadd.f32 %v5583, 1.0
        %v5912 = vadd.f32 %v5623, 1.0
        %v5913 = vadd.f32 %v5663, 1.0
        %v5914 = vadd.f32 %v5703, 1.0
        %v5915 = vadd.f32 %v5743, 1.0
        %v5916 = vadd.f32 %v5783, 1.0
        %v5917 = vadd.f32 %v5823, 1.0
        %v5918 = vadd.f32 %v5863, 1.0
        %v5919 = vadd.f32 %v5903, 1.0
        %v5920 = vmul.f32 %v5232, %v5904
        %v5921 = vmul.f32 %v5233, %v5905
        %v5922 = vmul.f32 %v5234, %v5906
        %v5923 = vmul.f32 %v5235, %v5907
        %v5924 = vmul.f32 %v5236, %v5908
        %v5925 = vmul.f32 %v5237, %v5909
        %v5926 = vmul.f32 %v5238, %v5910
        %v5927 = vmul.f32 %v5239, %v5911
        %v5928 = vmul.f32 %v5240, %v5912
        %v5929 = vmul.f32 %v5241, %v5913
        %v5930 = vmul.f32 %v5242, %v5914
        %v5931 = vmul.f32 %v5243, %v5915
        %v5932 = vmul.f32 %v5244, %v5916
        %v5933 = vmul.f32 %v5245, %v5917
        %v5934 = vmul.f32 %v5246, %v5918
        %v5935 = vmul.f32 %v5247, %v5919
        %v5936 = vpack.c.bf16 %v5922, %v5920
        %v5937 = vpack.c.bf16 %v5923, %v5921
        %v5938 = vpack.c.bf16 %v5926, %v5924
        %v5939 = vpack.c.bf16 %v5927, %v5925
        %v5940 = vpack.c.bf16 %v5930, %v5928
        %v5941 = vpack.c.bf16 %v5931, %v5929
        %v5942 = vpack.c.bf16 %v5934, %v5932
        %v5943 = vpack.c.bf16 %v5935, %v5933
        %v5944 = vld [vmem:[%s726] sm:$0xf]
        %v5945 = vld [vmem:[%s726 + $0x4] sm:$0xf]
        %v5946 = vld [vmem:[%s726 + $0x8] sm:$0xf]
        %v5947 = vld [vmem:[%s726 + $0xc] sm:$0xf]
        %v5948 = vld [vmem:[%s726 + $0x10] sm:$0xf]
        %v5949 = vld [vmem:[%s726 + $0x14] sm:$0xf]
        %v5950 = vld [vmem:[%s726 + $0x18] sm:$0xf]
        %v5951 = vld [vmem:[%s726 + $0x1c] sm:$0xf]
        %v5952 = vld [vmem:[%s726 + $0x20] sm:$0xf]
        %v5953 = vld [vmem:[%s726 + $0x24] sm:$0xf]
        %v5954 = vld [vmem:[%s726 + $0x28] sm:$0xf]
        %v5955 = vld [vmem:[%s726 + $0x2c] sm:$0xf]
        %v5956 = vld [vmem:[%s726 + $0x30] sm:$0xf]
        %v5957 = vld [vmem:[%s726 + $0x34] sm:$0xf]
        %v5958 = vld [vmem:[%s726 + $0x38] sm:$0xf]
        %v5959 = vld [vmem:[%s726 + $0x3c] sm:$0xf]
        %v5960 = vld [vmem:[%s726 + $0x40] sm:$0xf]
        %v5961 = vld [vmem:[%s726 + $0x44] sm:$0xf]
        %v5962 = vld [vmem:[%s726 + $0x48] sm:$0xf]
        %v5963 = vld [vmem:[%s726 + $0x4c] sm:$0xf]
        %v5964 = vld [vmem:[%s726 + $0x50] sm:$0xf]
        %v5965 = vld [vmem:[%s726 + $0x54] sm:$0xf]
        %v5966 = vld [vmem:[%s726 + $0x58] sm:$0xf]
        %v5967 = vld [vmem:[%s726 + $0x5c] sm:$0xf]
        %v5968 = vld [vmem:[%s726 + $0x60] sm:$0xf]
        %v5969 = vld [vmem:[%s726 + $0x64] sm:$0xf]
        %v5970 = vld [vmem:[%s726 + $0x68] sm:$0xf]
        %v5971 = vld [vmem:[%s726 + $0x6c] sm:$0xf]
        %v5972 = vld [vmem:[%s726 + $0x70] sm:$0xf]
        %v5973 = vld [vmem:[%s726 + $0x74] sm:$0xf]
        %v5974 = vld [vmem:[%s726 + $0x78] sm:$0xf]
        %v5975 = vld [vmem:[%s726 + $0x7c] sm:$0xf]
        %v5976 = vld [vmem:[%s818] sm:$0x1]
        %v5978 = vperm.slane %v5976, 0
        %v6012 = vunpack.c.l.b16 %v5944
        %v6013 = vunpack.c.l.b16 %v5945
        %v6014 = vunpack.c.l.b16 %v5946
        %v6015 = vunpack.c.l.b16 %v5947
        %v6016 = vunpack.c.l.b16 %v5948
        %v6017 = vunpack.c.l.b16 %v5949
        %v6018 = vunpack.c.l.b16 %v5950
        %v6019 = vunpack.c.l.b16 %v5951
        %v6020 = vunpack.c.l.b16 %v5952
        %v6021 = vunpack.c.l.b16 %v5953
        %v6022 = vunpack.c.l.b16 %v5954
        %v6023 = vunpack.c.l.b16 %v5955
        %v6024 = vunpack.c.l.b16 %v5956
        %v6025 = vunpack.c.l.b16 %v5957
        %v6026 = vunpack.c.l.b16 %v5958
        %v6027 = vunpack.c.l.b16 %v5959
        %v6028 = vunpack.c.l.b16 %v5960
        %v6029 = vunpack.c.l.b16 %v5961
        %v6030 = vunpack.c.l.b16 %v5962
        %v6031 = vunpack.c.l.b16 %v5963
        %v6032 = vunpack.c.l.b16 %v5964
        %v6033 = vunpack.c.l.b16 %v5965
        %v6034 = vunpack.c.l.b16 %v5966
        %v6035 = vunpack.c.l.b16 %v5967
        %v6036 = vunpack.c.l.b16 %v5968
        %v6037 = vunpack.c.l.b16 %v5969
        %v6038 = vunpack.c.l.b16 %v5970
        %v6039 = vunpack.c.l.b16 %v5971
        %v6040 = vunpack.c.l.b16 %v5972
        %v6041 = vunpack.c.l.b16 %v5973
        %v6042 = vunpack.c.l.b16 %v5974
        %v6043 = vunpack.c.l.b16 %v5975
        %v6044 = vpack.c.b16 %v6013, %v6012
        %v6045 = vpack.c.b16 %v6015, %v6014
        %v6046 = vpack.c.b16 %v6017, %v6016
        %v6047 = vpack.c.b16 %v6019, %v6018
        %v6048 = vpack.c.b16 %v6021, %v6020
        %v6049 = vpack.c.b16 %v6023, %v6022
        %v6050 = vpack.c.b16 %v6025, %v6024
        %v6051 = vpack.c.b16 %v6027, %v6026
        %v6052 = vpack.c.b16 %v6029, %v6028
        %v6053 = vpack.c.b16 %v6031, %v6030
        %v6054 = vpack.c.b16 %v6033, %v6032
        %v6055 = vpack.c.b16 %v6035, %v6034
        %v6056 = vpack.c.b16 %v6037, %v6036
        %v6057 = vpack.c.b16 %v6039, %v6038
        %v6058 = vpack.c.b16 %v6041, %v6040
        %v6059 = vpack.c.b16 %v6043, %v6042
        %6076 = vmatpush.bf16.msra.mxu0 %v6051
        %6077 = vmatpush.bf16.msra.mxu0 %v6050
        %6078 = vmatpush.bf16.msra.mxu0 %v6049
        %6079 = vmatpush.bf16.msra.mxu0 %v6048
        %6080 = vmatpush.bf16.msra.mxu0 %v6047
        %6081 = vmatpush.bf16.msra.mxu0 %v6046
        %6082 = vmatpush.bf16.msra.mxu0 %v6045
        %6083 = vmatpush.bf16.msra.mxu0 %v6044
        %6084 = vmatmul.bf16.gmra.mxu0 %v5936
        %v6085 = vpop.f32.mrf.mxu0
        %v6086 = vadd.f32 %v5978, %v6085
        %v6087 = vpop.f32.mrf.mxu0
        %v6088 = vadd.f32 %v5978, %v6087
        %6089 = vmatmul.bf16.gmra.mxu0 %v5938
        %v6090 = vpop.f32.mrf.mxu0
        %v6091 = vadd.f32 %v5978, %v6090
        %v6092 = vpop.f32.mrf.mxu0
        %v6093 = vadd.f32 %v5978, %v6092
        %6094 = vmatmul.bf16.gmra.mxu0 %v5940
        %v6095 = vpop.f32.mrf.mxu0
        %v6096 = vadd.f32 %v5978, %v6095
        %v6097 = vpop.f32.mrf.mxu0
        %v6098 = vadd.f32 %v5978, %v6097
        %6099 = vmatmul.bf16.gmra.mxu0 %v5942
        %v6100 = vpop.f32.mrf.mxu0
        %v6101 = vadd.f32 %v5978, %v6100
        %v6102 = vpop.f32.mrf.mxu0
        %v6103 = vadd.f32 %v5978, %v6102
        %6104 = vdwg.mxu0
        %6105 = vmatpush.bf16.msra.mxu0 %v6059
        %6106 = vmatpush.bf16.msra.mxu0 %v6058
        %6107 = vmatpush.bf16.msra.mxu0 %v6057
        %6108 = vmatpush.bf16.msra.mxu0 %v6056
        %6109 = vmatpush.bf16.msra.mxu0 %v6055
        %6110 = vmatpush.bf16.msra.mxu0 %v6054
        %6111 = vmatpush.bf16.msra.mxu0 %v6053
        %6112 = vmatpush.bf16.msra.mxu0 %v6052
        %6113 = vmatmul.bf16.gmra.mxu0 %v5937
        %v6114 = vpop.f32.mrf.mxu0
        %v6115 = vadd.f32 %v6086, %v6114
        %v6116 = vpop.f32.mrf.mxu0
        %v6117 = vadd.f32 %v6088, %v6116
        %6118 = vmatmul.bf16.gmra.mxu0 %v5939
        %v6119 = vpop.f32.mrf.mxu0
        %v6120 = vadd.f32 %v6091, %v6119
        %v6121 = vpop.f32.mrf.mxu0
        %v6122 = vadd.f32 %v6093, %v6121
        %6123 = vmatmul.bf16.gmra.mxu0 %v5941
        %v6124 = vpop.f32.mrf.mxu0
        %v6125 = vadd.f32 %v6096, %v6124
        %v6126 = vpop.f32.mrf.mxu0
        %v6127 = vadd.f32 %v6098, %v6126
        %6128 = vmatmul.bf16.gmra.mxu0 %v5943
        %v6129 = vpop.f32.mrf.mxu0
        %v6130 = vadd.f32 %v6101, %v6129
        %v6131 = vpop.f32.mrf.mxu0
        %v6132 = vadd.f32 %v6103, %v6131
        %6133 = vdwg.mxu0
        %v6134 = vadd.f32 %v4876, %v6115
        %v6135 = vadd.f32 %v4877, %v6117
        %v6136 = vadd.f32 %v4878, %v6120
        %v6137 = vadd.f32 %v4879, %v6122
        %v6138 = vadd.f32 %v4880, %v6125
        %v6139 = vadd.f32 %v4881, %v6127
        %v6140 = vadd.f32 %v4882, %v6130
        %v6141 = vadd.f32 %v4883, %v6132
        %p6142 = scmp.lt.s32.totalorder %s44, 1
        // Predicated region
        $region117: #{tpu_custom_call.1} parent=75 // pred_check
          %p6143 = pneg %p6142
        $region118: #{tpu_custom_call.1} parent=75 // pred_check_branch
          %6145 = sbr.rel (%p6143) target = $region120
        $region119: #{tpu_custom_call.1} parent=75 // pred_region
          %6146 = vst [vmem:[#allocation2] sm:$0xff] %v6134
          %6147 = vst [vmem:[#allocation2 + $0x8] sm:$0xff] %v6135
          %6148 = vst [vmem:[#allocation2 + $0x10] sm:$0xff] %v6136
          %6149 = vst [vmem:[#allocation2 + $0x18] sm:$0xff] %v6137
          %6150 = vst [vmem:[#allocation2 + $0x20] sm:$0xff] %v6138
          %6151 = vst [vmem:[#allocation2 + $0x28] sm:$0xff] %v6139
          %6152 = vst [vmem:[#allocation2 + $0x30] sm:$0xff] %v6140
          %6153 = vst [vmem:[#allocation2 + $0x38] sm:$0xff] %v6141
        $region120: #{tpu_custom_call.1} parent=75 // pred_fallthru
          _
        %p6154 = scmp.eq.s32.totalorder %s44, 1
        // Predicated region
        $region121: #{tpu_custom_call.1} parent=75 // pred_check
          %p6155 = pneg %p6154
        $region122: #{tpu_custom_call.1} parent=75 // pred_check_branch
          %6157 = sbr.rel (%p6155) target = $region124
        $region123: #{tpu_custom_call.1} parent=75 // pred_region
          %v6158 = vld [vmem:[%s12] sm:$0x1]
          %v6159 = vld [vmem:[%s13] sm:$0x1]
          %6160 = vadd.xlane.f32.xlu0 %v6134
          %v6161 = vpop.xlane.xlu0 %6160
          %6162 = vadd.xlane.f32.xlu0 %v6135
          %v6163 = vpop.xlane.xlu0 %6162
          %6164 = vadd.xlane.f32.xlu0 %v6136
          %v6165 = vpop.xlane.xlu0 %6164
          %6166 = vadd.xlane.f32.xlu0 %v6137
          %v6167 = vpop.xlane.xlu0 %6166
          %6168 = vadd.xlane.f32.xlu0 %v6138
          %v6169 = vpop.xlane.xlu0 %6168
          %6170 = vadd.xlane.f32.xlu0 %v6139
          %v6171 = vpop.xlane.xlu0 %6170
          %6172 = vadd.xlane.f32.xlu0 %v6140
          %v6173 = vpop.xlane.xlu0 %6172
          %6174 = vadd.xlane.f32.xlu0 %v6141
          %v6175 = vpop.xlane.xlu0 %6174
          %v6176 = vmul.f32 %v6161, %v873
          %v6177 = vmul.f32 %v6163, %v873
          %v6178 = vmul.f32 %v6165, %v873
          %v6179 = vmul.f32 %v6167, %v873
          %v6180 = vmul.f32 %v6169, %v873
          %v6181 = vmul.f32 %v6171, %v873
          %v6182 = vmul.f32 %v6173, %v873
          %v6183 = vmul.f32 %v6175, %v873
          %v6184 = vsub.f32 %v6134, %v6176
          %v6185 = vsub.f32 %v6135, %v6177
          %v6186 = vsub.f32 %v6136, %v6178
          %v6187 = vsub.f32 %v6137, %v6179
          %v6188 = vsub.f32 %v6138, %v6180
          %v6189 = vsub.f32 %v6139, %v6181
          %v6190 = vsub.f32 %v6140, %v6182
          %v6191 = vsub.f32 %v6141, %v6183
          %v6192 = vmul.f32 %v6184, %v6184
          %v6193 = vmul.f32 %v6185, %v6185
          %v6194 = vmul.f32 %v6186, %v6186
          %v6195 = vmul.f32 %v6187, %v6187
          %v6196 = vmul.f32 %v6188, %v6188
          %v6197 = vmul.f32 %v6189, %v6189
          %v6198 = vmul.f32 %v6190, %v6190
          %v6199 = vmul.f32 %v6191, %v6191
          %6200 = vadd.xlane.f32.xlu0 %v6192
          %v6201 = vpop.xlane.xlu0 %6200
          %6202 = vadd.xlane.f32.xlu0 %v6193
          %v6203 = vpop.xlane.xlu0 %6202
          %6204 = vadd.xlane.f32.xlu0 %v6194
          %v6205 = vpop.xlane.xlu0 %6204
          %6206 = vadd.xlane.f32.xlu0 %v6195
          %v6207 = vpop.xlane.xlu0 %6206
          %6208 = vadd.xlane.f32.xlu0 %v6196
          %v6209 = vpop.xlane.xlu0 %6208
          %6210 = vadd.xlane.f32.xlu0 %v6197
          %v6211 = vpop.xlane.xlu0 %6210
          %6212 = vadd.xlane.f32.xlu0 %v6198
          %v6213 = vpop.xlane.xlu0 %6212
          %6214 = vadd.xlane.f32.xlu0 %v6199
          %v6215 = vpop.xlane.xlu0 %6214
          %v6216 = vmul.f32 %v6201, %v873
          %v6217 = vmul.f32 %v6203, %v873
          %v6218 = vmul.f32 %v6205, %v873
          %v6219 = vmul.f32 %v6207, %v873
          %v6220 = vmul.f32 %v6209, %v873
          %v6221 = vmul.f32 %v6211, %v873
          %v6222 = vmul.f32 %v6213, %v873
          %v6223 = vmul.f32 %v6215, %v873
          %v6224 = vadd.f32 %v6216, 1e-05
          %v6225 = vadd.f32 %v6217, 1e-05
          %v6226 = vadd.f32 %v6218, 1e-05
          %v6227 = vadd.f32 %v6219, 1e-05
          %v6228 = vadd.f32 %v6220, 1e-05
          %v6229 = vadd.f32 %v6221, 1e-05
          %v6230 = vadd.f32 %v6222, 1e-05
          %v6231 = vadd.f32 %v6223, 1e-05
          %v6232 = vrsqrt.pop %v6224
          %v6233 = vmul.f32 %v6232, %v6224
          %v6234 = vmul.f32 %v6233, %v6232
          %v6235 = vmul.f32 0.5, %v6234
          %v6236 = vsub.f32 1.5, %v6235
          %v6237 = vmul.f32 %v6232, %v6236
          %vm6238 = vweird.f32 %v6224
          %vm6239 = vweird.f32 %v6232
          %vm6240 = vmor %vm6238, %vm6239
          %v6241 = vsel %vm6240, %v6232, %v6237
          %v6242 = vrsqrt.pop %v6225
          %v6243 = vmul.f32 %v6242, %v6225
          %v6244 = vmul.f32 %v6243, %v6242
          %v6245 = vmul.f32 0.5, %v6244
          %v6246 = vsub.f32 1.5, %v6245
          %v6247 = vmul.f32 %v6242, %v6246
          %vm6248 = vweird.f32 %v6225
          %vm6249 = vweird.f32 %v6242
          %vm6250 = vmor %vm6248, %vm6249
          %v6251 = vsel %vm6250, %v6242, %v6247
          %v6252 = vrsqrt.pop %v6226
          %v6253 = vmul.f32 %v6252, %v6226
          %v6254 = vmul.f32 %v6253, %v6252
          %v6255 = vmul.f32 0.5, %v6254
          %v6256 = vsub.f32 1.5, %v6255
          %v6257 = vmul.f32 %v6252, %v6256
          %vm6258 = vweird.f32 %v6226
          %vm6259 = vweird.f32 %v6252
          %vm6260 = vmor %vm6258, %vm6259
          %v6261 = vsel %vm6260, %v6252, %v6257
          %v6262 = vrsqrt.pop %v6227
          %v6263 = vmul.f32 %v6262, %v6227
          %v6264 = vmul.f32 %v6263, %v6262
          %v6265 = vmul.f32 0.5, %v6264
          %v6266 = vsub.f32 1.5, %v6265
          %v6267 = vmul.f32 %v6262, %v6266
          %vm6268 = vweird.f32 %v6227
          %vm6269 = vweird.f32 %v6262
          %vm6270 = vmor %vm6268, %vm6269
          %v6271 = vsel %vm6270, %v6262, %v6267
          %v6272 = vrsqrt.pop %v6228
          %v6273 = vmul.f32 %v6272, %v6228
          %v6274 = vmul.f32 %v6273, %v6272
          %v6275 = vmul.f32 0.5, %v6274
          %v6276 = vsub.f32 1.5, %v6275
          %v6277 = vmul.f32 %v6272, %v6276
          %vm6278 = vweird.f32 %v6228
          %vm6279 = vweird.f32 %v6272
          %vm6280 = vmor %vm6278, %vm6279
          %v6281 = vsel %vm6280, %v6272, %v6277
          %v6282 = vrsqrt.pop %v6229
          %v6283 = vmul.f32 %v6282, %v6229
          %v6284 = vmul.f32 %v6283, %v6282
          %v6285 = vmul.f32 0.5, %v6284
          %v6286 = vsub.f32 1.5, %v6285
          %v6287 = vmul.f32 %v6282, %v6286
          %vm6288 = vweird.f32 %v6229
          %vm6289 = vweird.f32 %v6282
          %vm6290 = vmor %vm6288, %vm6289
          %v6291 = vsel %vm6290, %v6282, %v6287
          %v6292 = vrsqrt.pop %v6230
          %v6293 = vmul.f32 %v6292, %v6230
          %v6294 = vmul.f32 %v6293, %v6292
          %v6295 = vmul.f32 0.5, %v6294
          %v6296 = vsub.f32 1.5, %v6295
          %v6297 = vmul.f32 %v6292, %v6296
          %vm6298 = vweird.f32 %v6230
          %vm6299 = vweird.f32 %v6292
          %vm6300 = vmor %vm6298, %vm6299
          %v6301 = vsel %vm6300, %v6292, %v6297
          %v6302 = vrsqrt.pop %v6231
          %v6303 = vmul.f32 %v6302, %v6231
          %v6304 = vmul.f32 %v6303, %v6302
          %v6305 = vmul.f32 0.5, %v6304
          %v6306 = vsub.f32 1.5, %v6305
          %v6307 = vmul.f32 %v6302, %v6306
          %vm6308 = vweird.f32 %v6231
          %vm6309 = vweird.f32 %v6302
          %vm6310 = vmor %vm6308, %vm6309
          %v6311 = vsel %vm6310, %v6302, %v6307
          %v6312 = vmul.f32 %v6184, %v6241
          %v6313 = vmul.f32 %v6185, %v6251
          %v6314 = vmul.f32 %v6186, %v6261
          %v6315 = vmul.f32 %v6187, %v6271
          %v6316 = vmul.f32 %v6188, %v6281
          %v6317 = vmul.f32 %v6189, %v6291
          %v6318 = vmul.f32 %v6190, %v6301
          %v6319 = vmul.f32 %v6191, %v6311
          %v6321 = vperm.slane %v6158, 0
          %v6323 = vmul.f32 %v6312, %v6321
          %v6324 = vmul.f32 %v6313, %v6321
          %v6325 = vmul.f32 %v6314, %v6321
          %v6326 = vmul.f32 %v6315, %v6321
          %v6327 = vmul.f32 %v6316, %v6321
          %v6328 = vmul.f32 %v6317, %v6321
          %v6329 = vmul.f32 %v6318, %v6321
          %v6330 = vmul.f32 %v6319, %v6321
          %v6332 = vperm.slane %v6159, 0
          %v6334 = vadd.f32 %v6323, %v6332
          %v6335 = vadd.f32 %v6324, %v6332
          %v6336 = vadd.f32 %v6325, %v6332
          %v6337 = vadd.f32 %v6326, %v6332
          %v6338 = vadd.f32 %v6327, %v6332
          %v6339 = vadd.f32 %v6328, %v6332
          %v6340 = vadd.f32 %v6329, %v6332
          %v6341 = vadd.f32 %v6330, %v6332
          %6342 = vst [vmem:[#allocation18] sm:$0xff] %v6334
          %6343 = vst [vmem:[#allocation18 + $0x8] sm:$0xff] %v6335
          %6344 = vst [vmem:[#allocation18 + $0x10] sm:$0xff] %v6336
          %6345 = vst [vmem:[#allocation18 + $0x18] sm:$0xff] %v6337
          %6346 = vst [vmem:[#allocation18 + $0x20] sm:$0xff] %v6338
          %6347 = vst [vmem:[#allocation18 + $0x28] sm:$0xff] %v6339
          %6348 = vst [vmem:[#allocation18 + $0x30] sm:$0xff] %v6340
          %6349 = vst [vmem:[#allocation18 + $0x38] sm:$0xff] %v6341
        $region124: #{tpu_custom_call.1} parent=75 // pred_fallthru
          _
        // Predicated region
        $region125: #{tpu_custom_call.1} parent=75 // pred_check
          %p6350 = pneg %p423
        $region126: #{tpu_custom_call.1} parent=75 // pred_check_branch
          %6352 = sbr.rel (%p6350) target = $region128
        $region127: #{tpu_custom_call.1} parent=75 // pred_region
          %s6353 = smul.u32 4, %s43
          %6355 = vsyncadd [#allocation5], 0
          %s6356 = smul.addr %s6353, 2
          %s6357 = smul.addr %s6356, 8
          %s6358 = scalar_lea.hbm %s14, %s6357
          %s6359 = sshll.u32 [#allocation18], 4
          %s6360 = int_to_ptr.vmem [resolvable:$true] %s6359
          %s6361 = sshll.u32 %s6358, 4
          %s6362 = int_to_ptr.hbm [resolvable:$true] %s6361
          %6367 = dma.vmem_to_hbm [thread:$0]  %s6360, 1024, %s6362, [#allocation5], 128, 128, 8
        $region128: #{tpu_custom_call.1} parent=75 // pred_fallthru
          _
        // Predicated region
        $region129: #{tpu_custom_call.1} parent=75 // pred_check
          %p6368 = pneg %p423
        $region130: #{tpu_custom_call.1} parent=75 // pred_check_branch
          %6370 = sbr.rel (%p6368) target = $region132
        $region131: #{tpu_custom_call.1} parent=75 // pred_region
          %6372 = dma.done [#allocation5], 1024
        $region132: #{tpu_custom_call.1} parent=75 // pred_fallthru
          _
      $region76: #{tpu_custom_call.1} parent=5 // pred_fallthru
        _
      %p6373 = scmp.le.s32.totalorder 2, %s34
      // Predicated region
      $region133: #{tpu_custom_call.1} parent=5 // pred_check
        %p6374 = pneg %p6373
      $region134: #{tpu_custom_call.1} parent=5 // pred_check_branch
        %6376 = sbr.rel (%p6374) target = $region136
      $region135: #{tpu_custom_call.1} parent=5 // pred_region
        %s6377 = ssub.s32 %s34, 2
      $region136: #{tpu_custom_call.1} parent=5 // pred_fallthru
        _
    $region6: #{tpu_custom_call.1} parent=1 // loop_footer
      %s38 = sadd.s32 1, %s34
    $region7: #{tpu_custom_call.1} parent=1 // loop_footer_branch
      %33 = sbr.rel target = $region3
    $region8: #{tpu_custom_call.1} parent=1 // loop_exit
      _
    %6378 = vsyncpa [#allocation4], 1
    %s6379 = scalar_lea.sflag [#allocation4], 1
    %6380 = vsyncpa %s6379, 1
    %6381 = vsyncpa [#allocation7], 1
    %s6382 = scalar_lea.sflag [#allocation7], 1
    %6383 = vsyncpa %s6382, 1
    %6384 = vsyncpa [#allocation10], 1
    %s6385 = scalar_lea.sflag [#allocation10], 1
    %6386 = vsyncpa %s6385, 1
    %6387 = vsyncpa [#allocation13], 1
    %s6388 = scalar_lea.sflag [#allocation13], 1
    %6389 = vsyncpa %s6388, 1
    %6390 = vsyncpa [#allocation16], 1
    %s6391 = scalar_lea.sflag [#allocation16], 1
    %6392 = vsyncpa %s6391, 1
    %6393 = vsyncpa [#allocation5], 1
    %s6394 = scalar_lea.sflag [#allocation5], 1
    %6395 = vsyncpa %s6394, 1

</llo_original>
